<compile_context>
chip_gen: v7x
topology: tpu7x:2x2x1
jax: 0.10.0
libtpu: 0.0.40
codegen_flags: <defaults>
</compile_context>

<pallas_src>
import jax
import jax.numpy as jnp
from jax.experimental import pallas as pl
from jax.experimental.pallas import tpu as pltpu

NEG = -1e30


# ----------------------------------------------------------------------------- fused kernel
def fused_net_kernel(x_ref, adj_ref, bh_ref, bht_ref,
                     w1_ref, as1_ref, ad1_ref, b1_ref, p1_ref,
                     w2_ref, as2_ref, ad2_ref, b2_ref, p2_ref,
                     w3_ref, as3_ref, ad3_ref, b3_ref, p3_ref,
                     wl1_ref, bl1_ref, wl2_ref, bl2_ref, wl3_ref, bl3_ref,
                     o_ref):
    f32 = jnp.float32
    x = x_ref[...]                        # [N, F_in]
    adj = adj_ref[...]                    # [N, N]
    bh = bh_ref[...]                      # [N, G]
    bht = bht_ref[...]                    # [G, N]
    n = x.shape[0]
    g = bh.shape[1]

    ii = jax.lax.broadcasted_iota(jnp.int32, (n, n), 0)
    jj = jax.lax.broadcasted_iota(jnp.int32, (n, n), 1)
    eye = (ii == jj).astype(f32)
    col_ids = jax.lax.broadcasted_iota(jnp.int32, (n, g), 1)
    one11 = jnp.ones((1, 1), f32)

    def rowT(col):
        # exact "transpose" [N, 1] -> [1, N] as a K=1 matmul (A @ B^T form); no XLU relayout.
        return jax.lax.dot_general(one11, col, (((1,), (1,)), ((), ())),
                                   preferred_element_type=f32)

    def outer(col_a, col_b):
        # [N, 1] (x) [N, 1] -> [N, N] outer product (A @ B^T, K=1).
        return jax.lax.dot_general(col_a, col_b, (((1,), (1,)), ((), ())),
                                   preferred_element_type=f32)

    def gat_relu(xv, mask, w, a_src, a_dst, b):
        # relu(GATConv(xv)) restricted to active nodes; self-loops added for active nodes only.
        h = jnp.dot(xv, w, preferred_element_type=f32)               # [N, Fo]  MXU
        a_dst_col = jnp.sum(h * a_dst, axis=1, keepdims=True)        # [N, 1]   VPU + lane reduce
        a_src_col = jnp.sum(h * a_src, axis=1, keepdims=True)        # [N, 1]
        e = a_dst_col + rowT(a_src_col)                              # e[i,j] = a_dst.h_i + a_src.h_j
        e = jnp.where(e > 0, e, 0.2 * e)                             # LeakyReLU(0.2)
        adj_eff = adj * outer(mask, mask)                            # edges between active nodes
        adj_eff = adj_eff * (1.0 - eye) + eye * mask                 # add_self_loops (active nodes)
        e = jnp.where(adj_eff > 0, e, NEG)
        m = jnp.max(e, axis=1, keepdims=True)
        p = jnp.exp(e - m) * adj_eff
        denom = jnp.maximum(jnp.sum(p, axis=1, keepdims=True), 1e-30)
        att = p * pl.reciprocal(denom, approx=True)                  # softmax over sources (EUP recip)
        out = jnp.dot(att, h, preferred_element_type=f32) + b
        return jnp.maximum(out, 0.0) * mask                          # defensively zero inactive rows

    def topk_pool(xv, mask, p):
        # TopKPooling(ratio=0.8): score = x.p/||p||, keep top ceil(0.8*n_g) per graph,
        # gate kept nodes by tanh(score). Selection via in-kernel pairwise ranking.
        bm = bh * mask                                               # [N, G]
        inv_pn = jax.lax.rsqrt(jnp.sum(p * p, axis=1, keepdims=True))    # [1, 1]
        s_col = jnp.sum(xv * p, axis=1, keepdims=True) * inv_pn      # [N, 1]
        s_row = rowT(s_col)                                          # [1, N] exact copy of s_col
        same_g = jax.lax.dot_general(bm, bm, (((1,), (1,)), ((), ())),
                                     preferred_element_type=f32)     # [N, N]
        beats = (s_row > s_col) | ((s_row == s_col) & (jj < ii))     # node j outranks node i
        rank = jnp.sum(same_g * beats.astype(f32), axis=1, keepdims=True)  # [N, 1]
        cnt = jnp.sum(bm, axis=0, keepdims=True)                     # [1, G] nodes per graph
        k_g = jnp.ceil(0.8 * cnt - 1e-4)                             # exact ceil(ratio*n) in f32
        k_i = jax.lax.dot_general(bm, k_g, (((1,), (1,)), ((), ())),
                                  preferred_element_type=f32)        # [N, 1]
        new_mask = jnp.where((rank < k_i) & (mask > 0), 1.0, 0.0)
        gate = jnp.tanh(s_col)                                       # per-node gate, broadcast over F
        return xv * gate * new_mask, new_mask

    def readout(xv, mask):
        # [gmp(x, batch) || gap(x, batch)] over active nodes only.
        fo = xv.shape[1]
        bmt = bht * rowT(mask)                                       # [G, N] active-masked one-hot^T
        cnt = jnp.sum(bmt, axis=1, keepdims=True)                    # [G, 1]
        mean = jnp.dot(bmt, xv, preferred_element_type=f32) / jnp.maximum(cnt, 1.0)
        bm = bh * mask                                               # [N, G]
        row_ids = jax.lax.broadcasted_iota(jnp.int32, (g, fo), 0)
        mx = jnp.full((g, fo), NEG, f32)
        for gi in range(g):                                          # G is tiny & static: 2-D maxes only
            member = jnp.sum(bm * (col_ids == gi).astype(f32), axis=1, keepdims=True)  # [N, 1]
            mx_g = jnp.max(jnp.where(member > 0, xv, NEG), axis=0, keepdims=True)      # [1, Fo]
            mx = jnp.where(row_ids == gi, mx_g, mx)
        return jnp.concatenate([mx, mean], axis=1)                   # [G, 2*Fo]

    mask = jnp.ones((n, 1), f32)

    h = gat_relu(x, mask, w1_ref[...], as1_ref[...], ad1_ref[...], b1_ref[...])
    h, mask = topk_pool(h, mask, p1_ref[...])
    r1 = readout(h, mask)

    h = gat_relu(h, mask, w2_ref[...], as2_ref[...], ad2_ref[...], b2_ref[...])
    h, mask = topk_pool(h, mask, p2_ref[...])
    r2 = readout(h, mask)

    h = gat_relu(h, mask, w3_ref[...], as3_ref[...], ad3_ref[...], b3_ref[...])
    h, mask = topk_pool(h, mask, p3_ref[...])
    r3 = readout(h, mask)

    z = r1 + r2 + r3                                                 # [G, 2*HID]
    hm = jnp.maximum(jnp.dot(z, wl1_ref[...], preferred_element_type=f32) + bl1_ref[...], 0.0)
    # TODO(synk): F.dropout(p=0.5, training=self.training) treated as inference-mode identity.
    hm = jnp.maximum(jnp.dot(hm, wl2_ref[...], preferred_element_type=f32) + bl2_ref[...], 0.0)
    logits = jnp.dot(hm, wl3_ref[...], preferred_element_type=f32) + bl3_ref[...]
    m = jnp.max(logits, axis=1, keepdims=True)
    zc = logits - m
    lse = jnp.log(jnp.sum(jnp.exp(zc), axis=1, keepdims=True))
    o_ref[...] = zc - lse                                            # log_softmax


# ----------------------------------------------------------------------------- wrapper
def net_forward(x, adj, batch_onehot, params):
    g = batch_onehot.shape[1]
    w1, as1, ad1, b1 = params['conv1']
    w2, as2, ad2, b2 = params['conv2']
    w3, as3, ad3, b3 = params['conv3']
    wl1, bl1, wl2, bl2, wl3, bl3 = params['mlp']
    c = wl3.shape[1]

    args = (x, adj, batch_onehot, batch_onehot.T,
            w1, as1, ad1, b1, params['pool1'],
            w2, as2, ad2, b2, params['pool2'],
            w3, as3, ad3, b3, params['pool3'],
            wl1, bl1, wl2, bl2, wl3, bl3)

    return pl.pallas_call(
        fused_net_kernel,
        out_shape=jax.ShapeDtypeStruct((g, c), jnp.float32),
        in_specs=[pl.BlockSpec(memory_space=pltpu.MemorySpace.VMEM) for _ in args],
        out_specs=pl.BlockSpec(memory_space=pltpu.MemorySpace.VMEM),
    )(*args)


# ----------------------------------------------------------------------------- params & main
def init_params(key, f_in, hid, n_classes):
    keys = iter(jax.random.split(key, 24))

    def nrm(shape, scale=0.1):
        return scale * jax.random.normal(next(keys), shape, jnp.float32)

    def gat(fi, fo):
        # (lin weight, att_src, att_dst, bias) — GATConv(fi, fo), heads=1
        return (nrm((fi, fo)), nrm((1, fo)), nrm((1, fo)), nrm((1, fo)))

    return {
        'conv1': gat(f_in, hid),
        'pool1': nrm((1, hid)),                        # TopKPooling weight p
        'conv2': gat(hid, hid),
        'pool2': nrm((1, hid)),
        'conv3': gat(hid, hid),
        'pool3': nrm((1, hid)),
        'mlp': (nrm((2 * hid, hid)), nrm((1, hid)),    # lin1: 256 -> 128
                nrm((hid, 64)), nrm((1, 64)),          # lin2: 128 -> 64
                nrm((64, n_classes)), nrm((1, n_classes))),  # lin3: 64 -> C
    }


if __name__ == "__main__":
    N, G, F_IN, HID, C = 32, 2, 16, 128, 6          # 2 graphs of 16 nodes each
    nodes_per_graph = N // G

    key = jax.random.PRNGKey(0)
    k_x, k_adj, k_par = jax.random.split(key, 3)

    x = jax.random.normal(k_x, (N, F_IN), jnp.float32)

    # random undirected, block-diagonal (per-graph) adjacency without self-loops
    a = jax.random.uniform(k_adj, (N, N))
    a = 0.5 * (a + a.T)
    adj = (a > 0.7).astype(jnp.float32)
    adj = adj * (1.0 - jnp.eye(N, dtype=jnp.float32))
    block = jnp.kron(jnp.eye(G, dtype=jnp.float32),
                     jnp.ones((nodes_per_graph, nodes_per_graph), jnp.float32))
    adj = adj * block

    batch = jnp.repeat(jnp.arange(G), nodes_per_graph)
    batch_onehot = jax.nn.one_hot(batch, G, dtype=jnp.float32)

    params = init_params(k_par, F_IN, HID, C)

    out = jax.jit(net_forward)(x, adj, batch_onehot, params)
    out = jax.block_until_ready(out)
    assert out.shape == (G, C)
    print("KERNEL_OK")
</pallas_src>

<mosaic_0001>
module attributes {stable_mosaic.version = 11 : i64} {
  func.func @fused_net_kernel(%arg0: memref<32x16xf32, #tpu.memory_space<vmem>>, %arg1: memref<32x32xf32, #tpu.memory_space<vmem>>, %arg2: memref<32x2xf32, #tpu.memory_space<vmem>>, %arg3: memref<2x32xf32, #tpu.memory_space<vmem>>, %arg4: memref<16x128xf32, #tpu.memory_space<vmem>>, %arg5: memref<1x128xf32, #tpu.memory_space<vmem>>, %arg6: memref<1x128xf32, #tpu.memory_space<vmem>>, %arg7: memref<1x128xf32, #tpu.memory_space<vmem>>, %arg8: memref<1x128xf32, #tpu.memory_space<vmem>>, %arg9: memref<128x128xf32, #tpu.memory_space<vmem>>, %arg10: memref<1x128xf32, #tpu.memory_space<vmem>>, %arg11: memref<1x128xf32, #tpu.memory_space<vmem>>, %arg12: memref<1x128xf32, #tpu.memory_space<vmem>>, %arg13: memref<1x128xf32, #tpu.memory_space<vmem>>, %arg14: memref<128x128xf32, #tpu.memory_space<vmem>>, %arg15: memref<1x128xf32, #tpu.memory_space<vmem>>, %arg16: memref<1x128xf32, #tpu.memory_space<vmem>>, %arg17: memref<1x128xf32, #tpu.memory_space<vmem>>, %arg18: memref<1x128xf32, #tpu.memory_space<vmem>>, %arg19: memref<256x128xf32, #tpu.memory_space<vmem>>, %arg20: memref<1x128xf32, #tpu.memory_space<vmem>>, %arg21: memref<128x64xf32, #tpu.memory_space<vmem>>, %arg22: memref<1x64xf32, #tpu.memory_space<vmem>>, %arg23: memref<64x6xf32, #tpu.memory_space<vmem>>, %arg24: memref<1x6xf32, #tpu.memory_space<vmem>>, %arg25: memref<2x6xf32, #tpu.memory_space<vmem>>) attributes {dimension_semantics = [], scalar_prefetch = 0 : i64, scratch_operands = 0 : i64, tpu.core_type = #tpu.core_type<tc>} {
    %c0 = arith.constant 0 : index
    %c0_0 = arith.constant 0 : index
    %0 = vector.load %arg0[%c0, %c0_0] : memref<32x16xf32, #tpu.memory_space<vmem>>, vector<32x16xf32>
    %c0_1 = arith.constant 0 : index
    %c0_2 = arith.constant 0 : index
    %1 = vector.load %arg1[%c0_1, %c0_2] : memref<32x32xf32, #tpu.memory_space<vmem>>, vector<32x32xf32>
    %c0_3 = arith.constant 0 : index
    %c0_4 = arith.constant 0 : index
    %2 = vector.load %arg2[%c0_3, %c0_4] : memref<32x2xf32, #tpu.memory_space<vmem>>, vector<32x2xf32>
    %c0_5 = arith.constant 0 : index
    %c0_6 = arith.constant 0 : index
    %3 = vector.load %arg3[%c0_5, %c0_6] : memref<2x32xf32, #tpu.memory_space<vmem>>, vector<2x32xf32>
    %4 = tpu.iota {dimensions = array<i32: 0>} : vector<32x32xi32>
    %5 = tpu.iota {dimensions = array<i32: 1>} : vector<32x32xi32>
    %6 = arith.cmpi eq, %4, %5 : vector<32x32xi32>
    %7 = arith.extui %6 : vector<32x32xi1> to vector<32x32xi32>
    %8 = arith.sitofp %7 : vector<32x32xi32> to vector<32x32xf32>
    %9 = tpu.iota {dimensions = array<i32: 1>} : vector<32x2xi32>
    %cst = arith.constant 1.000000e+00 : f32
    %10 = vector.broadcast %cst : f32 to vector<1x1xf32>
    %cst_7 = arith.constant 1.000000e+00 : f32
    %11 = vector.broadcast %cst_7 : f32 to vector<32x1xf32>
    %c0_8 = arith.constant 0 : index
    %c0_9 = arith.constant 0 : index
    %12 = vector.load %arg4[%c0_8, %c0_9] : memref<16x128xf32, #tpu.memory_space<vmem>>, vector<16x128xf32>
    %c0_10 = arith.constant 0 : index
    %c0_11 = arith.constant 0 : index
    %13 = vector.load %arg5[%c0_10, %c0_11] : memref<1x128xf32, #tpu.memory_space<vmem>>, vector<1x128xf32>
    %c0_12 = arith.constant 0 : index
    %c0_13 = arith.constant 0 : index
    %14 = vector.load %arg6[%c0_12, %c0_13] : memref<1x128xf32, #tpu.memory_space<vmem>>, vector<1x128xf32>
    %c0_14 = arith.constant 0 : index
    %c0_15 = arith.constant 0 : index
    %15 = vector.load %arg7[%c0_14, %c0_15] : memref<1x128xf32, #tpu.memory_space<vmem>>, vector<1x128xf32>
    %cst_16 = arith.constant dense<0.000000e+00> : vector<32x128xf32>
    %16 = tpu.matmul %0, %12, %cst_16 {dimension_numbers = #tpu.dot_dimension_numbers<[1], [0], [0], [1], [0, 0, 1, 1], [], []>} : vector<32x16xf32>, vector<16x128xf32>, vector<32x128xf32> -> vector<32x128xf32>
    %17 = vector.broadcast %14 : vector<1x128xf32> to vector<32x128xf32>
    %18 = arith.mulf %16, %17 : vector<32x128xf32>
    %cst_17 = arith.constant dense<0.000000e+00> : vector<32xf32>
    %19 = vector.multi_reduction <add>, %18, %cst_17 [1] : vector<32x128xf32> to vector<32xf32>
    %20 = vector.shape_cast %19 : vector<32xf32> to vector<32x1xf32>
    %21 = vector.broadcast %13 : vector<1x128xf32> to vector<32x128xf32>
    %22 = arith.mulf %16, %21 : vector<32x128xf32>
    %cst_18 = arith.constant dense<0.000000e+00> : vector<32xf32>
    %23 = vector.multi_reduction <add>, %22, %cst_18 [1] : vector<32x128xf32> to vector<32xf32>
    %24 = vector.shape_cast %23 : vector<32xf32> to vector<32x1xf32>
    %cst_19 = arith.constant dense<0.000000e+00> : vector<1x32xf32>
    %25 = tpu.matmul %10, %24, %cst_19 {dimension_numbers = #tpu.dot_dimension_numbers<[1], [1], [0], [0], [0, 0, 1, 0], [], []>} : vector<1x1xf32>, vector<32x1xf32>, vector<1x32xf32> -> vector<1x32xf32>
    %26 = vector.broadcast %20 : vector<32x1xf32> to vector<32x32xf32>
    %27 = vector.broadcast %25 : vector<1x32xf32> to vector<32x32xf32>
    %28 = arith.addf %26, %27 : vector<32x32xf32>
    %cst_20 = arith.constant 0.000000e+00 : f32
    %29 = vector.broadcast %cst_20 : f32 to vector<32x32xf32>
    %30 = arith.cmpf ogt, %28, %29 : vector<32x32xf32>
    %cst_21 = arith.constant 2.000000e-01 : f32
    %31 = vector.broadcast %cst_21 : f32 to vector<32x32xf32>
    %32 = arith.mulf %31, %28 : vector<32x32xf32>
    %33 = arith.select %30, %28, %32 : vector<32x32xi1>, vector<32x32xf32>
    %cst_22 = arith.constant dense<0.000000e+00> : vector<32x32xf32>
    %34 = tpu.matmul %11, %11, %cst_22 {dimension_numbers = #tpu.dot_dimension_numbers<[1], [1], [0], [0], [0, 0, 1, 0], [], []>} : vector<32x1xf32>, vector<32x1xf32>, vector<32x32xf32> -> vector<32x32xf32>
    %35 = arith.mulf %1, %34 : vector<32x32xf32>
    %cst_23 = arith.constant 1.000000e+00 : f32
    %36 = vector.broadcast %cst_23 : f32 to vector<32x32xf32>
    %37 = arith.subf %36, %8 : vector<32x32xf32>
    %38 = arith.mulf %35, %37 : vector<32x32xf32>
    %39 = vector.broadcast %11 : vector<32x1xf32> to vector<32x32xf32>
    %40 = arith.mulf %8, %39 : vector<32x32xf32>
    %41 = arith.addf %38, %40 : vector<32x32xf32>
    %cst_24 = arith.constant 0.000000e+00 : f32
    %42 = vector.broadcast %cst_24 : f32 to vector<32x32xf32>
    %43 = arith.cmpf ogt, %41, %42 : vector<32x32xf32>
    %cst_25 = arith.constant -1.000000e+30 : f32
    %44 = vector.broadcast %cst_25 : f32 to vector<32x32xf32>
    %45 = arith.select %43, %33, %44 : vector<32x32xi1>, vector<32x32xf32>
    %cst_26 = arith.constant dense<0xFF800000> : vector<32xf32>
    %46 = vector.multi_reduction <maximumf>, %45, %cst_26 [1] : vector<32x32xf32> to vector<32xf32>
    %47 = vector.shape_cast %46 : vector<32xf32> to vector<32x1xf32>
    %48 = vector.broadcast %47 : vector<32x1xf32> to vector<32x32xf32>
    %49 = arith.subf %45, %48 : vector<32x32xf32>
    %50 = math.exp %49 : vector<32x32xf32>
    %51 = arith.mulf %50, %41 : vector<32x32xf32>
    %cst_27 = arith.constant dense<0.000000e+00> : vector<32xf32>
    %52 = vector.multi_reduction <add>, %51, %cst_27 [1] : vector<32x32xf32> to vector<32xf32>
    %53 = vector.shape_cast %52 : vector<32xf32> to vector<32x1xf32>
    %cst_28 = arith.constant 1.000000e-30 : f32
    %54 = vector.broadcast %cst_28 : f32 to vector<32x1xf32>
    %55 = arith.maximumf %53, %54 : vector<32x1xf32>
    %56 = tpu.reciprocal %55 {approx = true} : vector<32x1xf32> -> vector<32x1xf32>
    %57 = vector.broadcast %56 : vector<32x1xf32> to vector<32x32xf32>
    %58 = arith.mulf %51, %57 : vector<32x32xf32>
    %cst_29 = arith.constant dense<0.000000e+00> : vector<32x128xf32>
    %59 = tpu.matmul %58, %16, %cst_29 {dimension_numbers = #tpu.dot_dimension_numbers<[1], [0], [0], [1], [0, 0, 1, 1], [], []>} : vector<32x32xf32>, vector<32x128xf32>, vector<32x128xf32> -> vector<32x128xf32>
    %60 = vector.broadcast %15 : vector<1x128xf32> to vector<32x128xf32>
    %61 = arith.addf %59, %60 : vector<32x128xf32>
    %cst_30 = arith.constant 0.000000e+00 : f32
    %62 = vector.broadcast %cst_30 : f32 to vector<32x128xf32>
    %63 = arith.maximumf %61, %62 : vector<32x128xf32>
    %64 = vector.broadcast %11 : vector<32x1xf32> to vector<32x128xf32>
    %65 = arith.mulf %63, %64 : vector<32x128xf32>
    %c0_31 = arith.constant 0 : index
    %c0_32 = arith.constant 0 : index
    %66 = vector.load %arg8[%c0_31, %c0_32] : memref<1x128xf32, #tpu.memory_space<vmem>>, vector<1x128xf32>
    %67 = vector.broadcast %11 : vector<32x1xf32> to vector<32x2xf32>
    %68 = arith.mulf %2, %67 : vector<32x2xf32>
    %69 = arith.mulf %66, %66 : vector<1x128xf32>
    %cst_33 = arith.constant dense<0.000000e+00> : vector<1xf32>
    %70 = vector.multi_reduction <add>, %69, %cst_33 [1] : vector<1x128xf32> to vector<1xf32>
    %71 = vector.shape_cast %70 : vector<1xf32> to vector<1x1xf32>
    %72 = math.rsqrt %71 : vector<1x1xf32>
    %73 = vector.broadcast %66 : vector<1x128xf32> to vector<32x128xf32>
    %74 = arith.mulf %65, %73 : vector<32x128xf32>
    %cst_34 = arith.constant dense<0.000000e+00> : vector<32xf32>
    %75 = vector.multi_reduction <add>, %74, %cst_34 [1] : vector<32x128xf32> to vector<32xf32>
    %76 = vector.shape_cast %75 : vector<32xf32> to vector<32x1xf32>
    %77 = vector.broadcast %72 : vector<1x1xf32> to vector<32x1xf32>
    %78 = arith.mulf %76, %77 : vector<32x1xf32>
    %cst_35 = arith.constant dense<0.000000e+00> : vector<1x32xf32>
    %79 = tpu.matmul %10, %78, %cst_35 {dimension_numbers = #tpu.dot_dimension_numbers<[1], [1], [0], [0], [0, 0, 1, 0], [], []>} : vector<1x1xf32>, vector<32x1xf32>, vector<1x32xf32> -> vector<1x32xf32>
    %cst_36 = arith.constant dense<0.000000e+00> : vector<32x32xf32>
    %80 = tpu.matmul %68, %68, %cst_36 {dimension_numbers = #tpu.dot_dimension_numbers<[1], [1], [0], [0], [0, 0, 1, 0], [], []>} : vector<32x2xf32>, vector<32x2xf32>, vector<32x32xf32> -> vector<32x32xf32>
    %81 = vector.broadcast %79 : vector<1x32xf32> to vector<32x32xf32>
    %82 = vector.broadcast %78 : vector<32x1xf32> to vector<32x32xf32>
    %83 = arith.cmpf ogt, %81, %82 : vector<32x32xf32>
    %84 = vector.broadcast %79 : vector<1x32xf32> to vector<32x32xf32>
    %85 = vector.broadcast %78 : vector<32x1xf32> to vector<32x32xf32>
    %86 = arith.cmpf oeq, %84, %85 : vector<32x32xf32>
    %87 = arith.cmpi slt, %5, %4 : vector<32x32xi32>
    %88 = arith.andi %86, %87 : vector<32x32xi1>
    %89 = arith.ori %83, %88 : vector<32x32xi1>
    %90 = arith.extui %89 : vector<32x32xi1> to vector<32x32xi32>
    %91 = arith.sitofp %90 : vector<32x32xi32> to vector<32x32xf32>
    %92 = arith.mulf %80, %91 : vector<32x32xf32>
    %cst_37 = arith.constant dense<0.000000e+00> : vector<32xf32>
    %93 = vector.multi_reduction <add>, %92, %cst_37 [1] : vector<32x32xf32> to vector<32xf32>
    %94 = vector.shape_cast %93 : vector<32xf32> to vector<32x1xf32>
    %cst_38 = arith.constant dense<0.000000e+00> : vector<2xf32>
    %95 = vector.multi_reduction <add>, %68, %cst_38 [0] : vector<32x2xf32> to vector<2xf32>
    %96 = vector.shape_cast %95 : vector<2xf32> to vector<1x2xf32>
    %cst_39 = arith.constant 8.000000e-01 : f32
    %97 = vector.broadcast %cst_39 : f32 to vector<1x2xf32>
    %98 = arith.mulf %97, %96 : vector<1x2xf32>
    %cst_40 = arith.constant 9.99999974E-5 : f32
    %99 = vector.broadcast %cst_40 : f32 to vector<1x2xf32>
    %100 = arith.subf %98, %99 : vector<1x2xf32>
    %101 = math.ceil %100 : vector<1x2xf32>
    %cst_41 = arith.constant dense<0.000000e+00> : vector<32x1xf32>
    %102 = tpu.matmul %68, %101, %cst_41 {dimension_numbers = #tpu.dot_dimension_numbers<[1], [1], [0], [0], [0, 0, 1, 0], [], []>} : vector<32x2xf32>, vector<1x2xf32>, vector<32x1xf32> -> vector<32x1xf32>
    %103 = arith.cmpf olt, %94, %102 : vector<32x1xf32>
    %cst_42 = arith.constant 0.000000e+00 : f32
    %104 = vector.broadcast %cst_42 : f32 to vector<32x1xf32>
    %105 = arith.cmpf ogt, %11, %104 : vector<32x1xf32>
    %106 = arith.andi %103, %105 : vector<32x1xi1>
    %cst_43 = arith.constant 1.000000e+00 : f32
    %cst_44 = arith.constant 0.000000e+00 : f32
    %107 = vector.broadcast %cst_43 : f32 to vector<32x1xf32>
    %108 = vector.broadcast %cst_44 : f32 to vector<32x1xf32>
    %109 = arith.select %106, %107, %108 : vector<32x1xi1>, vector<32x1xf32>
    %110 = math.tanh %78 : vector<32x1xf32>
    %111 = vector.broadcast %110 : vector<32x1xf32> to vector<32x128xf32>
    %112 = arith.mulf %65, %111 : vector<32x128xf32>
    %113 = vector.broadcast %109 : vector<32x1xf32> to vector<32x128xf32>
    %114 = arith.mulf %112, %113 : vector<32x128xf32>
    %cst_45 = arith.constant dense<0.000000e+00> : vector<1x32xf32>
    %115 = tpu.matmul %10, %109, %cst_45 {dimension_numbers = #tpu.dot_dimension_numbers<[1], [1], [0], [0], [0, 0, 1, 0], [], []>} : vector<1x1xf32>, vector<32x1xf32>, vector<1x32xf32> -> vector<1x32xf32>
    %116 = vector.broadcast %115 : vector<1x32xf32> to vector<2x32xf32>
    %117 = arith.mulf %3, %116 : vector<2x32xf32>
    %cst_46 = arith.constant dense<0.000000e+00> : vector<2xf32>
    %118 = vector.multi_reduction <add>, %117, %cst_46 [1] : vector<2x32xf32> to vector<2xf32>
    %119 = vector.shape_cast %118 : vector<2xf32> to vector<2x1xf32>
    %cst_47 = arith.constant dense<0.000000e+00> : vector<2x128xf32>
    %120 = tpu.matmul %117, %114, %cst_47 {dimension_numbers = #tpu.dot_dimension_numbers<[1], [0], [0], [1], [0, 0, 1, 1], [], []>} : vector<2x32xf32>, vector<32x128xf32>, vector<2x128xf32> -> vector<2x128xf32>
    %cst_48 = arith.constant 1.000000e+00 : f32
    %121 = vector.broadcast %cst_48 : f32 to vector<2x1xf32>
    %122 = arith.maximumf %119, %121 : vector<2x1xf32>
    %123 = vector.broadcast %122 : vector<2x1xf32> to vector<2x128xf32>
    %124 = arith.divf %120, %123 : vector<2x128xf32>
    %125 = vector.broadcast %109 : vector<32x1xf32> to vector<32x2xf32>
    %126 = arith.mulf %2, %125 : vector<32x2xf32>
    %127 = tpu.iota {dimensions = array<i32: 0>} : vector<2x128xi32>
    %cst_49 = arith.constant -1.000000e+30 : f32
    %128 = vector.broadcast %cst_49 : f32 to vector<2x128xf32>
    %c0_i32 = arith.constant 0 : i32
    %129 = vector.broadcast %c0_i32 : i32 to vector<32x2xi32>
    %130 = arith.cmpi eq, %9, %129 : vector<32x2xi32>
    %131 = arith.extui %130 : vector<32x2xi1> to vector<32x2xi32>
    %132 = arith.sitofp %131 : vector<32x2xi32> to vector<32x2xf32>
    %133 = arith.mulf %126, %132 : vector<32x2xf32>
    %cst_50 = arith.constant dense<0.000000e+00> : vector<32xf32>
    %134 = vector.multi_reduction <add>, %133, %cst_50 [1] : vector<32x2xf32> to vector<32xf32>
    %135 = vector.shape_cast %134 : vector<32xf32> to vector<32x1xf32>
    %cst_51 = arith.constant 0.000000e+00 : f32
    %136 = vector.broadcast %cst_51 : f32 to vector<32x1xf32>
    %137 = arith.cmpf ogt, %135, %136 : vector<32x1xf32>
    %cst_52 = arith.constant -1.000000e+30 : f32
    %138 = vector.shape_cast %137 : vector<32x1xi1> to vector<32x1xi1>
    %139 = vector.broadcast %138 : vector<32x1xi1> to vector<32x128xi1>
    %140 = vector.broadcast %cst_52 : f32 to vector<32x128xf32>
    %141 = arith.select %139, %114, %140 : vector<32x128xi1>, vector<32x128xf32>
    %cst_53 = arith.constant dense<0xFF800000> : vector<128xf32>
    %142 = vector.multi_reduction <maximumf>, %141, %cst_53 [0] : vector<32x128xf32> to vector<128xf32>
    %143 = vector.shape_cast %142 : vector<128xf32> to vector<1x128xf32>
    %c0_i32_54 = arith.constant 0 : i32
    %144 = vector.broadcast %c0_i32_54 : i32 to vector<2x128xi32>
    %145 = arith.cmpi eq, %127, %144 : vector<2x128xi32>
    %146 = vector.shape_cast %143 : vector<1x128xf32> to vector<1x128xf32>
    %147 = vector.broadcast %146 : vector<1x128xf32> to vector<2x128xf32>
    %148 = arith.select %145, %147, %128 : vector<2x128xi1>, vector<2x128xf32>
    %c1_i32 = arith.constant 1 : i32
    %149 = vector.broadcast %c1_i32 : i32 to vector<32x2xi32>
    %150 = arith.cmpi eq, %9, %149 : vector<32x2xi32>
    %151 = arith.extui %150 : vector<32x2xi1> to vector<32x2xi32>
    %152 = arith.sitofp %151 : vector<32x2xi32> to vector<32x2xf32>
    %153 = arith.mulf %126, %152 : vector<32x2xf32>
    %cst_55 = arith.constant dense<0.000000e+00> : vector<32xf32>
    %154 = vector.multi_reduction <add>, %153, %cst_55 [1] : vector<32x2xf32> to vector<32xf32>
    %155 = vector.shape_cast %154 : vector<32xf32> to vector<32x1xf32>
    %cst_56 = arith.constant 0.000000e+00 : f32
    %156 = vector.broadcast %cst_56 : f32 to vector<32x1xf32>
    %157 = arith.cmpf ogt, %155, %156 : vector<32x1xf32>
    %cst_57 = arith.constant -1.000000e+30 : f32
    %158 = vector.shape_cast %157 : vector<32x1xi1> to vector<32x1xi1>
    %159 = vector.broadcast %158 : vector<32x1xi1> to vector<32x128xi1>
    %160 = vector.broadcast %cst_57 : f32 to vector<32x128xf32>
    %161 = arith.select %159, %114, %160 : vector<32x128xi1>, vector<32x128xf32>
    %cst_58 = arith.constant dense<0xFF800000> : vector<128xf32>
    %162 = vector.multi_reduction <maximumf>, %161, %cst_58 [0] : vector<32x128xf32> to vector<128xf32>
    %163 = vector.shape_cast %162 : vector<128xf32> to vector<1x128xf32>
    %c1_i32_59 = arith.constant 1 : i32
    %164 = vector.broadcast %c1_i32_59 : i32 to vector<2x128xi32>
    %165 = arith.cmpi eq, %127, %164 : vector<2x128xi32>
    %166 = vector.shape_cast %163 : vector<1x128xf32> to vector<1x128xf32>
    %167 = vector.broadcast %166 : vector<1x128xf32> to vector<2x128xf32>
    %168 = arith.select %165, %167, %148 : vector<2x128xi1>, vector<2x128xf32>
    %169 = tpu.concatenate %168, %124 in 1 : vector<2x128xf32>, vector<2x128xf32> -> vector<2x256xf32>
    %c0_60 = arith.constant 0 : index
    %c0_61 = arith.constant 0 : index
    %170 = vector.load %arg9[%c0_60, %c0_61] : memref<128x128xf32, #tpu.memory_space<vmem>>, vector<128x128xf32>
    %c0_62 = arith.constant 0 : index
    %c0_63 = arith.constant 0 : index
    %171 = vector.load %arg10[%c0_62, %c0_63] : memref<1x128xf32, #tpu.memory_space<vmem>>, vector<1x128xf32>
    %c0_64 = arith.constant 0 : index
    %c0_65 = arith.constant 0 : index
    %172 = vector.load %arg11[%c0_64, %c0_65] : memref<1x128xf32, #tpu.memory_space<vmem>>, vector<1x128xf32>
    %c0_66 = arith.constant 0 : index
    %c0_67 = arith.constant 0 : index
    %173 = vector.load %arg12[%c0_66, %c0_67] : memref<1x128xf32, #tpu.memory_space<vmem>>, vector<1x128xf32>
    %cst_68 = arith.constant dense<0.000000e+00> : vector<32x128xf32>
    %174 = tpu.matmul %114, %170, %cst_68 {dimension_numbers = #tpu.dot_dimension_numbers<[1], [0], [0], [1], [0, 0, 1, 1], [], []>} : vector<32x128xf32>, vector<128x128xf32>, vector<32x128xf32> -> vector<32x128xf32>
    %175 = vector.broadcast %172 : vector<1x128xf32> to vector<32x128xf32>
    %176 = arith.mulf %174, %175 : vector<32x128xf32>
    %cst_69 = arith.constant dense<0.000000e+00> : vector<32xf32>
    %177 = vector.multi_reduction <add>, %176, %cst_69 [1] : vector<32x128xf32> to vector<32xf32>
    %178 = vector.shape_cast %177 : vector<32xf32> to vector<32x1xf32>
    %179 = vector.broadcast %171 : vector<1x128xf32> to vector<32x128xf32>
    %180 = arith.mulf %174, %179 : vector<32x128xf32>
    %cst_70 = arith.constant dense<0.000000e+00> : vector<32xf32>
    %181 = vector.multi_reduction <add>, %180, %cst_70 [1] : vector<32x128xf32> to vector<32xf32>
    %182 = vector.shape_cast %181 : vector<32xf32> to vector<32x1xf32>
    %cst_71 = arith.constant dense<0.000000e+00> : vector<1x32xf32>
    %183 = tpu.matmul %10, %182, %cst_71 {dimension_numbers = #tpu.dot_dimension_numbers<[1], [1], [0], [0], [0, 0, 1, 0], [], []>} : vector<1x1xf32>, vector<32x1xf32>, vector<1x32xf32> -> vector<1x32xf32>
    %184 = vector.broadcast %178 : vector<32x1xf32> to vector<32x32xf32>
    %185 = vector.broadcast %183 : vector<1x32xf32> to vector<32x32xf32>
    %186 = arith.addf %184, %185 : vector<32x32xf32>
    %cst_72 = arith.constant 0.000000e+00 : f32
    %187 = vector.broadcast %cst_72 : f32 to vector<32x32xf32>
    %188 = arith.cmpf ogt, %186, %187 : vector<32x32xf32>
    %cst_73 = arith.constant 2.000000e-01 : f32
    %189 = vector.broadcast %cst_73 : f32 to vector<32x32xf32>
    %190 = arith.mulf %189, %186 : vector<32x32xf32>
    %191 = arith.select %188, %186, %190 : vector<32x32xi1>, vector<32x32xf32>
    %cst_74 = arith.constant dense<0.000000e+00> : vector<32x32xf32>
    %192 = tpu.matmul %109, %109, %cst_74 {dimension_numbers = #tpu.dot_dimension_numbers<[1], [1], [0], [0], [0, 0, 1, 0], [], []>} : vector<32x1xf32>, vector<32x1xf32>, vector<32x32xf32> -> vector<32x32xf32>
    %193 = arith.mulf %1, %192 : vector<32x32xf32>
    %cst_75 = arith.constant 1.000000e+00 : f32
    %194 = vector.broadcast %cst_75 : f32 to vector<32x32xf32>
    %195 = arith.subf %194, %8 : vector<32x32xf32>
    %196 = arith.mulf %193, %195 : vector<32x32xf32>
    %197 = vector.broadcast %109 : vector<32x1xf32> to vector<32x32xf32>
    %198 = arith.mulf %8, %197 : vector<32x32xf32>
    %199 = arith.addf %196, %198 : vector<32x32xf32>
    %cst_76 = arith.constant 0.000000e+00 : f32
    %200 = vector.broadcast %cst_76 : f32 to vector<32x32xf32>
    %201 = arith.cmpf ogt, %199, %200 : vector<32x32xf32>
    %cst_77 = arith.constant -1.000000e+30 : f32
    %202 = vector.broadcast %cst_77 : f32 to vector<32x32xf32>
    %203 = arith.select %201, %191, %202 : vector<32x32xi1>, vector<32x32xf32>
    %cst_78 = arith.constant dense<0xFF800000> : vector<32xf32>
    %204 = vector.multi_reduction <maximumf>, %203, %cst_78 [1] : vector<32x32xf32> to vector<32xf32>
    %205 = vector.shape_cast %204 : vector<32xf32> to vector<32x1xf32>
    %206 = vector.broadcast %205 : vector<32x1xf32> to vector<32x32xf32>
    %207 = arith.subf %203, %206 : vector<32x32xf32>
    %208 = math.exp %207 : vector<32x32xf32>
    %209 = arith.mulf %208, %199 : vector<32x32xf32>
    %cst_79 = arith.constant dense<0.000000e+00> : vector<32xf32>
    %210 = vector.multi_reduction <add>, %209, %cst_79 [1] : vector<32x32xf32> to vector<32xf32>
    %211 = vector.shape_cast %210 : vector<32xf32> to vector<32x1xf32>
    %cst_80 = arith.constant 1.000000e-30 : f32
    %212 = vector.broadcast %cst_80 : f32 to vector<32x1xf32>
    %213 = arith.maximumf %211, %212 : vector<32x1xf32>
    %214 = tpu.reciprocal %213 {approx = true} : vector<32x1xf32> -> vector<32x1xf32>
    %215 = vector.broadcast %214 : vector<32x1xf32> to vector<32x32xf32>
    %216 = arith.mulf %209, %215 : vector<32x32xf32>
    %cst_81 = arith.constant dense<0.000000e+00> : vector<32x128xf32>
    %217 = tpu.matmul %216, %174, %cst_81 {dimension_numbers = #tpu.dot_dimension_numbers<[1], [0], [0], [1], [0, 0, 1, 1], [], []>} : vector<32x32xf32>, vector<32x128xf32>, vector<32x128xf32> -> vector<32x128xf32>
    %218 = vector.broadcast %173 : vector<1x128xf32> to vector<32x128xf32>
    %219 = arith.addf %217, %218 : vector<32x128xf32>
    %cst_82 = arith.constant 0.000000e+00 : f32
    %220 = vector.broadcast %cst_82 : f32 to vector<32x128xf32>
    %221 = arith.maximumf %219, %220 : vector<32x128xf32>
    %222 = vector.broadcast %109 : vector<32x1xf32> to vector<32x128xf32>
    %223 = arith.mulf %221, %222 : vector<32x128xf32>
    %c0_83 = arith.constant 0 : index
    %c0_84 = arith.constant 0 : index
    %224 = vector.load %arg13[%c0_83, %c0_84] : memref<1x128xf32, #tpu.memory_space<vmem>>, vector<1x128xf32>
    %225 = vector.broadcast %109 : vector<32x1xf32> to vector<32x2xf32>
    %226 = arith.mulf %2, %225 : vector<32x2xf32>
    %227 = arith.mulf %224, %224 : vector<1x128xf32>
    %cst_85 = arith.constant dense<0.000000e+00> : vector<1xf32>
    %228 = vector.multi_reduction <add>, %227, %cst_85 [1] : vector<1x128xf32> to vector<1xf32>
    %229 = vector.shape_cast %228 : vector<1xf32> to vector<1x1xf32>
    %230 = math.rsqrt %229 : vector<1x1xf32>
    %231 = vector.broadcast %224 : vector<1x128xf32> to vector<32x128xf32>
    %232 = arith.mulf %223, %231 : vector<32x128xf32>
    %cst_86 = arith.constant dense<0.000000e+00> : vector<32xf32>
    %233 = vector.multi_reduction <add>, %232, %cst_86 [1] : vector<32x128xf32> to vector<32xf32>
    %234 = vector.shape_cast %233 : vector<32xf32> to vector<32x1xf32>
    %235 = vector.broadcast %230 : vector<1x1xf32> to vector<32x1xf32>
    %236 = arith.mulf %234, %235 : vector<32x1xf32>
    %cst_87 = arith.constant dense<0.000000e+00> : vector<1x32xf32>
    %237 = tpu.matmul %10, %236, %cst_87 {dimension_numbers = #tpu.dot_dimension_numbers<[1], [1], [0], [0], [0, 0, 1, 0], [], []>} : vector<1x1xf32>, vector<32x1xf32>, vector<1x32xf32> -> vector<1x32xf32>
    %cst_88 = arith.constant dense<0.000000e+00> : vector<32x32xf32>
    %238 = tpu.matmul %226, %226, %cst_88 {dimension_numbers = #tpu.dot_dimension_numbers<[1], [1], [0], [0], [0, 0, 1, 0], [], []>} : vector<32x2xf32>, vector<32x2xf32>, vector<32x32xf32> -> vector<32x32xf32>
    %239 = vector.broadcast %237 : vector<1x32xf32> to vector<32x32xf32>
    %240 = vector.broadcast %236 : vector<32x1xf32> to vector<32x32xf32>
    %241 = arith.cmpf ogt, %239, %240 : vector<32x32xf32>
    %242 = vector.broadcast %237 : vector<1x32xf32> to vector<32x32xf32>
    %243 = vector.broadcast %236 : vector<32x1xf32> to vector<32x32xf32>
    %244 = arith.cmpf oeq, %242, %243 : vector<32x32xf32>
    %245 = arith.cmpi slt, %5, %4 : vector<32x32xi32>
    %246 = arith.andi %244, %245 : vector<32x32xi1>
    %247 = arith.ori %241, %246 : vector<32x32xi1>
    %248 = arith.extui %247 : vector<32x32xi1> to vector<32x32xi32>
    %249 = arith.sitofp %248 : vector<32x32xi32> to vector<32x32xf32>
    %250 = arith.mulf %238, %249 : vector<32x32xf32>
    %cst_89 = arith.constant dense<0.000000e+00> : vector<32xf32>
    %251 = vector.multi_reduction <add>, %250, %cst_89 [1] : vector<32x32xf32> to vector<32xf32>
    %252 = vector.shape_cast %251 : vector<32xf32> to vector<32x1xf32>
    %cst_90 = arith.constant dense<0.000000e+00> : vector<2xf32>
    %253 = vector.multi_reduction <add>, %226, %cst_90 [0] : vector<32x2xf32> to vector<2xf32>
    %254 = vector.shape_cast %253 : vector<2xf32> to vector<1x2xf32>
    %cst_91 = arith.constant 8.000000e-01 : f32
    %255 = vector.broadcast %cst_91 : f32 to vector<1x2xf32>
    %256 = arith.mulf %255, %254 : vector<1x2xf32>
    %cst_92 = arith.constant 9.99999974E-5 : f32
    %257 = vector.broadcast %cst_92 : f32 to vector<1x2xf32>
    %258 = arith.subf %256, %257 : vector<1x2xf32>
    %259 = math.ceil %258 : vector<1x2xf32>
    %cst_93 = arith.constant dense<0.000000e+00> : vector<32x1xf32>
    %260 = tpu.matmul %226, %259, %cst_93 {dimension_numbers = #tpu.dot_dimension_numbers<[1], [1], [0], [0], [0, 0, 1, 0], [], []>} : vector<32x2xf32>, vector<1x2xf32>, vector<32x1xf32> -> vector<32x1xf32>
    %261 = arith.cmpf olt, %252, %260 : vector<32x1xf32>
    %cst_94 = arith.constant 0.000000e+00 : f32
    %262 = vector.broadcast %cst_94 : f32 to vector<32x1xf32>
    %263 = arith.cmpf ogt, %109, %262 : vector<32x1xf32>
    %264 = arith.andi %261, %263 : vector<32x1xi1>
    %cst_95 = arith.constant 1.000000e+00 : f32
    %cst_96 = arith.constant 0.000000e+00 : f32
    %265 = vector.broadcast %cst_95 : f32 to vector<32x1xf32>
    %266 = vector.broadcast %cst_96 : f32 to vector<32x1xf32>
    %267 = arith.select %264, %265, %266 : vector<32x1xi1>, vector<32x1xf32>
    %268 = math.tanh %236 : vector<32x1xf32>
    %269 = vector.broadcast %268 : vector<32x1xf32> to vector<32x128xf32>
    %270 = arith.mulf %223, %269 : vector<32x128xf32>
    %271 = vector.broadcast %267 : vector<32x1xf32> to vector<32x128xf32>
    %272 = arith.mulf %270, %271 : vector<32x128xf32>
    %cst_97 = arith.constant dense<0.000000e+00> : vector<1x32xf32>
    %273 = tpu.matmul %10, %267, %cst_97 {dimension_numbers = #tpu.dot_dimension_numbers<[1], [1], [0], [0], [0, 0, 1, 0], [], []>} : vector<1x1xf32>, vector<32x1xf32>, vector<1x32xf32> -> vector<1x32xf32>
    %274 = vector.broadcast %273 : vector<1x32xf32> to vector<2x32xf32>
    %275 = arith.mulf %3, %274 : vector<2x32xf32>
    %cst_98 = arith.constant dense<0.000000e+00> : vector<2xf32>
    %276 = vector.multi_reduction <add>, %275, %cst_98 [1] : vector<2x32xf32> to vector<2xf32>
    %277 = vector.shape_cast %276 : vector<2xf32> to vector<2x1xf32>
    %cst_99 = arith.constant dense<0.000000e+00> : vector<2x128xf32>
    %278 = tpu.matmul %275, %272, %cst_99 {dimension_numbers = #tpu.dot_dimension_numbers<[1], [0], [0], [1], [0, 0, 1, 1], [], []>} : vector<2x32xf32>, vector<32x128xf32>, vector<2x128xf32> -> vector<2x128xf32>
    %cst_100 = arith.constant 1.000000e+00 : f32
    %279 = vector.broadcast %cst_100 : f32 to vector<2x1xf32>
    %280 = arith.maximumf %277, %279 : vector<2x1xf32>
    %281 = vector.broadcast %280 : vector<2x1xf32> to vector<2x128xf32>
    %282 = arith.divf %278, %281 : vector<2x128xf32>
    %283 = vector.broadcast %267 : vector<32x1xf32> to vector<32x2xf32>
    %284 = arith.mulf %2, %283 : vector<32x2xf32>
    %285 = tpu.iota {dimensions = array<i32: 0>} : vector<2x128xi32>
    %cst_101 = arith.constant -1.000000e+30 : f32
    %286 = vector.broadcast %cst_101 : f32 to vector<2x128xf32>
    %c0_i32_102 = arith.constant 0 : i32
    %287 = vector.broadcast %c0_i32_102 : i32 to vector<32x2xi32>
    %288 = arith.cmpi eq, %9, %287 : vector<32x2xi32>
    %289 = arith.extui %288 : vector<32x2xi1> to vector<32x2xi32>
    %290 = arith.sitofp %289 : vector<32x2xi32> to vector<32x2xf32>
    %291 = arith.mulf %284, %290 : vector<32x2xf32>
    %cst_103 = arith.constant dense<0.000000e+00> : vector<32xf32>
    %292 = vector.multi_reduction <add>, %291, %cst_103 [1] : vector<32x2xf32> to vector<32xf32>
    %293 = vector.shape_cast %292 : vector<32xf32> to vector<32x1xf32>
    %cst_104 = arith.constant 0.000000e+00 : f32
    %294 = vector.broadcast %cst_104 : f32 to vector<32x1xf32>
    %295 = arith.cmpf ogt, %293, %294 : vector<32x1xf32>
    %cst_105 = arith.constant -1.000000e+30 : f32
    %296 = vector.shape_cast %295 : vector<32x1xi1> to vector<32x1xi1>
    %297 = vector.broadcast %296 : vector<32x1xi1> to vector<32x128xi1>
    %298 = vector.broadcast %cst_105 : f32 to vector<32x128xf32>
    %299 = arith.select %297, %272, %298 : vector<32x128xi1>, vector<32x128xf32>
    %cst_106 = arith.constant dense<0xFF800000> : vector<128xf32>
    %300 = vector.multi_reduction <maximumf>, %299, %cst_106 [0] : vector<32x128xf32> to vector<128xf32>
    %301 = vector.shape_cast %300 : vector<128xf32> to vector<1x128xf32>
    %c0_i32_107 = arith.constant 0 : i32
    %302 = vector.broadcast %c0_i32_107 : i32 to vector<2x128xi32>
    %303 = arith.cmpi eq, %285, %302 : vector<2x128xi32>
    %304 = vector.shape_cast %301 : vector<1x128xf32> to vector<1x128xf32>
    %305 = vector.broadcast %304 : vector<1x128xf32> to vector<2x128xf32>
    %306 = arith.select %303, %305, %286 : vector<2x128xi1>, vector<2x128xf32>
    %c1_i32_108 = arith.constant 1 : i32
    %307 = vector.broadcast %c1_i32_108 : i32 to vector<32x2xi32>
    %308 = arith.cmpi eq, %9, %307 : vector<32x2xi32>
    %309 = arith.extui %308 : vector<32x2xi1> to vector<32x2xi32>
    %310 = arith.sitofp %309 : vector<32x2xi32> to vector<32x2xf32>
    %311 = arith.mulf %284, %310 : vector<32x2xf32>
    %cst_109 = arith.constant dense<0.000000e+00> : vector<32xf32>
    %312 = vector.multi_reduction <add>, %311, %cst_109 [1] : vector<32x2xf32> to vector<32xf32>
    %313 = vector.shape_cast %312 : vector<32xf32> to vector<32x1xf32>
    %cst_110 = arith.constant 0.000000e+00 : f32
    %314 = vector.broadcast %cst_110 : f32 to vector<32x1xf32>
    %315 = arith.cmpf ogt, %313, %314 : vector<32x1xf32>
    %cst_111 = arith.constant -1.000000e+30 : f32
    %316 = vector.shape_cast %315 : vector<32x1xi1> to vector<32x1xi1>
    %317 = vector.broadcast %316 : vector<32x1xi1> to vector<32x128xi1>
    %318 = vector.broadcast %cst_111 : f32 to vector<32x128xf32>
    %319 = arith.select %317, %272, %318 : vector<32x128xi1>, vector<32x128xf32>
    %cst_112 = arith.constant dense<0xFF800000> : vector<128xf32>
    %320 = vector.multi_reduction <maximumf>, %319, %cst_112 [0] : vector<32x128xf32> to vector<128xf32>
    %321 = vector.shape_cast %320 : vector<128xf32> to vector<1x128xf32>
    %c1_i32_113 = arith.constant 1 : i32
    %322 = vector.broadcast %c1_i32_113 : i32 to vector<2x128xi32>
    %323 = arith.cmpi eq, %285, %322 : vector<2x128xi32>
    %324 = vector.shape_cast %321 : vector<1x128xf32> to vector<1x128xf32>
    %325 = vector.broadcast %324 : vector<1x128xf32> to vector<2x128xf32>
    %326 = arith.select %323, %325, %306 : vector<2x128xi1>, vector<2x128xf32>
    %327 = tpu.concatenate %326, %282 in 1 : vector<2x128xf32>, vector<2x128xf32> -> vector<2x256xf32>
    %c0_114 = arith.constant 0 : index
    %c0_115 = arith.constant 0 : index
    %328 = vector.load %arg14[%c0_114, %c0_115] : memref<128x128xf32, #tpu.memory_space<vmem>>, vector<128x128xf32>
    %c0_116 = arith.constant 0 : index
    %c0_117 = arith.constant 0 : index
    %329 = vector.load %arg15[%c0_116, %c0_117] : memref<1x128xf32, #tpu.memory_space<vmem>>, vector<1x128xf32>
    %c0_118 = arith.constant 0 : index
    %c0_119 = arith.constant 0 : index
    %330 = vector.load %arg16[%c0_118, %c0_119] : memref<1x128xf32, #tpu.memory_space<vmem>>, vector<1x128xf32>
    %c0_120 = arith.constant 0 : index
    %c0_121 = arith.constant 0 : index
    %331 = vector.load %arg17[%c0_120, %c0_121] : memref<1x128xf32, #tpu.memory_space<vmem>>, vector<1x128xf32>
    %cst_122 = arith.constant dense<0.000000e+00> : vector<32x128xf32>
    %332 = tpu.matmul %272, %328, %cst_122 {dimension_numbers = #tpu.dot_dimension_numbers<[1], [0], [0], [1], [0, 0, 1, 1], [], []>} : vector<32x128xf32>, vector<128x128xf32>, vector<32x128xf32> -> vector<32x128xf32>
    %333 = vector.broadcast %330 : vector<1x128xf32> to vector<32x128xf32>
    %334 = arith.mulf %332, %333 : vector<32x128xf32>
    %cst_123 = arith.constant dense<0.000000e+00> : vector<32xf32>
    %335 = vector.multi_reduction <add>, %334, %cst_123 [1] : vector<32x128xf32> to vector<32xf32>
    %336 = vector.shape_cast %335 : vector<32xf32> to vector<32x1xf32>
    %337 = vector.broadcast %329 : vector<1x128xf32> to vector<32x128xf32>
    %338 = arith.mulf %332, %337 : vector<32x128xf32>
    %cst_124 = arith.constant dense<0.000000e+00> : vector<32xf32>
    %339 = vector.multi_reduction <add>, %338, %cst_124 [1] : vector<32x128xf32> to vector<32xf32>
    %340 = vector.shape_cast %339 : vector<32xf32> to vector<32x1xf32>
    %cst_125 = arith.constant dense<0.000000e+00> : vector<1x32xf32>
    %341 = tpu.matmul %10, %340, %cst_125 {dimension_numbers = #tpu.dot_dimension_numbers<[1], [1], [0], [0], [0, 0, 1, 0], [], []>} : vector<1x1xf32>, vector<32x1xf32>, vector<1x32xf32> -> vector<1x32xf32>
    %342 = vector.broadcast %336 : vector<32x1xf32> to vector<32x32xf32>
    %343 = vector.broadcast %341 : vector<1x32xf32> to vector<32x32xf32>
    %344 = arith.addf %342, %343 : vector<32x32xf32>
    %cst_126 = arith.constant 0.000000e+00 : f32
    %345 = vector.broadcast %cst_126 : f32 to vector<32x32xf32>
    %346 = arith.cmpf ogt, %344, %345 : vector<32x32xf32>
    %cst_127 = arith.constant 2.000000e-01 : f32
    %347 = vector.broadcast %cst_127 : f32 to vector<32x32xf32>
    %348 = arith.mulf %347, %344 : vector<32x32xf32>
    %349 = arith.select %346, %344, %348 : vector<32x32xi1>, vector<32x32xf32>
    %cst_128 = arith.constant dense<0.000000e+00> : vector<32x32xf32>
    %350 = tpu.matmul %267, %267, %cst_128 {dimension_numbers = #tpu.dot_dimension_numbers<[1], [1], [0], [0], [0, 0, 1, 0], [], []>} : vector<32x1xf32>, vector<32x1xf32>, vector<32x32xf32> -> vector<32x32xf32>
    %351 = arith.mulf %1, %350 : vector<32x32xf32>
    %cst_129 = arith.constant 1.000000e+00 : f32
    %352 = vector.broadcast %cst_129 : f32 to vector<32x32xf32>
    %353 = arith.subf %352, %8 : vector<32x32xf32>
    %354 = arith.mulf %351, %353 : vector<32x32xf32>
    %355 = vector.broadcast %267 : vector<32x1xf32> to vector<32x32xf32>
    %356 = arith.mulf %8, %355 : vector<32x32xf32>
    %357 = arith.addf %354, %356 : vector<32x32xf32>
    %cst_130 = arith.constant 0.000000e+00 : f32
    %358 = vector.broadcast %cst_130 : f32 to vector<32x32xf32>
    %359 = arith.cmpf ogt, %357, %358 : vector<32x32xf32>
    %cst_131 = arith.constant -1.000000e+30 : f32
    %360 = vector.broadcast %cst_131 : f32 to vector<32x32xf32>
    %361 = arith.select %359, %349, %360 : vector<32x32xi1>, vector<32x32xf32>
    %cst_132 = arith.constant dense<0xFF800000> : vector<32xf32>
    %362 = vector.multi_reduction <maximumf>, %361, %cst_132 [1] : vector<32x32xf32> to vector<32xf32>
    %363 = vector.shape_cast %362 : vector<32xf32> to vector<32x1xf32>
    %364 = vector.broadcast %363 : vector<32x1xf32> to vector<32x32xf32>
    %365 = arith.subf %361, %364 : vector<32x32xf32>
    %366 = math.exp %365 : vector<32x32xf32>
    %367 = arith.mulf %366, %357 : vector<32x32xf32>
    %cst_133 = arith.constant dense<0.000000e+00> : vector<32xf32>
    %368 = vector.multi_reduction <add>, %367, %cst_133 [1] : vector<32x32xf32> to vector<32xf32>
    %369 = vector.shape_cast %368 : vector<32xf32> to vector<32x1xf32>
    %cst_134 = arith.constant 1.000000e-30 : f32
    %370 = vector.broadcast %cst_134 : f32 to vector<32x1xf32>
    %371 = arith.maximumf %369, %370 : vector<32x1xf32>
    %372 = tpu.reciprocal %371 {approx = true} : vector<32x1xf32> -> vector<32x1xf32>
    %373 = vector.broadcast %372 : vector<32x1xf32> to vector<32x32xf32>
    %374 = arith.mulf %367, %373 : vector<32x32xf32>
    %cst_135 = arith.constant dense<0.000000e+00> : vector<32x128xf32>
    %375 = tpu.matmul %374, %332, %cst_135 {dimension_numbers = #tpu.dot_dimension_numbers<[1], [0], [0], [1], [0, 0, 1, 1], [], []>} : vector<32x32xf32>, vector<32x128xf32>, vector<32x128xf32> -> vector<32x128xf32>
    %376 = vector.broadcast %331 : vector<1x128xf32> to vector<32x128xf32>
    %377 = arith.addf %375, %376 : vector<32x128xf32>
    %cst_136 = arith.constant 0.000000e+00 : f32
    %378 = vector.broadcast %cst_136 : f32 to vector<32x128xf32>
    %379 = arith.maximumf %377, %378 : vector<32x128xf32>
    %380 = vector.broadcast %267 : vector<32x1xf32> to vector<32x128xf32>
    %381 = arith.mulf %379, %380 : vector<32x128xf32>
    %c0_137 = arith.constant 0 : index
    %c0_138 = arith.constant 0 : index
    %382 = vector.load %arg18[%c0_137, %c0_138] : memref<1x128xf32, #tpu.memory_space<vmem>>, vector<1x128xf32>
    %383 = vector.broadcast %267 : vector<32x1xf32> to vector<32x2xf32>
    %384 = arith.mulf %2, %383 : vector<32x2xf32>
    %385 = arith.mulf %382, %382 : vector<1x128xf32>
    %cst_139 = arith.constant dense<0.000000e+00> : vector<1xf32>
    %386 = vector.multi_reduction <add>, %385, %cst_139 [1] : vector<1x128xf32> to vector<1xf32>
    %387 = vector.shape_cast %386 : vector<1xf32> to vector<1x1xf32>
    %388 = math.rsqrt %387 : vector<1x1xf32>
    %389 = vector.broadcast %382 : vector<1x128xf32> to vector<32x128xf32>
    %390 = arith.mulf %381, %389 : vector<32x128xf32>
    %cst_140 = arith.constant dense<0.000000e+00> : vector<32xf32>
    %391 = vector.multi_reduction <add>, %390, %cst_140 [1] : vector<32x128xf32> to vector<32xf32>
    %392 = vector.shape_cast %391 : vector<32xf32> to vector<32x1xf32>
    %393 = vector.broadcast %388 : vector<1x1xf32> to vector<32x1xf32>
    %394 = arith.mulf %392, %393 : vector<32x1xf32>
    %cst_141 = arith.constant dense<0.000000e+00> : vector<1x32xf32>
    %395 = tpu.matmul %10, %394, %cst_141 {dimension_numbers = #tpu.dot_dimension_numbers<[1], [1], [0], [0], [0, 0, 1, 0], [], []>} : vector<1x1xf32>, vector<32x1xf32>, vector<1x32xf32> -> vector<1x32xf32>
    %cst_142 = arith.constant dense<0.000000e+00> : vector<32x32xf32>
    %396 = tpu.matmul %384, %384, %cst_142 {dimension_numbers = #tpu.dot_dimension_numbers<[1], [1], [0], [0], [0, 0, 1, 0], [], []>} : vector<32x2xf32>, vector<32x2xf32>, vector<32x32xf32> -> vector<32x32xf32>
    %397 = vector.broadcast %395 : vector<1x32xf32> to vector<32x32xf32>
    %398 = vector.broadcast %394 : vector<32x1xf32> to vector<32x32xf32>
    %399 = arith.cmpf ogt, %397, %398 : vector<32x32xf32>
    %400 = vector.broadcast %395 : vector<1x32xf32> to vector<32x32xf32>
    %401 = vector.broadcast %394 : vector<32x1xf32> to vector<32x32xf32>
    %402 = arith.cmpf oeq, %400, %401 : vector<32x32xf32>
    %403 = arith.cmpi slt, %5, %4 : vector<32x32xi32>
    %404 = arith.andi %402, %403 : vector<32x32xi1>
    %405 = arith.ori %399, %404 : vector<32x32xi1>
    %406 = arith.extui %405 : vector<32x32xi1> to vector<32x32xi32>
    %407 = arith.sitofp %406 : vector<32x32xi32> to vector<32x32xf32>
    %408 = arith.mulf %396, %407 : vector<32x32xf32>
    %cst_143 = arith.constant dense<0.000000e+00> : vector<32xf32>
    %409 = vector.multi_reduction <add>, %408, %cst_143 [1] : vector<32x32xf32> to vector<32xf32>
    %410 = vector.shape_cast %409 : vector<32xf32> to vector<32x1xf32>
    %cst_144 = arith.constant dense<0.000000e+00> : vector<2xf32>
    %411 = vector.multi_reduction <add>, %384, %cst_144 [0] : vector<32x2xf32> to vector<2xf32>
    %412 = vector.shape_cast %411 : vector<2xf32> to vector<1x2xf32>
    %cst_145 = arith.constant 8.000000e-01 : f32
    %413 = vector.broadcast %cst_145 : f32 to vector<1x2xf32>
    %414 = arith.mulf %413, %412 : vector<1x2xf32>
    %cst_146 = arith.constant 9.99999974E-5 : f32
    %415 = vector.broadcast %cst_146 : f32 to vector<1x2xf32>
    %416 = arith.subf %414, %415 : vector<1x2xf32>
    %417 = math.ceil %416 : vector<1x2xf32>
    %cst_147 = arith.constant dense<0.000000e+00> : vector<32x1xf32>
    %418 = tpu.matmul %384, %417, %cst_147 {dimension_numbers = #tpu.dot_dimension_numbers<[1], [1], [0], [0], [0, 0, 1, 0], [], []>} : vector<32x2xf32>, vector<1x2xf32>, vector<32x1xf32> -> vector<32x1xf32>
    %419 = arith.cmpf olt, %410, %418 : vector<32x1xf32>
    %cst_148 = arith.constant 0.000000e+00 : f32
    %420 = vector.broadcast %cst_148 : f32 to vector<32x1xf32>
    %421 = arith.cmpf ogt, %267, %420 : vector<32x1xf32>
    %422 = arith.andi %419, %421 : vector<32x1xi1>
    %cst_149 = arith.constant 1.000000e+00 : f32
    %cst_150 = arith.constant 0.000000e+00 : f32
    %423 = vector.broadcast %cst_149 : f32 to vector<32x1xf32>
    %424 = vector.broadcast %cst_150 : f32 to vector<32x1xf32>
    %425 = arith.select %422, %423, %424 : vector<32x1xi1>, vector<32x1xf32>
    %426 = math.tanh %394 : vector<32x1xf32>
    %427 = vector.broadcast %426 : vector<32x1xf32> to vector<32x128xf32>
    %428 = arith.mulf %381, %427 : vector<32x128xf32>
    %429 = vector.broadcast %425 : vector<32x1xf32> to vector<32x128xf32>
    %430 = arith.mulf %428, %429 : vector<32x128xf32>
    %cst_151 = arith.constant dense<0.000000e+00> : vector<1x32xf32>
    %431 = tpu.matmul %10, %425, %cst_151 {dimension_numbers = #tpu.dot_dimension_numbers<[1], [1], [0], [0], [0, 0, 1, 0], [], []>} : vector<1x1xf32>, vector<32x1xf32>, vector<1x32xf32> -> vector<1x32xf32>
    %432 = vector.broadcast %431 : vector<1x32xf32> to vector<2x32xf32>
    %433 = arith.mulf %3, %432 : vector<2x32xf32>
    %cst_152 = arith.constant dense<0.000000e+00> : vector<2xf32>
    %434 = vector.multi_reduction <add>, %433, %cst_152 [1] : vector<2x32xf32> to vector<2xf32>
    %435 = vector.shape_cast %434 : vector<2xf32> to vector<2x1xf32>
    %cst_153 = arith.constant dense<0.000000e+00> : vector<2x128xf32>
    %436 = tpu.matmul %433, %430, %cst_153 {dimension_numbers = #tpu.dot_dimension_numbers<[1], [0], [0], [1], [0, 0, 1, 1], [], []>} : vector<2x32xf32>, vector<32x128xf32>, vector<2x128xf32> -> vector<2x128xf32>
    %cst_154 = arith.constant 1.000000e+00 : f32
    %437 = vector.broadcast %cst_154 : f32 to vector<2x1xf32>
    %438 = arith.maximumf %435, %437 : vector<2x1xf32>
    %439 = vector.broadcast %438 : vector<2x1xf32> to vector<2x128xf32>
    %440 = arith.divf %436, %439 : vector<2x128xf32>
    %441 = vector.broadcast %425 : vector<32x1xf32> to vector<32x2xf32>
    %442 = arith.mulf %2, %441 : vector<32x2xf32>
    %443 = tpu.iota {dimensions = array<i32: 0>} : vector<2x128xi32>
    %cst_155 = arith.constant -1.000000e+30 : f32
    %444 = vector.broadcast %cst_155 : f32 to vector<2x128xf32>
    %c0_i32_156 = arith.constant 0 : i32
    %445 = vector.broadcast %c0_i32_156 : i32 to vector<32x2xi32>
    %446 = arith.cmpi eq, %9, %445 : vector<32x2xi32>
    %447 = arith.extui %446 : vector<32x2xi1> to vector<32x2xi32>
    %448 = arith.sitofp %447 : vector<32x2xi32> to vector<32x2xf32>
    %449 = arith.mulf %442, %448 : vector<32x2xf32>
    %cst_157 = arith.constant dense<0.000000e+00> : vector<32xf32>
    %450 = vector.multi_reduction <add>, %449, %cst_157 [1] : vector<32x2xf32> to vector<32xf32>
    %451 = vector.shape_cast %450 : vector<32xf32> to vector<32x1xf32>
    %cst_158 = arith.constant 0.000000e+00 : f32
    %452 = vector.broadcast %cst_158 : f32 to vector<32x1xf32>
    %453 = arith.cmpf ogt, %451, %452 : vector<32x1xf32>
    %cst_159 = arith.constant -1.000000e+30 : f32
    %454 = vector.shape_cast %453 : vector<32x1xi1> to vector<32x1xi1>
    %455 = vector.broadcast %454 : vector<32x1xi1> to vector<32x128xi1>
    %456 = vector.broadcast %cst_159 : f32 to vector<32x128xf32>
    %457 = arith.select %455, %430, %456 : vector<32x128xi1>, vector<32x128xf32>
    %cst_160 = arith.constant dense<0xFF800000> : vector<128xf32>
    %458 = vector.multi_reduction <maximumf>, %457, %cst_160 [0] : vector<32x128xf32> to vector<128xf32>
    %459 = vector.shape_cast %458 : vector<128xf32> to vector<1x128xf32>
    %c0_i32_161 = arith.constant 0 : i32
    %460 = vector.broadcast %c0_i32_161 : i32 to vector<2x128xi32>
    %461 = arith.cmpi eq, %443, %460 : vector<2x128xi32>
    %462 = vector.shape_cast %459 : vector<1x128xf32> to vector<1x128xf32>
    %463 = vector.broadcast %462 : vector<1x128xf32> to vector<2x128xf32>
    %464 = arith.select %461, %463, %444 : vector<2x128xi1>, vector<2x128xf32>
    %c1_i32_162 = arith.constant 1 : i32
    %465 = vector.broadcast %c1_i32_162 : i32 to vector<32x2xi32>
    %466 = arith.cmpi eq, %9, %465 : vector<32x2xi32>
    %467 = arith.extui %466 : vector<32x2xi1> to vector<32x2xi32>
    %468 = arith.sitofp %467 : vector<32x2xi32> to vector<32x2xf32>
    %469 = arith.mulf %442, %468 : vector<32x2xf32>
    %cst_163 = arith.constant dense<0.000000e+00> : vector<32xf32>
    %470 = vector.multi_reduction <add>, %469, %cst_163 [1] : vector<32x2xf32> to vector<32xf32>
    %471 = vector.shape_cast %470 : vector<32xf32> to vector<32x1xf32>
    %cst_164 = arith.constant 0.000000e+00 : f32
    %472 = vector.broadcast %cst_164 : f32 to vector<32x1xf32>
    %473 = arith.cmpf ogt, %471, %472 : vector<32x1xf32>
    %cst_165 = arith.constant -1.000000e+30 : f32
    %474 = vector.shape_cast %473 : vector<32x1xi1> to vector<32x1xi1>
    %475 = vector.broadcast %474 : vector<32x1xi1> to vector<32x128xi1>
    %476 = vector.broadcast %cst_165 : f32 to vector<32x128xf32>
    %477 = arith.select %475, %430, %476 : vector<32x128xi1>, vector<32x128xf32>
    %cst_166 = arith.constant dense<0xFF800000> : vector<128xf32>
    %478 = vector.multi_reduction <maximumf>, %477, %cst_166 [0] : vector<32x128xf32> to vector<128xf32>
    %479 = vector.shape_cast %478 : vector<128xf32> to vector<1x128xf32>
    %c1_i32_167 = arith.constant 1 : i32
    %480 = vector.broadcast %c1_i32_167 : i32 to vector<2x128xi32>
    %481 = arith.cmpi eq, %443, %480 : vector<2x128xi32>
    %482 = vector.shape_cast %479 : vector<1x128xf32> to vector<1x128xf32>
    %483 = vector.broadcast %482 : vector<1x128xf32> to vector<2x128xf32>
    %484 = arith.select %481, %483, %464 : vector<2x128xi1>, vector<2x128xf32>
    %485 = tpu.concatenate %484, %440 in 1 : vector<2x128xf32>, vector<2x128xf32> -> vector<2x256xf32>
    %486 = arith.addf %169, %327 : vector<2x256xf32>
    %487 = arith.addf %486, %485 : vector<2x256xf32>
    %c0_168 = arith.constant 0 : index
    %c0_169 = arith.constant 0 : index
    %488 = vector.load %arg19[%c0_168, %c0_169] : memref<256x128xf32, #tpu.memory_space<vmem>>, vector<256x128xf32>
    %cst_170 = arith.constant dense<0.000000e+00> : vector<2x128xf32>
    %489 = tpu.matmul %487, %488, %cst_170 {dimension_numbers = #tpu.dot_dimension_numbers<[1], [0], [0], [1], [0, 0, 1, 1], [], []>} : vector<2x256xf32>, vector<256x128xf32>, vector<2x128xf32> -> vector<2x128xf32>
    %c0_171 = arith.constant 0 : index
    %c0_172 = arith.constant 0 : index
    %490 = vector.load %arg20[%c0_171, %c0_172] : memref<1x128xf32, #tpu.memory_space<vmem>>, vector<1x128xf32>
    %491 = vector.broadcast %490 : vector<1x128xf32> to vector<2x128xf32>
    %492 = arith.addf %489, %491 : vector<2x128xf32>
    %cst_173 = arith.constant 0.000000e+00 : f32
    %493 = vector.broadcast %cst_173 : f32 to vector<2x128xf32>
    %494 = arith.maximumf %492, %493 : vector<2x128xf32>
    %c0_174 = arith.constant 0 : index
    %c0_175 = arith.constant 0 : index
    %495 = vector.load %arg21[%c0_174, %c0_175] : memref<128x64xf32, #tpu.memory_space<vmem>>, vector<128x64xf32>
    %cst_176 = arith.constant dense<0.000000e+00> : vector<2x64xf32>
    %496 = tpu.matmul %494, %495, %cst_176 {dimension_numbers = #tpu.dot_dimension_numbers<[1], [0], [0], [1], [0, 0, 1, 1], [], []>} : vector<2x128xf32>, vector<128x64xf32>, vector<2x64xf32> -> vector<2x64xf32>
    %c0_177 = arith.constant 0 : index
    %c0_178 = arith.constant 0 : index
    %497 = vector.load %arg22[%c0_177, %c0_178] : memref<1x64xf32, #tpu.memory_space<vmem>>, vector<1x64xf32>
    %498 = vector.broadcast %497 : vector<1x64xf32> to vector<2x64xf32>
    %499 = arith.addf %496, %498 : vector<2x64xf32>
    %cst_179 = arith.constant 0.000000e+00 : f32
    %500 = vector.broadcast %cst_179 : f32 to vector<2x64xf32>
    %501 = arith.maximumf %499, %500 : vector<2x64xf32>
    %c0_180 = arith.constant 0 : index
    %c0_181 = arith.constant 0 : index
    %502 = vector.load %arg23[%c0_180, %c0_181] : memref<64x6xf32, #tpu.memory_space<vmem>>, vector<64x6xf32>
    %cst_182 = arith.constant dense<0.000000e+00> : vector<2x6xf32>
    %503 = tpu.matmul %501, %502, %cst_182 {dimension_numbers = #tpu.dot_dimension_numbers<[1], [0], [0], [1], [0, 0, 1, 1], [], []>} : vector<2x64xf32>, vector<64x6xf32>, vector<2x6xf32> -> vector<2x6xf32>
    %c0_183 = arith.constant 0 : index
    %c0_184 = arith.constant 0 : index
    %504 = vector.load %arg24[%c0_183, %c0_184] : memref<1x6xf32, #tpu.memory_space<vmem>>, vector<1x6xf32>
    %505 = vector.broadcast %504 : vector<1x6xf32> to vector<2x6xf32>
    %506 = arith.addf %503, %505 : vector<2x6xf32>
    %cst_185 = arith.constant dense<0xFF800000> : vector<2xf32>
    %507 = vector.multi_reduction <maximumf>, %506, %cst_185 [1] : vector<2x6xf32> to vector<2xf32>
    %508 = vector.shape_cast %507 : vector<2xf32> to vector<2x1xf32>
    %509 = vector.broadcast %508 : vector<2x1xf32> to vector<2x6xf32>
    %510 = arith.subf %506, %509 : vector<2x6xf32>
    %511 = math.exp %510 : vector<2x6xf32>
    %cst_186 = arith.constant dense<0.000000e+00> : vector<2xf32>
    %512 = vector.multi_reduction <add>, %511, %cst_186 [1] : vector<2x6xf32> to vector<2xf32>
    %513 = vector.shape_cast %512 : vector<2xf32> to vector<2x1xf32>
    %514 = math.log %513 : vector<2x1xf32>
    %515 = vector.broadcast %514 : vector<2x1xf32> to vector<2x6xf32>
    %516 = arith.subf %510, %515 : vector<2x6xf32>
    %c0_187 = arith.constant 0 : index
    %c0_188 = arith.constant 0 : index
    %517 = vector.load %arg25[%c0_187, %c0_188] : memref<2x6xf32, #tpu.memory_space<vmem>>, vector<2x6xf32>
    tpu.vector_store %arg25[%c0_187, %c0_188], %516 {strides = array<i32>} : memref<2x6xf32, #tpu.memory_space<vmem>>, vector<2x6xf32>,
    return
  }
}

</mosaic_0001>

<llo_original>
// kernel: net_forward.1
$region0: #{net_forward.1}
  #allocation0 [shape = 'u32[]', space=smem, size = 0x4, offset = 0x4, fixed_abs, tag = 'smem constant byte address 0x4 - core index']
  #allocation1 [shape = 'u32[144,128]{1,0:T(1,128)}', space=vmem, size = 0x12000, scoped, tag = 'internal scratch']
  %s0 = inlined_call_operand.vmem [shape: f32[32,16], index: 0, kind: input, shape index: {}]
  %s1 = inlined_call_operand.hbm [shape: f32[32,32], index: 1, kind: input, shape index: {}]
  %s2 = inlined_call_operand.vmem [shape: f32[32,2], index: 2, kind: input, shape index: {}]
  %s3 = inlined_call_operand.vmem [shape: f32[2,32], index: 3, kind: input, shape index: {}]
  %s4 = inlined_call_operand.vmem [shape: f32[16,128], index: 4, kind: input, shape index: {}]
  %s5 = inlined_call_operand.hbm [shape: f32[1,128], index: 5, kind: input, shape index: {}]
  %s6 = inlined_call_operand.hbm [shape: f32[1,128], index: 6, kind: input, shape index: {}]
  %s7 = inlined_call_operand.hbm [shape: f32[1,128], index: 7, kind: input, shape index: {}]
  %s8 = inlined_call_operand.vmem [shape: f32[1,128], index: 8, kind: input, shape index: {}]
  %s9 = inlined_call_operand.vmem [shape: f32[128,128], index: 9, kind: input, shape index: {}]
  %s10 = inlined_call_operand.hbm [shape: f32[1,128], index: 10, kind: input, shape index: {}]
  %s11 = inlined_call_operand.hbm [shape: f32[1,128], index: 11, kind: input, shape index: {}]
  %s12 = inlined_call_operand.hbm [shape: f32[1,128], index: 12, kind: input, shape index: {}]
  %s13 = inlined_call_operand.vmem [shape: f32[1,128], index: 13, kind: input, shape index: {}]
  %s14 = inlined_call_operand.hbm [shape: f32[128,128], index: 14, kind: input, shape index: {}]
  %s15 = inlined_call_operand.hbm [shape: f32[1,128], index: 15, kind: input, shape index: {}]
  %s16 = inlined_call_operand.hbm [shape: f32[1,128], index: 16, kind: input, shape index: {}]
  %s17 = inlined_call_operand.hbm [shape: f32[1,128], index: 17, kind: input, shape index: {}]
  %s18 = inlined_call_operand.vmem [shape: f32[1,128], index: 18, kind: input, shape index: {}]
  %s19 = inlined_call_operand.vmem [shape: f32[256,128], index: 19, kind: input, shape index: {}]
  %s20 = inlined_call_operand.hbm [shape: f32[1,128], index: 20, kind: input, shape index: {}]
  %s21 = inlined_call_operand.vmem [shape: f32[128,64], index: 21, kind: input, shape index: {}]
  %s22 = inlined_call_operand.vmem [shape: f32[1,64], index: 22, kind: input, shape index: {}]
  %s23 = inlined_call_operand.vmem [shape: f32[64,6], index: 23, kind: input, shape index: {}]
  %s24 = inlined_call_operand.vmem [shape: f32[1,6], index: 24, kind: input, shape index: {}]
  %s25 = inlined_call_operand.hbm [shape: f32[2,6], index: 25, kind: output, shape index: {}]
  %s26 = sld [smem:[#allocation0]]
  $region158: #{net_forward.1} parent=0
    _
  %s28 = ssub.s32 1, %s26
  %s29 = scalar_select 0, %s28, %s26
  $region1: #{net_forward.1} parent=0
    #allocation2 [shape = 'u8[16384]{0}', space=vmem, size = 0x4000, scoped, tag = 'input window, operand 1, single buffered']
    #allocation3 [shape = 's32[1]{0}', space=sflag, size = 0x4, scoped, tag = 'scoped memory for net_forward.1']
    #allocation4 [shape = 's32[1]{0}', space=sflag, size = 0x4, scoped, tag = 'scoped memory for net_forward.1']
    #allocation5 [shape = 'u8[512]{0}', space=vmem, size = 0x400, scoped, tag = 'input window, operand 5, single buffered']
    #allocation6 [shape = 's32[1]{0}', space=sflag, size = 0x4, scoped, tag = 'scoped memory for net_forward.1']
    #allocation7 [shape = 'u8[512]{0}', space=vmem, size = 0x400, scoped, tag = 'input window, operand 6, single buffered']
    #allocation8 [shape = 'u8[512]{0}', space=vmem, size = 0x400, scoped, tag = 'input window, operand 7, single buffered']
    #allocation9 [shape = 's32[1]{0}', space=sflag, size = 0x4, scoped, tag = 'scoped memory for net_forward.1']
    #allocation10 [shape = 'u8[512]{0}', space=vmem, size = 0x400, scoped, tag = 'input window, operand 10, single buffered']
    #allocation11 [shape = 'u8[512]{0}', space=vmem, size = 0x400, scoped, tag = 'input window, operand 11, single buffered']
    #allocation12 [shape = 's32[1]{0}', space=sflag, size = 0x4, scoped, tag = 'scoped memory for net_forward.1']
    #allocation13 [shape = 'u8[512]{0}', space=vmem, size = 0x400, scoped, tag = 'input window, operand 12, single buffered']
    #allocation14 [shape = 'u8[65536]{0}', space=vmem, size = 0x10000, scoped, tag = 'input window, operand 14, single buffered']
    #allocation15 [shape = 's32[1]{0}', space=sflag, size = 0x4, scoped, tag = 'scoped memory for net_forward.1']
    #allocation16 [shape = 'u8[512]{0}', space=vmem, size = 0x400, scoped, tag = 'input window, operand 15, single buffered']
    #allocation17 [shape = 'u8[512]{0}', space=vmem, size = 0x400, scoped, tag = 'input window, operand 16, single buffered']
    #allocation18 [shape = 's32[1]{0}', space=sflag, size = 0x4, scoped, tag = 'scoped memory for net_forward.1']
    #allocation19 [shape = 'u8[512]{0}', space=vmem, size = 0x400, scoped, tag = 'input window, operand 17, single buffered']
    #allocation20 [shape = 'u8[512]{0}', space=vmem, size = 0x400, scoped, tag = 'input window, operand 20, single buffered']
    #allocation21 [shape = 's32[1]{0}', space=sflag, size = 0x4, scoped, tag = 'scoped memory for net_forward.1']
    #allocation22 [shape = 'u8[1024]{0}', space=vmem, size = 0x400, scoped, tag = 'output window, operand 0, single buffered']
    %30 = vsyncpa [#allocation3], 0
    %31 = vsyncpa [#allocation6], 0
    %32 = vsyncpa [#allocation9], 0
    %33 = vsyncpa [#allocation12], 0
    %34 = vsyncpa [#allocation15], 0
    %35 = vsyncpa [#allocation18], 0
    %36 = vsyncpa [#allocation21], 0
    %37 = vsyncpa [#allocation4], 0
    // Predicated region
    $region2: #{net_forward.1} parent=1 // pred_check
      _
    $region3: #{net_forward.1} parent=1 // pred_check_branch
      %39 = sbr.rel (0) target = $region5
    $region4: #{net_forward.1} parent=1 // pred_region
      _
    $region5: #{net_forward.1} parent=1 // pred_fallthru
      _
    // Predicated region
    $region6: #{net_forward.1} parent=1 // pred_check
      _
    $region7: #{net_forward.1} parent=1 // pred_check_branch
      %41 = sbr.rel (0) target = $region9
    $region8: #{net_forward.1} parent=1 // pred_region
      %s43 = ssub.s32 512, 512
      %44 = vsyncadd [#allocation3], %s43
      %s45 = sshll.u32 [#allocation2], 4
      %s46 = int_to_ptr.vmem [resolvable:$true] %s45
      %51 = dma.hbm_to_vmem [thread:$0]  %s1, 512, %s46, [#allocation3], 128, 128, 8
    $region9: #{net_forward.1} parent=1 // pred_fallthru
      _
    // Predicated region
    $region10: #{net_forward.1} parent=1 // pred_check
      _
    $region11: #{net_forward.1} parent=1 // pred_check_branch
      %53 = sbr.rel (0) target = $region13
    $region12: #{net_forward.1} parent=1 // pred_region
      _
    $region13: #{net_forward.1} parent=1 // pred_fallthru
      _
    // Predicated region
    $region14: #{net_forward.1} parent=1 // pred_check
      _
    $region15: #{net_forward.1} parent=1 // pred_check_branch
      %55 = sbr.rel (0) target = $region17
    $region16: #{net_forward.1} parent=1 // pred_region
      _
    $region17: #{net_forward.1} parent=1 // pred_fallthru
      _
    // Predicated region
    $region18: #{net_forward.1} parent=1 // pred_check
      _
    $region19: #{net_forward.1} parent=1 // pred_check_branch
      %57 = sbr.rel (0) target = $region21
    $region20: #{net_forward.1} parent=1 // pred_region
      _
    $region21: #{net_forward.1} parent=1 // pred_fallthru
      _
    // Predicated region
    $region22: #{net_forward.1} parent=1 // pred_check
      _
    $region23: #{net_forward.1} parent=1 // pred_check_branch
      %59 = sbr.rel (0) target = $region25
    $region24: #{net_forward.1} parent=1 // pred_region
      %s61 = ssub.s32 16, 16
      %62 = vsyncadd [#allocation6], %s61
      %s64 = sshll.u32 [#allocation5], 4
      %s65 = int_to_ptr.vmem [resolvable:$true] %s64
      %67 = dma.hbm_to_vmem [thread:$0]  %s5, 16, %s65, [#allocation6]
    $region25: #{net_forward.1} parent=1 // pred_fallthru
      _
    // Predicated region
    $region26: #{net_forward.1} parent=1 // pred_check
      _
    $region27: #{net_forward.1} parent=1 // pred_check_branch
      %69 = sbr.rel (0) target = $region29
    $region28: #{net_forward.1} parent=1 // pred_region
      %s71 = ssub.s32 16, 16
      %72 = vsyncadd [#allocation6], %s71
      %s74 = sshll.u32 [#allocation7], 4
      %s75 = int_to_ptr.vmem [resolvable:$true] %s74
      %77 = dma.hbm_to_vmem [thread:$0]  %s6, 16, %s75, [#allocation6]
    $region29: #{net_forward.1} parent=1 // pred_fallthru
      _
    // Predicated region
    $region30: #{net_forward.1} parent=1 // pred_check
      _
    $region31: #{net_forward.1} parent=1 // pred_check_branch
      %79 = sbr.rel (0) target = $region33
    $region32: #{net_forward.1} parent=1 // pred_region
      %s81 = ssub.s32 16, 16
      %82 = vsyncadd [#allocation9], %s81
      %s84 = sshll.u32 [#allocation8], 4
      %s85 = int_to_ptr.vmem [resolvable:$true] %s84
      %87 = dma.hbm_to_vmem [thread:$0]  %s7, 16, %s85, [#allocation9]
    $region33: #{net_forward.1} parent=1 // pred_fallthru
      _
    // Predicated region
    $region34: #{net_forward.1} parent=1 // pred_check
      _
    $region35: #{net_forward.1} parent=1 // pred_check_branch
      %89 = sbr.rel (0) target = $region37
    $region36: #{net_forward.1} parent=1 // pred_region
      _
    $region37: #{net_forward.1} parent=1 // pred_fallthru
      _
    // Predicated region
    $region38: #{net_forward.1} parent=1 // pred_check
      _
    $region39: #{net_forward.1} parent=1 // pred_check_branch
      %91 = sbr.rel (0) target = $region41
    $region40: #{net_forward.1} parent=1 // pred_region
      _
    $region41: #{net_forward.1} parent=1 // pred_fallthru
      _
    // Predicated region
    $region42: #{net_forward.1} parent=1 // pred_check
      _
    $region43: #{net_forward.1} parent=1 // pred_check_branch
      %93 = sbr.rel (0) target = $region45
    $region44: #{net_forward.1} parent=1 // pred_region
      %s95 = ssub.s32 16, 16
      %96 = vsyncadd [#allocation9], %s95
      %s98 = sshll.u32 [#allocation10], 4
      %s99 = int_to_ptr.vmem [resolvable:$true] %s98
      %101 = dma.hbm_to_vmem [thread:$0]  %s10, 16, %s99, [#allocation9]
    $region45: #{net_forward.1} parent=1 // pred_fallthru
      _
    // Predicated region
    $region46: #{net_forward.1} parent=1 // pred_check
      _
    $region47: #{net_forward.1} parent=1 // pred_check_branch
      %103 = sbr.rel (0) target = $region49
    $region48: #{net_forward.1} parent=1 // pred_region
      %s105 = ssub.s32 16, 16
      %106 = vsyncadd [#allocation12], %s105
      %s108 = sshll.u32 [#allocation11], 4
      %s109 = int_to_ptr.vmem [resolvable:$true] %s108
      %111 = dma.hbm_to_vmem [thread:$0]  %s11, 16, %s109, [#allocation12]
    $region49: #{net_forward.1} parent=1 // pred_fallthru
      _
    // Predicated region
    $region50: #{net_forward.1} parent=1 // pred_check
      _
    $region51: #{net_forward.1} parent=1 // pred_check_branch
      %113 = sbr.rel (0) target = $region53
    $region52: #{net_forward.1} parent=1 // pred_region
      %s115 = ssub.s32 16, 16
      %116 = vsyncadd [#allocation12], %s115
      %s118 = sshll.u32 [#allocation13], 4
      %s119 = int_to_ptr.vmem [resolvable:$true] %s118
      %121 = dma.hbm_to_vmem [thread:$0]  %s12, 16, %s119, [#allocation12]
    $region53: #{net_forward.1} parent=1 // pred_fallthru
      _
    // Predicated region
    $region54: #{net_forward.1} parent=1 // pred_check
      _
    $region55: #{net_forward.1} parent=1 // pred_check_branch
      %123 = sbr.rel (0) target = $region57
    $region56: #{net_forward.1} parent=1 // pred_region
      _
    $region57: #{net_forward.1} parent=1 // pred_fallthru
      _
    // Predicated region
    $region58: #{net_forward.1} parent=1 // pred_check
      _
    $region59: #{net_forward.1} parent=1 // pred_check_branch
      %125 = sbr.rel (0) target = $region61
    $region60: #{net_forward.1} parent=1 // pred_region
      %s127 = ssub.s32 2048, 2048
      %128 = vsyncadd [#allocation15], %s127
      %s129 = sshll.u32 [#allocation14], 4
      %s130 = int_to_ptr.vmem [resolvable:$true] %s129
      %135 = dma.hbm_to_vmem [thread:$0]  %s14, 2048, %s130, [#allocation15], 128, 128, 8
    $region61: #{net_forward.1} parent=1 // pred_fallthru
      _
    // Predicated region
    $region62: #{net_forward.1} parent=1 // pred_check
      _
    $region63: #{net_forward.1} parent=1 // pred_check_branch
      %137 = sbr.rel (0) target = $region65
    $region64: #{net_forward.1} parent=1 // pred_region
      %s139 = ssub.s32 16, 16
      %140 = vsyncadd [#allocation15], %s139
      %s142 = sshll.u32 [#allocation16], 4
      %s143 = int_to_ptr.vmem [resolvable:$true] %s142
      %145 = dma.hbm_to_vmem [thread:$0]  %s15, 16, %s143, [#allocation15]
    $region65: #{net_forward.1} parent=1 // pred_fallthru
      _
    // Predicated region
    $region66: #{net_forward.1} parent=1 // pred_check
      _
    $region67: #{net_forward.1} parent=1 // pred_check_branch
      %147 = sbr.rel (0) target = $region69
    $region68: #{net_forward.1} parent=1 // pred_region
      %s149 = ssub.s32 16, 16
      %150 = vsyncadd [#allocation18], %s149
      %s152 = sshll.u32 [#allocation17], 4
      %s153 = int_to_ptr.vmem [resolvable:$true] %s152
      %155 = dma.hbm_to_vmem [thread:$0]  %s16, 16, %s153, [#allocation18]
    $region69: #{net_forward.1} parent=1 // pred_fallthru
      _
    // Predicated region
    $region70: #{net_forward.1} parent=1 // pred_check
      _
    $region71: #{net_forward.1} parent=1 // pred_check_branch
      %157 = sbr.rel (0) target = $region73
    $region72: #{net_forward.1} parent=1 // pred_region
      %s159 = ssub.s32 16, 16
      %160 = vsyncadd [#allocation18], %s159
      %s162 = sshll.u32 [#allocation19], 4
      %s163 = int_to_ptr.vmem [resolvable:$true] %s162
      %165 = dma.hbm_to_vmem [thread:$0]  %s17, 16, %s163, [#allocation18]
    $region73: #{net_forward.1} parent=1 // pred_fallthru
      _
    // Predicated region
    $region74: #{net_forward.1} parent=1 // pred_check
      _
    $region75: #{net_forward.1} parent=1 // pred_check_branch
      %167 = sbr.rel (0) target = $region77
    $region76: #{net_forward.1} parent=1 // pred_region
      _
    $region77: #{net_forward.1} parent=1 // pred_fallthru
      _
    // Predicated region
    $region78: #{net_forward.1} parent=1 // pred_check
      _
    $region79: #{net_forward.1} parent=1 // pred_check_branch
      %169 = sbr.rel (0) target = $region81
    $region80: #{net_forward.1} parent=1 // pred_region
      _
    $region81: #{net_forward.1} parent=1 // pred_fallthru
      _
    // Predicated region
    $region82: #{net_forward.1} parent=1 // pred_check
      _
    $region83: #{net_forward.1} parent=1 // pred_check_branch
      %171 = sbr.rel (0) target = $region85
    $region84: #{net_forward.1} parent=1 // pred_region
      %s173 = ssub.s32 16, 16
      %174 = vsyncadd [#allocation21], %s173
      %s176 = sshll.u32 [#allocation20], 4
      %s177 = int_to_ptr.vmem [resolvable:$true] %s176
      %179 = dma.hbm_to_vmem [thread:$0]  %s20, 16, %s177, [#allocation21]
    $region85: #{net_forward.1} parent=1 // pred_fallthru
      _
    // Predicated region
    $region86: #{net_forward.1} parent=1 // pred_check
      _
    $region87: #{net_forward.1} parent=1 // pred_check_branch
      %181 = sbr.rel (0) target = $region89
    $region88: #{net_forward.1} parent=1 // pred_region
      _
    $region89: #{net_forward.1} parent=1 // pred_fallthru
      _
    // Predicated region
    $region90: #{net_forward.1} parent=1 // pred_check
      _
    $region91: #{net_forward.1} parent=1 // pred_check_branch
      %183 = sbr.rel (0) target = $region93
    $region92: #{net_forward.1} parent=1 // pred_region
      _
    $region93: #{net_forward.1} parent=1 // pred_fallthru
      _
    // Predicated region
    $region94: #{net_forward.1} parent=1 // pred_check
      _
    $region95: #{net_forward.1} parent=1 // pred_check_branch
      %185 = sbr.rel (0) target = $region97
    $region96: #{net_forward.1} parent=1 // pred_region
      _
    $region97: #{net_forward.1} parent=1 // pred_fallthru
      _
    // Predicated region
    $region98: #{net_forward.1} parent=1 // pred_check
      _
    $region99: #{net_forward.1} parent=1 // pred_check_branch
      %187 = sbr.rel (0) target = $region101
    $region100: #{net_forward.1} parent=1 // pred_region
      _
    $region101: #{net_forward.1} parent=1 // pred_fallthru
      _
    // Predicated region
    $region102: #{net_forward.1} parent=1 // pred_check
      _
    $region103: #{net_forward.1} parent=1 // pred_check_branch
      %189 = sbr.rel (0) target = $region105
    $region104: #{net_forward.1} parent=1 // pred_region
      %190 = dma.done [#allocation3], 512
    $region105: #{net_forward.1} parent=1 // pred_fallthru
      _
    // Predicated region
    $region106: #{net_forward.1} parent=1 // pred_check
      _
    $region107: #{net_forward.1} parent=1 // pred_check_branch
      %192 = sbr.rel (0) target = $region109
    $region108: #{net_forward.1} parent=1 // pred_region
      %193 = dma.done [#allocation6], 16
    $region109: #{net_forward.1} parent=1 // pred_fallthru
      _
    // Predicated region
    $region110: #{net_forward.1} parent=1 // pred_check
      _
    $region111: #{net_forward.1} parent=1 // pred_check_branch
      %195 = sbr.rel (0) target = $region113
    $region112: #{net_forward.1} parent=1 // pred_region
      %196 = dma.done [#allocation6], 16
    $region113: #{net_forward.1} parent=1 // pred_fallthru
      _
    // Predicated region
    $region114: #{net_forward.1} parent=1 // pred_check
      _
    $region115: #{net_forward.1} parent=1 // pred_check_branch
      %198 = sbr.rel (0) target = $region117
    $region116: #{net_forward.1} parent=1 // pred_region
      %199 = dma.done [#allocation9], 16
    $region117: #{net_forward.1} parent=1 // pred_fallthru
      _
    // Predicated region
    $region118: #{net_forward.1} parent=1 // pred_check
      _
    $region119: #{net_forward.1} parent=1 // pred_check_branch
      %201 = sbr.rel (0) target = $region121
    $region120: #{net_forward.1} parent=1 // pred_region
      %202 = dma.done [#allocation9], 16
    $region121: #{net_forward.1} parent=1 // pred_fallthru
      _
    // Predicated region
    $region122: #{net_forward.1} parent=1 // pred_check
      _
    $region123: #{net_forward.1} parent=1 // pred_check_branch
      %204 = sbr.rel (0) target = $region125
    $region124: #{net_forward.1} parent=1 // pred_region
      %205 = dma.done [#allocation12], 16
    $region125: #{net_forward.1} parent=1 // pred_fallthru
      _
    // Predicated region
    $region126: #{net_forward.1} parent=1 // pred_check
      _
    $region127: #{net_forward.1} parent=1 // pred_check_branch
      %207 = sbr.rel (0) target = $region129
    $region128: #{net_forward.1} parent=1 // pred_region
      %208 = dma.done [#allocation12], 16
    $region129: #{net_forward.1} parent=1 // pred_fallthru
      _
    // Predicated region
    $region130: #{net_forward.1} parent=1 // pred_check
      _
    $region131: #{net_forward.1} parent=1 // pred_check_branch
      %210 = sbr.rel (0) target = $region133
    $region132: #{net_forward.1} parent=1 // pred_region
      %211 = dma.done [#allocation15], 2048
    $region133: #{net_forward.1} parent=1 // pred_fallthru
      _
    // Predicated region
    $region134: #{net_forward.1} parent=1 // pred_check
      _
    $region135: #{net_forward.1} parent=1 // pred_check_branch
      %213 = sbr.rel (0) target = $region137
    $region136: #{net_forward.1} parent=1 // pred_region
      %214 = dma.done [#allocation15], 16
    $region137: #{net_forward.1} parent=1 // pred_fallthru
      _
    // Predicated region
    $region138: #{net_forward.1} parent=1 // pred_check
      _
    $region139: #{net_forward.1} parent=1 // pred_check_branch
      %216 = sbr.rel (0) target = $region141
    $region140: #{net_forward.1} parent=1 // pred_region
      %217 = dma.done [#allocation18], 16
    $region141: #{net_forward.1} parent=1 // pred_fallthru
      _
    // Predicated region
    $region142: #{net_forward.1} parent=1 // pred_check
      _
    $region143: #{net_forward.1} parent=1 // pred_check_branch
      %219 = sbr.rel (0) target = $region145
    $region144: #{net_forward.1} parent=1 // pred_region
      %220 = dma.done [#allocation18], 16
    $region145: #{net_forward.1} parent=1 // pred_fallthru
      _
    // Predicated region
    $region146: #{net_forward.1} parent=1 // pred_check
      _
    $region147: #{net_forward.1} parent=1 // pred_check_branch
      %222 = sbr.rel (0) target = $region149
    $region148: #{net_forward.1} parent=1 // pred_region
      %223 = dma.done [#allocation21], 16
    $region149: #{net_forward.1} parent=1 // pred_fallthru
      _
    %v224 = vld [vmem:[%s0] sm:$0xff]
    %v225 = vld [vmem:[%s0 + $0x8] sm:$0xff]
    %v226 = vld [vmem:[%s0 + $0x10] sm:$0xff]
    %v227 = vld [vmem:[%s0 + $0x18] sm:$0xff]
    %v228 = vld [vmem:[#allocation2] sm:$0xff]
    %v229 = vld [vmem:[#allocation2 + $0x8] sm:$0xff]
    %v230 = vld [vmem:[#allocation2 + $0x10] sm:$0xff]
    %v231 = vld [vmem:[#allocation2 + $0x18] sm:$0xff]
    %v232 = vld [vmem:[%s2] sm:$0xff]
    %v233 = vld [vmem:[%s2 + $0x8] sm:$0xff]
    %v234 = vld [vmem:[%s2 + $0x10] sm:$0xff]
    %v235 = vld [vmem:[%s2 + $0x18] sm:$0xff]
    %v236 = vld [vmem:[%s3] sm:$0x3]
    %v237 = vlaneseq
    %v238 = vshrl.u32 %v237, 7
    %v239 = vadd.s32 %v238, 8
    %v240 = vadd.s32 %v238, 16
    %v241 = vadd.s32 %v238, 24
    %v242 = vlaneseq
    %v243 = vand.u32 %v242, 127
    %vm244 = vcmp.eq.s32.totalorder %v238, %v243
    %vm245 = vcmp.eq.s32.totalorder %v239, %v243
    %vm246 = vcmp.eq.s32.totalorder %v240, %v243
    %vm247 = vcmp.eq.s32.totalorder %v241, %v243
    %v248 = vsel %vm244, 1, 0
    %v249 = vsel %vm245, 1, 0
    %v250 = vsel %vm246, 1, 0
    %v251 = vsel %vm247, 1, 0
    %v252 = vcvt.s32.f32 %v248
    %v253 = vcvt.s32.f32 %v249
    %v254 = vcvt.s32.f32 %v250
    %v255 = vcvt.s32.f32 %v251
    %v256 = vld [vmem:[%s4] sm:$0xff]
    %v257 = vld [vmem:[%s4 + $0x8] sm:$0xff]
    %v258 = vld [vmem:[#allocation5] sm:$0x1]
    %v259 = vld [vmem:[#allocation7] sm:$0x1]
    %v260 = vld [vmem:[#allocation8] sm:$0x1]
    %vm261 = vcmask 130048
    %v263 = vsel %vm261, %v224, 0
    %v266 = vsel %vm261, %v225, 0
    %v269 = vsel %vm261, %v226, 0
    %v272 = vsel %vm261, %v227, 0
    %274 = vmatprep.subr.mxu0 0.0
    %275 = vmatpush1.msra.mxu0 %v256
    %276 = vmatprep.subr.mxu0 0.0
    %277 = vmatpush1.msra.mxu0 %v257
    %278 = vmatprep.subr.mxu0 0.0
    %279 = vmatpush1.msra.mxu0 0.0
    %280 = vmatprep.subr.mxu0 0.0
    %281 = vmatpush1.msra.mxu0 0.0
    %282 = vmatprep.subr.mxu0 0.0
    %283 = vmatpush1.msra.mxu0 0.0
    %284 = vmatprep.subr.mxu0 0.0
    %285 = vmatpush1.msra.mxu0 0.0
    %286 = vmatprep.subr.mxu0 0.0
    %287 = vmatpush1.msra.mxu0 0.0
    %288 = vmatprep.subr.mxu0 0.0
    %289 = vmatpush1.msra.mxu0 0.0
    %290 = vmatprep.subr.mxu0 0.0
    %291 = vmatpush1.msra.mxu0 0.0
    %292 = vmatprep.subr.mxu0 0.0
    %293 = vmatpush1.msra.mxu0 0.0
    %294 = vmatprep.subr.mxu0 0.0
    %295 = vmatpush1.msra.mxu0 0.0
    %296 = vmatprep.subr.mxu0 0.0
    %297 = vmatpush1.msra.mxu0 0.0
    %298 = vmatprep.subr.mxu0 0.0
    %299 = vmatpush1.msra.mxu0 0.0
    %300 = vmatprep.subr.mxu0 0.0
    %301 = vmatpush1.msra.mxu0 0.0
    %302 = vmatprep.subr.mxu0 0.0
    %303 = vmatpush1.msra.mxu0 0.0
    %304 = vmatprep.subr.mxu0 0.0
    %305 = vmatpush1.msra.mxu0 0.0
    %306 = vmatprep.subr.mxu0 0.0
    %307 = vmatpush1.msra.mxu0 0.0
    %308 = vmatprep.subr.mxu0 0.0
    %309 = vmatpush1.msra.mxu0 0.0
    %310 = vmatprep.subr.mxu0 0.0
    %311 = vmatpush1.msra.mxu0 0.0
    %312 = vmatprep.subr.mxu0 0.0
    %313 = vmatpush1.msra.mxu0 0.0
    %314 = vmatprep.subr.mxu0 0.0
    %315 = vmatpush1.msra.mxu0 0.0
    %316 = vmatprep.subr.mxu0 0.0
    %317 = vmatpush1.msra.mxu0 0.0
    %318 = vmatprep.subr.mxu0 0.0
    %319 = vmatpush1.msra.mxu0 0.0
    %320 = vmatprep.subr.mxu0 0.0
    %321 = vmatpush1.msra.mxu0 0.0
    %322 = vmatprep.subr.mxu0 0.0
    %323 = vmatpush1.msra.mxu0 0.0
    %324 = vmatprep.subr.mxu0 0.0
    %325 = vmatpush1.msra.mxu0 0.0
    %326 = vmatprep.subr.mxu0 0.0
    %327 = vmatpush1.msra.mxu0 0.0
    %328 = vmatprep.subr.mxu0 0.0
    %329 = vmatpush1.msra.mxu0 0.0
    %330 = vmatprep.subr.mxu0 0.0
    %331 = vmatpush1.msra.mxu0 0.0
    %332 = vmatprep.subr.mxu0 0.0
    %333 = vmatpush1.msra.mxu0 0.0
    %334 = vmatprep.subr.mxu0 0.0
    %335 = vmatpush1.msra.mxu0 0.0
    %336 = vmatprep.subr.mxu0 0.0
    %337 = vmatpush1.msra.mxu0 0.0
    %338 = vmatprep.mubr.f32.mxu0 0.0
    %339 = vmatmul.mubr.f32.gmra.mrb[0].mxu0 %v263
    %v340 = vpop.f32.mrb[0].mxu0
    %v341 = vadd.f32 0.0, %v340
    %v342 = vpop.f32.mrb[0].mxu0
    %343 = vmatprep.mubr.f32.mxu0 0.0
    %344 = vmatmul.mubr.f32.gmra.mrb[0].mxu0 %v266
    %v345 = vpop.f32.mrb[0].mxu0
    %v346 = vadd.f32 0.0, %v345
    %v347 = vpop.f32.mrb[0].mxu0
    %348 = vmatprep.mubr.f32.mxu0 0.0
    %349 = vmatmul.mubr.f32.gmra.mrb[0].mxu0 %v269
    %v350 = vpop.f32.mrb[0].mxu0
    %v351 = vadd.f32 0.0, %v350
    %v352 = vpop.f32.mrb[0].mxu0
    %353 = vmatprep.mubr.f32.mxu0 0.0
    %354 = vmatmul.mubr.f32.gmra.mrb[0].mxu0 %v272
    %v355 = vpop.f32.mrb[0].mxu0
    %v356 = vadd.f32 0.0, %v355
    %v357 = vpop.f32.mrb[0].mxu0
    %358 = vdwg.mxu0
    %v360 = vlaneseq
    %v361 = vshrl.u32 %v360, 7
    %v362 = vsub.s32 0, %v361
    %v363 = vrot.slane %v259, %v362
    %v365 = vmul.f32 %v341, %v363
    %v366 = vmul.f32 %v346, %v363
    %v367 = vmul.f32 %v351, %v363
    %v368 = vmul.f32 %v356, %v363
    %369 = vadd.xlane.f32.xlu0 %v365
    %v370 = vpop.xlane.xlu0 %369
    %371 = vadd.xlane.f32.xlu0 %v366
    %v372 = vpop.xlane.xlu0 %371
    %373 = vadd.xlane.f32.xlu0 %v367
    %v374 = vpop.xlane.xlu0 %373
    %375 = vadd.xlane.f32.xlu0 %v368
    %v376 = vpop.xlane.xlu0 %375
    %v378 = vlaneseq
    %v379 = vshrl.u32 %v378, 7
    %v380 = vsub.s32 0, %v379
    %v381 = vrot.slane %v258, %v380
    %v383 = vmul.f32 %v341, %v381
    %v384 = vmul.f32 %v346, %v381
    %v385 = vmul.f32 %v351, %v381
    %v386 = vmul.f32 %v356, %v381
    %387 = vadd.xlane.f32.xlu0 %v383
    %v388 = vpop.xlane.xlu0 %387
    %389 = vadd.xlane.f32.xlu0 %v384
    %v390 = vpop.xlane.xlu0 %389
    %391 = vadd.xlane.f32.xlu0 %v385
    %v392 = vpop.xlane.xlu0 %391
    %393 = vadd.xlane.f32.xlu0 %v386
    %v394 = vpop.xlane.xlu0 %393
    %vm395 = vcmask 7168
    %v397 = vsel %vm395, 1.0, 0
    %v400 = vsel %vm395, %v388, 0
    %v403 = vsel %vm395, %v390, 0
    %v406 = vsel %vm395, %v392, 0
    %v409 = vsel %vm395, %v394, 0
    %411 = vmatprep.subr.mxu0 0.0
    %412 = vmatpush1.xpose.msra.mxu0 %v400
    %413 = vmatprep.subr.mxu0 0.0
    %414 = vmatpush1.xpose.msra.mxu0 %v403
    %415 = vmatprep.subr.mxu0 0.0
    %416 = vmatpush1.xpose.msra.mxu0 %v406
    %417 = vmatprep.subr.mxu0 0.0
    %418 = vmatpush1.xpose.msra.mxu0 %v409
    %419 = vmatprep.subr.mxu0 0.0
    %420 = vmatpush1.xpose.msra.mxu0 0.0
    %421 = vmatprep.subr.mxu0 0.0
    %422 = vmatpush1.xpose.msra.mxu0 0.0
    %423 = vmatprep.subr.mxu0 0.0
    %424 = vmatpush1.xpose.msra.mxu0 0.0
    %425 = vmatprep.subr.mxu0 0.0
    %426 = vmatpush1.xpose.msra.mxu0 0.0
    %427 = vmatprep.subr.mxu0 0.0
    %428 = vmatpush1.xpose.msra.mxu0 0.0
    %429 = vmatprep.subr.mxu0 0.0
    %430 = vmatpush1.xpose.msra.mxu0 0.0
    %431 = vmatprep.subr.mxu0 0.0
    %432 = vmatpush1.xpose.msra.mxu0 0.0
    %433 = vmatprep.subr.mxu0 0.0
    %434 = vmatpush1.xpose.msra.mxu0 0.0
    %435 = vmatprep.subr.mxu0 0.0
    %436 = vmatpush1.xpose.msra.mxu0 0.0
    %437 = vmatprep.subr.mxu0 0.0
    %438 = vmatpush1.xpose.msra.mxu0 0.0
    %439 = vmatprep.subr.mxu0 0.0
    %440 = vmatpush1.xpose.msra.mxu0 0.0
    %441 = vmatprep.subr.mxu0 0.0
    %442 = vmatpush1.xpose.msra.mxu0 0.0
    %443 = vmatprep.subr.mxu0 0.0
    %444 = vmatpush1.xpose.msra.mxu0 0.0
    %445 = vmatprep.subr.mxu0 0.0
    %446 = vmatpush1.xpose.msra.mxu0 0.0
    %447 = vmatprep.subr.mxu0 0.0
    %448 = vmatpush1.xpose.msra.mxu0 0.0
    %449 = vmatprep.subr.mxu0 0.0
    %450 = vmatpush1.xpose.msra.mxu0 0.0
    %451 = vmatprep.subr.mxu0 0.0
    %452 = vmatpush1.xpose.msra.mxu0 0.0
    %453 = vmatprep.subr.mxu0 0.0
    %454 = vmatpush1.xpose.msra.mxu0 0.0
    %455 = vmatprep.subr.mxu0 0.0
    %456 = vmatpush1.xpose.msra.mxu0 0.0
    %457 = vmatprep.subr.mxu0 0.0
    %458 = vmatpush1.xpose.msra.mxu0 0.0
    %459 = vmatprep.subr.mxu0 0.0
    %460 = vmatpush1.xpose.msra.mxu0 0.0
    %461 = vmatprep.subr.mxu0 0.0
    %462 = vmatpush1.xpose.msra.mxu0 0.0
    %463 = vmatprep.subr.mxu0 0.0
    %464 = vmatpush1.xpose.msra.mxu0 0.0
    %465 = vmatprep.subr.mxu0 0.0
    %466 = vmatpush1.xpose.msra.mxu0 0.0
    %467 = vmatprep.subr.mxu0 0.0
    %468 = vmatpush1.xpose.msra.mxu0 0.0
    %469 = vmatprep.subr.mxu0 0.0
    %470 = vmatpush1.xpose.msra.mxu0 0.0
    %471 = vmatprep.subr.mxu0 0.0
    %472 = vmatpush1.xpose.msra.mxu0 0.0
    %473 = vmatprep.subr.mxu0 0.0
    %474 = vmatpush1.xpose.msra.mxu0 0.0
    %475 = vmatprep.mubr.f32.mxu0 0.0
    %476 = vmatmul.mubr.f32.gmra.mrb[0].mxu0 %v397
    %v477 = vpop.f32.mrb[0].mxu0
    %v478 = vadd.f32 0.0, %v477
    %v479 = vpop.f32.mrb[0].mxu0
    %480 = vdwg.mxu0
    %v481 = vlaneseq
    %v482 = vshrl.u32 %v481, 7
    %v483 = vsub.s32 0, %v482
    %v484 = vrot.slane %v478, %v483
    %v485 = vadd.f32 %v370, %v484
    %v486 = vadd.f32 %v372, %v484
    %v487 = vadd.f32 %v374, %v484
    %v488 = vadd.f32 %v376, %v484
    %vm489 = vcmp.gt.f32.partialorder %v485, 0.0
    %vm490 = vcmp.gt.f32.partialorder %v486, 0.0
    %vm491 = vcmp.gt.f32.partialorder %v487, 0.0
    %vm492 = vcmp.gt.f32.partialorder %v488, 0.0
    %v493 = vmul.f32 %v485, 0.2
    %v494 = vmul.f32 %v486, 0.2
    %v495 = vmul.f32 %v487, 0.2
    %v496 = vmul.f32 %v488, 0.2
    %v497 = vsel %vm489, %v485, %v493
    %v498 = vsel %vm490, %v486, %v494
    %v499 = vsel %vm491, %v487, %v495
    %v500 = vsel %vm492, %v488, %v496
    %501 = vmatprep.subr.mxu0 0.0
    %502 = vmatpush1.xpose.msra.mxu0 %v397
    %503 = vmatprep.subr.mxu0 0.0
    %504 = vmatpush1.xpose.msra.mxu0 %v397
    %505 = vmatprep.subr.mxu0 0.0
    %506 = vmatpush1.xpose.msra.mxu0 %v397
    %507 = vmatprep.subr.mxu0 0.0
    %508 = vmatpush1.xpose.msra.mxu0 %v397
    %509 = vmatprep.subr.mxu0 0.0
    %510 = vmatpush1.xpose.msra.mxu0 0.0
    %511 = vmatprep.subr.mxu0 0.0
    %512 = vmatpush1.xpose.msra.mxu0 0.0
    %513 = vmatprep.subr.mxu0 0.0
    %514 = vmatpush1.xpose.msra.mxu0 0.0
    %515 = vmatprep.subr.mxu0 0.0
    %516 = vmatpush1.xpose.msra.mxu0 0.0
    %517 = vmatprep.subr.mxu0 0.0
    %518 = vmatpush1.xpose.msra.mxu0 0.0
    %519 = vmatprep.subr.mxu0 0.0
    %520 = vmatpush1.xpose.msra.mxu0 0.0
    %521 = vmatprep.subr.mxu0 0.0
    %522 = vmatpush1.xpose.msra.mxu0 0.0
    %523 = vmatprep.subr.mxu0 0.0
    %524 = vmatpush1.xpose.msra.mxu0 0.0
    %525 = vmatprep.subr.mxu0 0.0
    %526 = vmatpush1.xpose.msra.mxu0 0.0
    %527 = vmatprep.subr.mxu0 0.0
    %528 = vmatpush1.xpose.msra.mxu0 0.0
    %529 = vmatprep.subr.mxu0 0.0
    %530 = vmatpush1.xpose.msra.mxu0 0.0
    %531 = vmatprep.subr.mxu0 0.0
    %532 = vmatpush1.xpose.msra.mxu0 0.0
    %533 = vmatprep.subr.mxu0 0.0
    %534 = vmatpush1.xpose.msra.mxu0 0.0
    %535 = vmatprep.subr.mxu0 0.0
    %536 = vmatpush1.xpose.msra.mxu0 0.0
    %537 = vmatprep.subr.mxu0 0.0
    %538 = vmatpush1.xpose.msra.mxu0 0.0
    %539 = vmatprep.subr.mxu0 0.0
    %540 = vmatpush1.xpose.msra.mxu0 0.0
    %541 = vmatprep.subr.mxu0 0.0
    %542 = vmatpush1.xpose.msra.mxu0 0.0
    %543 = vmatprep.subr.mxu0 0.0
    %544 = vmatpush1.xpose.msra.mxu0 0.0
    %545 = vmatprep.subr.mxu0 0.0
    %546 = vmatpush1.xpose.msra.mxu0 0.0
    %547 = vmatprep.subr.mxu0 0.0
    %548 = vmatpush1.xpose.msra.mxu0 0.0
    %549 = vmatprep.subr.mxu0 0.0
    %550 = vmatpush1.xpose.msra.mxu0 0.0
    %551 = vmatprep.subr.mxu0 0.0
    %552 = vmatpush1.xpose.msra.mxu0 0.0
    %553 = vmatprep.subr.mxu0 0.0
    %554 = vmatpush1.xpose.msra.mxu0 0.0
    %555 = vmatprep.subr.mxu0 0.0
    %556 = vmatpush1.xpose.msra.mxu0 0.0
    %557 = vmatprep.subr.mxu0 0.0
    %558 = vmatpush1.xpose.msra.mxu0 0.0
    %559 = vmatprep.subr.mxu0 0.0
    %560 = vmatpush1.xpose.msra.mxu0 0.0
    %561 = vmatprep.subr.mxu0 0.0
    %562 = vmatpush1.xpose.msra.mxu0 0.0
    %563 = vmatprep.subr.mxu0 0.0
    %564 = vmatpush1.xpose.msra.mxu0 0.0
    %565 = vmatprep.mubr.f32.mxu0 0.0
    %566 = vmatmul.mubr.f32.gmra.mrb[0].mxu0 %v397
    %v567 = vpop.f32.mrb[0].mxu0
    %v568 = vadd.f32 0.0, %v567
    %v569 = vpop.f32.mrb[0].mxu0
    %570 = vmatprep.mubr.f32.mxu0 0.0
    %571 = vmatmul.mubr.f32.gmra.mrb[0].mxu0 %v397
    %v572 = vpop.f32.mrb[0].mxu0
    %v573 = vadd.f32 0.0, %v572
    %v574 = vpop.f32.mrb[0].mxu0
    %575 = vmatprep.mubr.f32.mxu0 0.0
    %576 = vmatmul.mubr.f32.gmra.mrb[0].mxu0 %v397
    %v577 = vpop.f32.mrb[0].mxu0
    %v578 = vadd.f32 0.0, %v577
    %v579 = vpop.f32.mrb[0].mxu0
    %580 = vmatprep.mubr.f32.mxu0 0.0
    %581 = vmatmul.mubr.f32.gmra.mrb[0].mxu0 %v397
    %v582 = vpop.f32.mrb[0].mxu0
    %v583 = vadd.f32 0.0, %v582
    %v584 = vpop.f32.mrb[0].mxu0
    %585 = vdwg.mxu0
    %v586 = vmul.f32 %v228, %v568
    %v587 = vmul.f32 %v229, %v573
    %v588 = vmul.f32 %v230, %v578
    %v589 = vmul.f32 %v231, %v583
    %v590 = vsub.f32 1.0, %v252
    %v591 = vsub.f32 1.0, %v253
    %v592 = vsub.f32 1.0, %v254
    %v593 = vsub.f32 1.0, %v255
    %v594 = vmul.f32 %v586, %v590
    %v595 = vmul.f32 %v587, %v591
    %v596 = vmul.f32 %v588, %v592
    %v597 = vmul.f32 %v589, %v593
    %v598 = vadd.f32 %v594, %v252
    %v599 = vadd.f32 %v595, %v253
    %v600 = vadd.f32 %v596, %v254
    %v601 = vadd.f32 %v597, %v255
    %vm602 = vcmp.gt.f32.partialorder %v598, 0.0
    %vm603 = vcmp.gt.f32.partialorder %v599, 0.0
    %vm604 = vcmp.gt.f32.partialorder %v600, 0.0
    %vm605 = vcmp.gt.f32.partialorder %v601, 0.0
    %v606 = vsel %vm602, %v497, -1e+30
    %v607 = vsel %vm603, %v498, -1e+30
    %v608 = vsel %vm604, %v499, -1e+30
    %v609 = vsel %vm605, %v500, -1e+30
    %vm610 = vcmask 261120
    %v611 = vsel %vm610, %v606, -inf
    %612 = vmax.xlane.f32.xlu0 %v611
    %v613 = vpop.xlane.xlu0 %612
    %v614 = vsel %vm610, %v607, -inf
    %615 = vmax.xlane.f32.xlu0 %v614
    %v616 = vpop.xlane.xlu0 %615
    %v617 = vsel %vm610, %v608, -inf
    %618 = vmax.xlane.f32.xlu0 %v617
    %v619 = vpop.xlane.xlu0 %618
    %v620 = vsel %vm610, %v609, -inf
    %621 = vmax.xlane.f32.xlu0 %v620
    %v622 = vpop.xlane.xlu0 %621
    %v623 = vsub.f32 %v606, %v613
    %v624 = vsub.f32 %v607, %v616
    %v625 = vsub.f32 %v608, %v619
    %v626 = vsub.f32 %v609, %v622
    %v627 = vmul.f32 %v623, 1.442695
    %v628 = vpow.pop %v627
    %v629 = vmul.f32 %v624, 1.442695
    %v630 = vpow.pop %v629
    %v631 = vmul.f32 %v625, 1.442695
    %v632 = vpow.pop %v631
    %v633 = vmul.f32 %v626, 1.442695
    %v634 = vpow.pop %v633
    %v635 = vmul.f32 %v628, %v598
    %v636 = vmul.f32 %v630, %v599
    %v637 = vmul.f32 %v632, %v600
    %v638 = vmul.f32 %v634, %v601
    %v639 = vsel %vm610, %v635, 0.0
    %640 = vadd.xlane.f32.xlu0 %v639
    %v641 = vpop.xlane.xlu0 %640
    %v642 = vsel %vm610, %v636, 0.0
    %643 = vadd.xlane.f32.xlu0 %v642
    %v644 = vpop.xlane.xlu0 %643
    %v645 = vsel %vm610, %v637, 0.0
    %646 = vadd.xlane.f32.xlu0 %v645
    %v647 = vpop.xlane.xlu0 %646
    %v648 = vsel %vm610, %v638, 0.0
    %649 = vadd.xlane.f32.xlu0 %v648
    %v650 = vpop.xlane.xlu0 %649
    %v651 = vmax.f32 %v641, 1e-30
    %v652 = vmax.f32 %v644, 1e-30
    %v653 = vmax.f32 %v647, 1e-30
    %v654 = vmax.f32 %v650, 1e-30
    %v655 = vrcp.pop %v651
    %v656 = vrcp.pop %v652
    %v657 = vrcp.pop %v653
    %v658 = vrcp.pop %v654
    %v659 = vmul.f32 %v635, %v655
    %v660 = vmul.f32 %v636, %v656
    %v661 = vmul.f32 %v637, %v657
    %v662 = vmul.f32 %v638, %v658
    %v664 = vlaneseq
    %v665 = vshrl.u32 %v664, 7
    %v666 = vsub.s32 0, %v665
    %v667 = vrot.slane %v260, %v666
    %v670 = vsel %vm610, %v659, 0
    %v673 = vsel %vm610, %v660, 0
    %v676 = vsel %vm610, %v661, 0
    %v679 = vsel %vm610, %v662, 0
    %681 = vmatprep.subr.mxu0 0.0
    %682 = vmatpush1.msra.mxu0 %v341
    %683 = vmatprep.subr.mxu0 0.0
    %684 = vmatpush1.msra.mxu0 %v346
    %685 = vmatprep.subr.mxu0 0.0
    %686 = vmatpush1.msra.mxu0 %v351
    %687 = vmatprep.subr.mxu0 0.0
    %688 = vmatpush1.msra.mxu0 %v356
    %689 = vmatprep.subr.mxu0 0.0
    %690 = vmatpush1.msra.mxu0 0.0
    %691 = vmatprep.subr.mxu0 0.0
    %692 = vmatpush1.msra.mxu0 0.0
    %693 = vmatprep.subr.mxu0 0.0
    %694 = vmatpush1.msra.mxu0 0.0
    %695 = vmatprep.subr.mxu0 0.0
    %696 = vmatpush1.msra.mxu0 0.0
    %697 = vmatprep.subr.mxu0 0.0
    %698 = vmatpush1.msra.mxu0 0.0
    %699 = vmatprep.subr.mxu0 0.0
    %700 = vmatpush1.msra.mxu0 0.0
    %701 = vmatprep.subr.mxu0 0.0
    %702 = vmatpush1.msra.mxu0 0.0
    %703 = vmatprep.subr.mxu0 0.0
    %704 = vmatpush1.msra.mxu0 0.0
    %705 = vmatprep.subr.mxu0 0.0
    %706 = vmatpush1.msra.mxu0 0.0
    %707 = vmatprep.subr.mxu0 0.0
    %708 = vmatpush1.msra.mxu0 0.0
    %709 = vmatprep.subr.mxu0 0.0
    %710 = vmatpush1.msra.mxu0 0.0
    %711 = vmatprep.subr.mxu0 0.0
    %712 = vmatpush1.msra.mxu0 0.0
    %713 = vmatprep.subr.mxu0 0.0
    %714 = vmatpush1.msra.mxu0 0.0
    %715 = vmatprep.subr.mxu0 0.0
    %716 = vmatpush1.msra.mxu0 0.0
    %717 = vmatprep.subr.mxu0 0.0
    %718 = vmatpush1.msra.mxu0 0.0
    %719 = vmatprep.subr.mxu0 0.0
    %720 = vmatpush1.msra.mxu0 0.0
    %721 = vmatprep.subr.mxu0 0.0
    %722 = vmatpush1.msra.mxu0 0.0
    %723 = vmatprep.subr.mxu0 0.0
    %724 = vmatpush1.msra.mxu0 0.0
    %725 = vmatprep.subr.mxu0 0.0
    %726 = vmatpush1.msra.mxu0 0.0
    %727 = vmatprep.subr.mxu0 0.0
    %728 = vmatpush1.msra.mxu0 0.0
    %729 = vmatprep.subr.mxu0 0.0
    %730 = vmatpush1.msra.mxu0 0.0
    %731 = vmatprep.subr.mxu0 0.0
    %732 = vmatpush1.msra.mxu0 0.0
    %733 = vmatprep.subr.mxu0 0.0
    %734 = vmatpush1.msra.mxu0 0.0
    %735 = vmatprep.subr.mxu0 0.0
    %736 = vmatpush1.msra.mxu0 0.0
    %737 = vmatprep.subr.mxu0 0.0
    %738 = vmatpush1.msra.mxu0 0.0
    %739 = vmatprep.subr.mxu0 0.0
    %740 = vmatpush1.msra.mxu0 0.0
    %741 = vmatprep.subr.mxu0 0.0
    %742 = vmatpush1.msra.mxu0 0.0
    %743 = vmatprep.subr.mxu0 0.0
    %744 = vmatpush1.msra.mxu0 0.0
    %745 = vmatprep.mubr.f32.mxu0 0.0
    %746 = vmatmul.mubr.f32.gmra.mrb[0].mxu0 %v670
    %v747 = vpop.f32.mrb[0].mxu0
    %v748 = vadd.f32 %v667, %v747
    %v749 = vpop.f32.mrb[0].mxu0
    %750 = vmatprep.mubr.f32.mxu0 0.0
    %751 = vmatmul.mubr.f32.gmra.mrb[0].mxu0 %v673
    %v752 = vpop.f32.mrb[0].mxu0
    %v753 = vadd.f32 %v667, %v752
    %v754 = vpop.f32.mrb[0].mxu0
    %755 = vmatprep.mubr.f32.mxu0 0.0
    %756 = vmatmul.mubr.f32.gmra.mrb[0].mxu0 %v676
    %v757 = vpop.f32.mrb[0].mxu0
    %v758 = vadd.f32 %v667, %v757
    %v759 = vpop.f32.mrb[0].mxu0
    %760 = vmatprep.mubr.f32.mxu0 0.0
    %761 = vmatmul.mubr.f32.gmra.mrb[0].mxu0 %v679
    %v762 = vpop.f32.mrb[0].mxu0
    %v763 = vadd.f32 %v667, %v762
    %v764 = vpop.f32.mrb[0].mxu0
    %765 = vdwg.mxu0
    %v766 = vmax.f32 %v748, 0.0
    %v767 = vmax.f32 %v753, 0.0
    %v768 = vmax.f32 %v758, 0.0
    %v769 = vmax.f32 %v763, 0.0
    %v770 = vld [vmem:[%s8] sm:$0x1]
    %v771 = vmul.f32 %v770, %v770
    %vm772 = vcmask 1040384
    %v773 = vsel %vm772, %v771, 0.0
    %774 = vadd.xlane.f32.xlu0 %v773
    %v775 = vpop.xlane.xlu0 %774
    %v776 = vrsqrt.pop %v775
    %v778 = vlaneseq
    %v779 = vshrl.u32 %v778, 7
    %v780 = vsub.s32 0, %v779
    %v781 = vrot.slane %v770, %v780
    %v783 = vmul.f32 %v766, %v781
    %v784 = vmul.f32 %v767, %v781
    %v785 = vmul.f32 %v768, %v781
    %v786 = vmul.f32 %v769, %v781
    %787 = vadd.xlane.f32.xlu0 %v783
    %v788 = vpop.xlane.xlu0 %787
    %789 = vadd.xlane.f32.xlu0 %v784
    %v790 = vpop.xlane.xlu0 %789
    %791 = vadd.xlane.f32.xlu0 %v785
    %v792 = vpop.xlane.xlu0 %791
    %793 = vadd.xlane.f32.xlu0 %v786
    %v794 = vpop.xlane.xlu0 %793
    %v795 = vlaneseq
    %v796 = vshrl.u32 %v795, 7
    %v797 = vsub.s32 0, %v796
    %v798 = vrot.slane %v776, %v797
    %v799 = vmul.f32 %v788, %v798
    %v800 = vmul.f32 %v790, %v798
    %v801 = vmul.f32 %v792, %v798
    %v802 = vmul.f32 %v794, %v798
    %v804 = vsel %vm395, %v799, 0
    %v807 = vsel %vm395, %v800, 0
    %v810 = vsel %vm395, %v801, 0
    %v813 = vsel %vm395, %v802, 0
    %815 = vmatprep.subr.mxu0 0.0
    %816 = vmatpush1.xpose.msra.mxu0 %v804
    %817 = vmatprep.subr.mxu0 0.0
    %818 = vmatpush1.xpose.msra.mxu0 %v807
    %819 = vmatprep.subr.mxu0 0.0
    %820 = vmatpush1.xpose.msra.mxu0 %v810
    %821 = vmatprep.subr.mxu0 0.0
    %822 = vmatpush1.xpose.msra.mxu0 %v813
    %823 = vmatprep.subr.mxu0 0.0
    %824 = vmatpush1.xpose.msra.mxu0 0.0
    %825 = vmatprep.subr.mxu0 0.0
    %826 = vmatpush1.xpose.msra.mxu0 0.0
    %827 = vmatprep.subr.mxu0 0.0
    %828 = vmatpush1.xpose.msra.mxu0 0.0
    %829 = vmatprep.subr.mxu0 0.0
    %830 = vmatpush1.xpose.msra.mxu0 0.0
    %831 = vmatprep.subr.mxu0 0.0
    %832 = vmatpush1.xpose.msra.mxu0 0.0
    %833 = vmatprep.subr.mxu0 0.0
    %834 = vmatpush1.xpose.msra.mxu0 0.0
    %835 = vmatprep.subr.mxu0 0.0
    %836 = vmatpush1.xpose.msra.mxu0 0.0
    %837 = vmatprep.subr.mxu0 0.0
    %838 = vmatpush1.xpose.msra.mxu0 0.0
    %839 = vmatprep.subr.mxu0 0.0
    %840 = vmatpush1.xpose.msra.mxu0 0.0
    %841 = vmatprep.subr.mxu0 0.0
    %842 = vmatpush1.xpose.msra.mxu0 0.0
    %843 = vmatprep.subr.mxu0 0.0
    %844 = vmatpush1.xpose.msra.mxu0 0.0
    %845 = vmatprep.subr.mxu0 0.0
    %846 = vmatpush1.xpose.msra.mxu0 0.0
    %847 = vmatprep.subr.mxu0 0.0
    %848 = vmatpush1.xpose.msra.mxu0 0.0
    %849 = vmatprep.subr.mxu0 0.0
    %850 = vmatpush1.xpose.msra.mxu0 0.0
    %851 = vmatprep.subr.mxu0 0.0
    %852 = vmatpush1.xpose.msra.mxu0 0.0
    %853 = vmatprep.subr.mxu0 0.0
    %854 = vmatpush1.xpose.msra.mxu0 0.0
    %855 = vmatprep.subr.mxu0 0.0
    %856 = vmatpush1.xpose.msra.mxu0 0.0
    %857 = vmatprep.subr.mxu0 0.0
    %858 = vmatpush1.xpose.msra.mxu0 0.0
    %859 = vmatprep.subr.mxu0 0.0
    %860 = vmatpush1.xpose.msra.mxu0 0.0
    %861 = vmatprep.subr.mxu0 0.0
    %862 = vmatpush1.xpose.msra.mxu0 0.0
    %863 = vmatprep.subr.mxu0 0.0
    %864 = vmatpush1.xpose.msra.mxu0 0.0
    %865 = vmatprep.subr.mxu0 0.0
    %866 = vmatpush1.xpose.msra.mxu0 0.0
    %867 = vmatprep.subr.mxu0 0.0
    %868 = vmatpush1.xpose.msra.mxu0 0.0
    %869 = vmatprep.subr.mxu0 0.0
    %870 = vmatpush1.xpose.msra.mxu0 0.0
    %871 = vmatprep.subr.mxu0 0.0
    %872 = vmatpush1.xpose.msra.mxu0 0.0
    %873 = vmatprep.subr.mxu0 0.0
    %874 = vmatpush1.xpose.msra.mxu0 0.0
    %875 = vmatprep.subr.mxu0 0.0
    %876 = vmatpush1.xpose.msra.mxu0 0.0
    %877 = vmatprep.subr.mxu0 0.0
    %878 = vmatpush1.xpose.msra.mxu0 0.0
    %879 = vmatprep.mubr.f32.mxu0 0.0
    %880 = vmatmul.mubr.f32.gmra.mrb[0].mxu0 %v397
    %v881 = vpop.f32.mrb[0].mxu0
    %v882 = vadd.f32 0.0, %v881
    %v883 = vpop.f32.mrb[0].mxu0
    %884 = vdwg.mxu0
    %vm885 = vcmask 15360
    %v887 = vsel %vm885, %v232, 0
    %v890 = vsel %vm885, %v233, 0
    %v893 = vsel %vm885, %v234, 0
    %v896 = vsel %vm885, %v235, 0
    %898 = vmatprep.subr.mxu0 0.0
    %899 = vmatpush1.xpose.msra.mxu0 %v887
    %900 = vmatprep.subr.mxu0 0.0
    %901 = vmatpush1.xpose.msra.mxu0 %v890
    %902 = vmatprep.subr.mxu0 0.0
    %903 = vmatpush1.xpose.msra.mxu0 %v893
    %904 = vmatprep.subr.mxu0 0.0
    %905 = vmatpush1.xpose.msra.mxu0 %v896
    %906 = vmatprep.subr.mxu0 0.0
    %907 = vmatpush1.xpose.msra.mxu0 0.0
    %908 = vmatprep.subr.mxu0 0.0
    %909 = vmatpush1.xpose.msra.mxu0 0.0
    %910 = vmatprep.subr.mxu0 0.0
    %911 = vmatpush1.xpose.msra.mxu0 0.0
    %912 = vmatprep.subr.mxu0 0.0
    %913 = vmatpush1.xpose.msra.mxu0 0.0
    %914 = vmatprep.subr.mxu0 0.0
    %915 = vmatpush1.xpose.msra.mxu0 0.0
    %916 = vmatprep.subr.mxu0 0.0
    %917 = vmatpush1.xpose.msra.mxu0 0.0
    %918 = vmatprep.subr.mxu0 0.0
    %919 = vmatpush1.xpose.msra.mxu0 0.0
    %920 = vmatprep.subr.mxu0 0.0
    %921 = vmatpush1.xpose.msra.mxu0 0.0
    %922 = vmatprep.subr.mxu0 0.0
    %923 = vmatpush1.xpose.msra.mxu0 0.0
    %924 = vmatprep.subr.mxu0 0.0
    %925 = vmatpush1.xpose.msra.mxu0 0.0
    %926 = vmatprep.subr.mxu0 0.0
    %927 = vmatpush1.xpose.msra.mxu0 0.0
    %928 = vmatprep.subr.mxu0 0.0
    %929 = vmatpush1.xpose.msra.mxu0 0.0
    %930 = vmatprep.subr.mxu0 0.0
    %931 = vmatpush1.xpose.msra.mxu0 0.0
    %932 = vmatprep.subr.mxu0 0.0
    %933 = vmatpush1.xpose.msra.mxu0 0.0
    %934 = vmatprep.subr.mxu0 0.0
    %935 = vmatpush1.xpose.msra.mxu0 0.0
    %936 = vmatprep.subr.mxu0 0.0
    %937 = vmatpush1.xpose.msra.mxu0 0.0
    %938 = vmatprep.subr.mxu0 0.0
    %939 = vmatpush1.xpose.msra.mxu0 0.0
    %940 = vmatprep.subr.mxu0 0.0
    %941 = vmatpush1.xpose.msra.mxu0 0.0
    %942 = vmatprep.subr.mxu0 0.0
    %943 = vmatpush1.xpose.msra.mxu0 0.0
    %944 = vmatprep.subr.mxu0 0.0
    %945 = vmatpush1.xpose.msra.mxu0 0.0
    %946 = vmatprep.subr.mxu0 0.0
    %947 = vmatpush1.xpose.msra.mxu0 0.0
    %948 = vmatprep.subr.mxu0 0.0
    %949 = vmatpush1.xpose.msra.mxu0 0.0
    %950 = vmatprep.subr.mxu0 0.0
    %951 = vmatpush1.xpose.msra.mxu0 0.0
    %952 = vmatprep.subr.mxu0 0.0
    %953 = vmatpush1.xpose.msra.mxu0 0.0
    %954 = vmatprep.subr.mxu0 0.0
    %955 = vmatpush1.xpose.msra.mxu0 0.0
    %956 = vmatprep.subr.mxu0 0.0
    %957 = vmatpush1.xpose.msra.mxu0 0.0
    %958 = vmatprep.subr.mxu0 0.0
    %959 = vmatpush1.xpose.msra.mxu0 0.0
    %960 = vmatprep.subr.mxu0 0.0
    %961 = vmatpush1.xpose.msra.mxu0 0.0
    %962 = vmatprep.mubr.f32.mxu0 0.0
    %963 = vmatmul.mubr.f32.gmra.mrb[0].mxu0 %v887
    %v964 = vpop.f32.mrb[0].mxu0
    %v965 = vadd.f32 0.0, %v964
    %v966 = vpop.f32.mrb[0].mxu0
    %967 = vmatprep.mubr.f32.mxu0 0.0
    %968 = vmatmul.mubr.f32.gmra.mrb[0].mxu0 %v890
    %v969 = vpop.f32.mrb[0].mxu0
    %v970 = vadd.f32 0.0, %v969
    %v971 = vpop.f32.mrb[0].mxu0
    %972 = vmatprep.mubr.f32.mxu0 0.0
    %973 = vmatmul.mubr.f32.gmra.mrb[0].mxu0 %v893
    %v974 = vpop.f32.mrb[0].mxu0
    %v975 = vadd.f32 0.0, %v974
    %v976 = vpop.f32.mrb[0].mxu0
    %977 = vmatprep.mubr.f32.mxu0 0.0
    %978 = vmatmul.mubr.f32.gmra.mrb[0].mxu0 %v896
    %v979 = vpop.f32.mrb[0].mxu0
    %v980 = vadd.f32 0.0, %v979
    %v981 = vpop.f32.mrb[0].mxu0
    %982 = vdwg.mxu0
    %v983 = vlaneseq
    %v984 = vshrl.u32 %v983, 7
    %v985 = vsub.s32 0, %v984
    %v986 = vrot.slane %v882, %v985
    %vm987 = vcmp.gt.f32.partialorder %v986, %v799
    %vm988 = vcmp.gt.f32.partialorder %v986, %v800
    %vm989 = vcmp.gt.f32.partialorder %v986, %v801
    %vm990 = vcmp.gt.f32.partialorder %v986, %v802
    %vm991 = vcmp.eq.f32.partialorder %v986, %v799
    %vm992 = vcmp.eq.f32.partialorder %v986, %v800
    %vm993 = vcmp.eq.f32.partialorder %v986, %v801
    %vm994 = vcmp.eq.f32.partialorder %v986, %v802
    %vm995 = vcmp.lt.s32.totalorder %v243, %v238
    %vm996 = vcmp.lt.s32.totalorder %v243, %v239
    %vm997 = vcmp.lt.s32.totalorder %v243, %v240
    %vm998 = vcmp.lt.s32.totalorder %v243, %v241
    %vm999 = vmand %vm991, %vm995
    %vm1000 = vmand %vm992, %vm996
    %vm1001 = vmand %vm993, %vm997
    %vm1002 = vmand %vm994, %vm998
    %vm1003 = vmor %vm987, %vm999
    %vm1004 = vmor %vm988, %vm1000
    %vm1005 = vmor %vm989, %vm1001
    %vm1006 = vmor %vm990, %vm1002
    %v1007 = vsel %vm1003, 1, 0
    %v1008 = vsel %vm1004, 1, 0
    %v1009 = vsel %vm1005, 1, 0
    %v1010 = vsel %vm1006, 1, 0
    %v1011 = vcvt.s32.f32 %v1007
    %v1012 = vcvt.s32.f32 %v1008
    %v1013 = vcvt.s32.f32 %v1009
    %v1014 = vcvt.s32.f32 %v1010
    %v1015 = vmul.f32 %v965, %v1011
    %v1016 = vmul.f32 %v970, %v1012
    %v1017 = vmul.f32 %v975, %v1013
    %v1018 = vmul.f32 %v980, %v1014
    %v1019 = vsel %vm610, %v1015, 0.0
    %1020 = vadd.xlane.f32.xlu0 %v1019
    %v1021 = vpop.xlane.xlu0 %1020
    %v1022 = vsel %vm610, %v1016, 0.0
    %1023 = vadd.xlane.f32.xlu0 %v1022
    %v1024 = vpop.xlane.xlu0 %1023
    %v1025 = vsel %vm610, %v1017, 0.0
    %1026 = vadd.xlane.f32.xlu0 %v1025
    %v1027 = vpop.xlane.xlu0 %1026
    %v1028 = vsel %vm610, %v1018, 0.0
    %1029 = vadd.xlane.f32.xlu0 %v1028
    %v1030 = vpop.xlane.xlu0 %1029
    %v1031 = vsel %vm885, %v232, 0.0
    %v1032 = vsel %vm885, %v233, 0.0
    %v1033 = vadd.f32 %v1031, %v1032
    %v1034 = vsel %vm885, %v234, 0.0
    %v1035 = vadd.f32 %v1033, %v1034
    %v1036 = vsel %vm885, %v235, 0.0
    %v1037 = vadd.f32 %v1035, %v1036
    %v1038 = vrot.slane %v1037, 4
    %v1039 = vadd.f32 %v1037, %v1038
    %v1040 = vrot.slane %v1039, 2
    %v1041 = vadd.f32 %v1039, %v1040
    %v1042 = vrot.slane %v1041, 1
    %v1043 = vadd.f32 %v1041, %v1042
    %v1044 = vmul.f32 %v1043, 0.8
    %v1045 = vsub.f32 %v1044, 0.0001
    %v1046 = vceil.f32 %v1045
    %v1047 = vmul.f32 %v232, %v1046
    %v1048 = vmul.f32 %v233, %v1046
    %v1049 = vmul.f32 %v234, %v1046
    %v1050 = vmul.f32 %v235, %v1046
    %v1051 = vsel %vm885, %v1047, 0.0
    %1052 = vadd.xlane.f32.xlu0 %v1051
    %v1053 = vpop.xlane.xlu0 %1052
    %v1054 = vsel %vm885, %v1048, 0.0
    %1055 = vadd.xlane.f32.xlu0 %v1054
    %v1056 = vpop.xlane.xlu0 %1055
    %v1057 = vsel %vm885, %v1049, 0.0
    %1058 = vadd.xlane.f32.xlu0 %v1057
    %v1059 = vpop.xlane.xlu0 %1058
    %v1060 = vsel %vm885, %v1050, 0.0
    %1061 = vadd.xlane.f32.xlu0 %v1060
    %v1062 = vpop.xlane.xlu0 %1061
    %vm1063 = vcmp.lt.f32.partialorder %v1021, %v1053
    %vm1064 = vcmp.lt.f32.partialorder %v1024, %v1056
    %vm1065 = vcmp.lt.f32.partialorder %v1027, %v1059
    %vm1066 = vcmp.lt.f32.partialorder %v1030, %v1062
    %vm1067 = vcmp.gt.f32.partialorder 1.0, 0.0
    %vm1068 = vmand %vm1063, %vm1067
    %vm1069 = vmand %vm1064, %vm1067
    %vm1070 = vmand %vm1065, %vm1067
    %vm1071 = vmand %vm1066, %vm1067
    %v1072 = vsel %vm1068, 1.0, 0.0
    %v1073 = vsel %vm1069, 1.0, 0.0
    %v1074 = vsel %vm1070, 1.0, 0.0
    %v1075 = vsel %vm1071, 1.0, 0.0
    %v1076 = vtanh.pop %v799
    %v1077 = vtanh.pop %v800
    %v1078 = vtanh.pop %v801
    %v1079 = vtanh.pop %v802
    %v1080 = vmul.f32 %v766, %v1076
    %v1081 = vmul.f32 %v767, %v1077
    %v1082 = vmul.f32 %v768, %v1078
    %v1083 = vmul.f32 %v769, %v1079
    %v1084 = vmul.f32 %v1080, %v1072
    %v1085 = vmul.f32 %v1081, %v1073
    %v1086 = vmul.f32 %v1082, %v1074
    %v1087 = vmul.f32 %v1083, %v1075
    %v1089 = vsel %vm395, %v1072, 0
    %v1092 = vsel %vm395, %v1073, 0
    %v1095 = vsel %vm395, %v1074, 0
    %v1098 = vsel %vm395, %v1075, 0
    %1100 = vmatprep.subr.mxu0 0.0
    %1101 = vmatpush1.xpose.msra.mxu0 %v1089
    %1102 = vmatprep.subr.mxu0 0.0
    %1103 = vmatpush1.xpose.msra.mxu0 %v1092
    %1104 = vmatprep.subr.mxu0 0.0
    %1105 = vmatpush1.xpose.msra.mxu0 %v1095
    %1106 = vmatprep.subr.mxu0 0.0
    %1107 = vmatpush1.xpose.msra.mxu0 %v1098
    %1108 = vmatprep.subr.mxu0 0.0
    %1109 = vmatpush1.xpose.msra.mxu0 0.0
    %1110 = vmatprep.subr.mxu0 0.0
    %1111 = vmatpush1.xpose.msra.mxu0 0.0
    %1112 = vmatprep.subr.mxu0 0.0
    %1113 = vmatpush1.xpose.msra.mxu0 0.0
    %1114 = vmatprep.subr.mxu0 0.0
    %1115 = vmatpush1.xpose.msra.mxu0 0.0
    %1116 = vmatprep.subr.mxu0 0.0
    %1117 = vmatpush1.xpose.msra.mxu0 0.0
    %1118 = vmatprep.subr.mxu0 0.0
    %1119 = vmatpush1.xpose.msra.mxu0 0.0
    %1120 = vmatprep.subr.mxu0 0.0
    %1121 = vmatpush1.xpose.msra.mxu0 0.0
    %1122 = vmatprep.subr.mxu0 0.0
    %1123 = vmatpush1.xpose.msra.mxu0 0.0
    %1124 = vmatprep.subr.mxu0 0.0
    %1125 = vmatpush1.xpose.msra.mxu0 0.0
    %1126 = vmatprep.subr.mxu0 0.0
    %1127 = vmatpush1.xpose.msra.mxu0 0.0
    %1128 = vmatprep.subr.mxu0 0.0
    %1129 = vmatpush1.xpose.msra.mxu0 0.0
    %1130 = vmatprep.subr.mxu0 0.0
    %1131 = vmatpush1.xpose.msra.mxu0 0.0
    %1132 = vmatprep.subr.mxu0 0.0
    %1133 = vmatpush1.xpose.msra.mxu0 0.0
    %1134 = vmatprep.subr.mxu0 0.0
    %1135 = vmatpush1.xpose.msra.mxu0 0.0
    %1136 = vmatprep.subr.mxu0 0.0
    %1137 = vmatpush1.xpose.msra.mxu0 0.0
    %1138 = vmatprep.subr.mxu0 0.0
    %1139 = vmatpush1.xpose.msra.mxu0 0.0
    %1140 = vmatprep.subr.mxu0 0.0
    %1141 = vmatpush1.xpose.msra.mxu0 0.0
    %1142 = vmatprep.subr.mxu0 0.0
    %1143 = vmatpush1.xpose.msra.mxu0 0.0
    %1144 = vmatprep.subr.mxu0 0.0
    %1145 = vmatpush1.xpose.msra.mxu0 0.0
    %1146 = vmatprep.subr.mxu0 0.0
    %1147 = vmatpush1.xpose.msra.mxu0 0.0
    %1148 = vmatprep.subr.mxu0 0.0
    %1149 = vmatpush1.xpose.msra.mxu0 0.0
    %1150 = vmatprep.subr.mxu0 0.0
    %1151 = vmatpush1.xpose.msra.mxu0 0.0
    %1152 = vmatprep.subr.mxu0 0.0
    %1153 = vmatpush1.xpose.msra.mxu0 0.0
    %1154 = vmatprep.subr.mxu0 0.0
    %1155 = vmatpush1.xpose.msra.mxu0 0.0
    %1156 = vmatprep.subr.mxu0 0.0
    %1157 = vmatpush1.xpose.msra.mxu0 0.0
    %1158 = vmatprep.subr.mxu0 0.0
    %1159 = vmatpush1.xpose.msra.mxu0 0.0
    %1160 = vmatprep.subr.mxu0 0.0
    %1161 = vmatpush1.xpose.msra.mxu0 0.0
    %1162 = vmatprep.subr.mxu0 0.0
    %1163 = vmatpush1.xpose.msra.mxu0 0.0
    %1164 = vmatprep.mubr.f32.mxu0 0.0
    %1165 = vmatmul.mubr.f32.gmra.mrb[0].mxu0 %v397
    %v1166 = vpop.f32.mrb[0].mxu0
    %v1167 = vadd.f32 0.0, %v1166
    %v1168 = vpop.f32.mrb[0].mxu0
    %1169 = vdwg.mxu0
    %v1170 = vlaneseq
    %v1171 = vshrl.u32 %v1170, 7
    %v1172 = vsub.s32 0, %v1171
    %v1173 = vrot.slane %v1167, %v1172
    %v1174 = vmul.f32 %v236, %v1173
    %vm1175 = vcmask 254976
    %v1176 = vsel %vm1175, %v1174, 0.0
    %1177 = vadd.xlane.f32.xlu0 %v1176
    %v1178 = vpop.xlane.xlu0 %1177
    %v1180 = vsel %vm610, %v1174, 0
    %1182 = vmatprep.subr.mxu0 0.0
    %1183 = vmatpush1.msra.mxu0 %v1084
    %1184 = vmatprep.subr.mxu0 0.0
    %1185 = vmatpush1.msra.mxu0 %v1085
    %1186 = vmatprep.subr.mxu0 0.0
    %1187 = vmatpush1.msra.mxu0 %v1086
    %1188 = vmatprep.subr.mxu0 0.0
    %1189 = vmatpush1.msra.mxu0 %v1087
    %1190 = vmatprep.subr.mxu0 0.0
    %1191 = vmatpush1.msra.mxu0 0.0
    %1192 = vmatprep.subr.mxu0 0.0
    %1193 = vmatpush1.msra.mxu0 0.0
    %1194 = vmatprep.subr.mxu0 0.0
    %1195 = vmatpush1.msra.mxu0 0.0
    %1196 = vmatprep.subr.mxu0 0.0
    %1197 = vmatpush1.msra.mxu0 0.0
    %1198 = vmatprep.subr.mxu0 0.0
    %1199 = vmatpush1.msra.mxu0 0.0
    %1200 = vmatprep.subr.mxu0 0.0
    %1201 = vmatpush1.msra.mxu0 0.0
    %1202 = vmatprep.subr.mxu0 0.0
    %1203 = vmatpush1.msra.mxu0 0.0
    %1204 = vmatprep.subr.mxu0 0.0
    %1205 = vmatpush1.msra.mxu0 0.0
    %1206 = vmatprep.subr.mxu0 0.0
    %1207 = vmatpush1.msra.mxu0 0.0
    %1208 = vmatprep.subr.mxu0 0.0
    %1209 = vmatpush1.msra.mxu0 0.0
    %1210 = vmatprep.subr.mxu0 0.0
    %1211 = vmatpush1.msra.mxu0 0.0
    %1212 = vmatprep.subr.mxu0 0.0
    %1213 = vmatpush1.msra.mxu0 0.0
    %1214 = vmatprep.subr.mxu0 0.0
    %1215 = vmatpush1.msra.mxu0 0.0
    %1216 = vmatprep.subr.mxu0 0.0
    %1217 = vmatpush1.msra.mxu0 0.0
    %1218 = vmatprep.subr.mxu0 0.0
    %1219 = vmatpush1.msra.mxu0 0.0
    %1220 = vmatprep.subr.mxu0 0.0
    %1221 = vmatpush1.msra.mxu0 0.0
    %1222 = vmatprep.subr.mxu0 0.0
    %1223 = vmatpush1.msra.mxu0 0.0
    %1224 = vmatprep.subr.mxu0 0.0
    %1225 = vmatpush1.msra.mxu0 0.0
    %1226 = vmatprep.subr.mxu0 0.0
    %1227 = vmatpush1.msra.mxu0 0.0
    %1228 = vmatprep.subr.mxu0 0.0
    %1229 = vmatpush1.msra.mxu0 0.0
    %1230 = vmatprep.subr.mxu0 0.0
    %1231 = vmatpush1.msra.mxu0 0.0
    %1232 = vmatprep.subr.mxu0 0.0
    %1233 = vmatpush1.msra.mxu0 0.0
    %1234 = vmatprep.subr.mxu0 0.0
    %1235 = vmatpush1.msra.mxu0 0.0
    %1236 = vmatprep.subr.mxu0 0.0
    %1237 = vmatpush1.msra.mxu0 0.0
    %1238 = vmatprep.subr.mxu0 0.0
    %1239 = vmatpush1.msra.mxu0 0.0
    %1240 = vmatprep.subr.mxu0 0.0
    %1241 = vmatpush1.msra.mxu0 0.0
    %1242 = vmatprep.subr.mxu0 0.0
    %1243 = vmatpush1.msra.mxu0 0.0
    %1244 = vmatprep.subr.mxu0 0.0
    %1245 = vmatpush1.msra.mxu0 0.0
    %1246 = vmatprep.mubr.f32.mxu0 0.0
    %1247 = vmatmul.mubr.f32.gmra.mrb[0].mxu0 %v1180
    %v1248 = vpop.f32.mrb[0].mxu0
    %v1249 = vadd.f32 0.0, %v1248
    %v1250 = vpop.f32.mrb[0].mxu0
    %1251 = vdwg.mxu0
    %v1252 = vmax.f32 %v1178, 1.0
    %v1253 = vrcp.pop %v1252
    %v1254 = vmul.f32 %v1249, %v1253
    %v1255 = vmul.f32 %v232, %v1072
    %v1256 = vmul.f32 %v233, %v1073
    %v1257 = vmul.f32 %v234, %v1074
    %v1258 = vmul.f32 %v235, %v1075
    %vm1259 = vcmp.eq.s32.totalorder %v243, 0
    %v1260 = vsel %vm1259, 1, 0
    %v1261 = vcvt.s32.f32 %v1260
    %v1262 = vmul.f32 %v1255, %v1261
    %v1263 = vmul.f32 %v1256, %v1261
    %v1264 = vmul.f32 %v1257, %v1261
    %v1265 = vmul.f32 %v1258, %v1261
    %v1266 = vsel %vm885, %v1262, 0.0
    %1267 = vadd.xlane.f32.xlu0 %v1266
    %v1268 = vpop.xlane.xlu0 %1267
    %v1269 = vsel %vm885, %v1263, 0.0
    %1270 = vadd.xlane.f32.xlu0 %v1269
    %v1271 = vpop.xlane.xlu0 %1270
    %v1272 = vsel %vm885, %v1264, 0.0
    %1273 = vadd.xlane.f32.xlu0 %v1272
    %v1274 = vpop.xlane.xlu0 %1273
    %v1275 = vsel %vm885, %v1265, 0.0
    %1276 = vadd.xlane.f32.xlu0 %v1275
    %v1277 = vpop.xlane.xlu0 %1276
    %vm1278 = vcmp.gt.f32.partialorder %v1268, 0.0
    %vm1279 = vcmp.gt.f32.partialorder %v1271, 0.0
    %vm1280 = vcmp.gt.f32.partialorder %v1274, 0.0
    %vm1281 = vcmp.gt.f32.partialorder %v1277, 0.0
    %v1282 = vsel %vm1278, 1, 0
    %v1283 = vsel %vm1279, 1, 0
    %v1284 = vsel %vm1280, 1, 0
    %v1285 = vsel %vm1281, 1, 0
    %vm1286 = vcmp.eq.s32.totalorder %v1282, 1
    %vm1287 = vcmp.eq.s32.totalorder %v1283, 1
    %vm1288 = vcmp.eq.s32.totalorder %v1284, 1
    %vm1289 = vcmp.eq.s32.totalorder %v1285, 1
    %v1290 = vsel %vm1286, %v1084, -1e+30
    %v1291 = vsel %vm1287, %v1085, -1e+30
    %v1292 = vsel %vm1288, %v1086, -1e+30
    %v1293 = vsel %vm1289, %v1087, -1e+30
    %v1294 = vmax.f32 %v1290, %v1291
    %v1295 = vmax.f32 %v1292, %v1293
    %v1296 = vmax.f32 %v1294, %v1295
    %v1297 = vrot.slane %v1296, 4
    %v1298 = vmax.f32 %v1296, %v1297
    %v1299 = vrot.slane %v1298, 2
    %v1300 = vmax.f32 %v1298, %v1299
    %v1301 = vrot.slane %v1300, 1
    %v1302 = vmax.f32 %v1300, %v1301
    %vm1303 = vcmp.eq.s32.totalorder %v238, 0
    %v1304 = vsel %vm1303, %v1302, -1e+30
    %vm1305 = vcmp.eq.s32.totalorder %v243, 1
    %v1306 = vsel %vm1305, 1, 0
    %v1307 = vcvt.s32.f32 %v1306
    %v1308 = vmul.f32 %v1255, %v1307
    %v1309 = vmul.f32 %v1256, %v1307
    %v1310 = vmul.f32 %v1257, %v1307
    %v1311 = vmul.f32 %v1258, %v1307
    %v1312 = vsel %vm885, %v1308, 0.0
    %1313 = vadd.xlane.f32.xlu0 %v1312
    %v1314 = vpop.xlane.xlu0 %1313
    %v1315 = vsel %vm885, %v1309, 0.0
    %1316 = vadd.xlane.f32.xlu0 %v1315
    %v1317 = vpop.xlane.xlu0 %1316
    %v1318 = vsel %vm885, %v1310, 0.0
    %1319 = vadd.xlane.f32.xlu0 %v1318
    %v1320 = vpop.xlane.xlu0 %1319
    %v1321 = vsel %vm885, %v1311, 0.0
    %1322 = vadd.xlane.f32.xlu0 %v1321
    %v1323 = vpop.xlane.xlu0 %1322
    %vm1324 = vcmp.gt.f32.partialorder %v1314, 0.0
    %vm1325 = vcmp.gt.f32.partialorder %v1317, 0.0
    %vm1326 = vcmp.gt.f32.partialorder %v1320, 0.0
    %vm1327 = vcmp.gt.f32.partialorder %v1323, 0.0
    %v1328 = vsel %vm1324, 1, 0
    %v1329 = vsel %vm1325, 1, 0
    %v1330 = vsel %vm1326, 1, 0
    %v1331 = vsel %vm1327, 1, 0
    %vm1332 = vcmp.eq.s32.totalorder %v1328, 1
    %vm1333 = vcmp.eq.s32.totalorder %v1329, 1
    %vm1334 = vcmp.eq.s32.totalorder %v1330, 1
    %vm1335 = vcmp.eq.s32.totalorder %v1331, 1
    %v1336 = vsel %vm1332, %v1084, -1e+30
    %v1337 = vsel %vm1333, %v1085, -1e+30
    %v1338 = vsel %vm1334, %v1086, -1e+30
    %v1339 = vsel %vm1335, %v1087, -1e+30
    %v1340 = vmax.f32 %v1336, %v1337
    %v1341 = vmax.f32 %v1338, %v1339
    %v1342 = vmax.f32 %v1340, %v1341
    %v1343 = vrot.slane %v1342, 4
    %v1344 = vmax.f32 %v1342, %v1343
    %v1345 = vrot.slane %v1344, 2
    %v1346 = vmax.f32 %v1344, %v1345
    %v1347 = vrot.slane %v1346, 1
    %v1348 = vmax.f32 %v1346, %v1347
    %vm1349 = vcmp.eq.s32.totalorder %v238, 1
    %v1350 = vsel %vm1349, %v1348, %v1304
    %v1351 = vld [vmem:[%s9] sm:$0xff]
    %v1352 = vld [vmem:[%s9 + $0x8] sm:$0xff]
    %v1353 = vld [vmem:[%s9 + $0x10] sm:$0xff]
    %v1354 = vld [vmem:[%s9 + $0x18] sm:$0xff]
    %v1355 = vld [vmem:[%s9 + $0x20] sm:$0xff]
    %v1356 = vld [vmem:[%s9 + $0x28] sm:$0xff]
    %v1357 = vld [vmem:[%s9 + $0x30] sm:$0xff]
    %v1358 = vld [vmem:[%s9 + $0x38] sm:$0xff]
    %v1359 = vld [vmem:[%s9 + $0x40] sm:$0xff]
    %v1360 = vld [vmem:[%s9 + $0x48] sm:$0xff]
    %v1361 = vld [vmem:[%s9 + $0x50] sm:$0xff]
    %v1362 = vld [vmem:[%s9 + $0x58] sm:$0xff]
    %v1363 = vld [vmem:[%s9 + $0x60] sm:$0xff]
    %v1364 = vld [vmem:[%s9 + $0x68] sm:$0xff]
    %v1365 = vld [vmem:[%s9 + $0x70] sm:$0xff]
    %v1366 = vld [vmem:[%s9 + $0x78] sm:$0xff]
    %v1367 = vld [vmem:[#allocation10] sm:$0x1]
    %v1368 = vld [vmem:[#allocation11] sm:$0x1]
    %v1369 = vld [vmem:[#allocation13] sm:$0x1]
    %1370 = vmatprep.subr.mxu0 0.0
    %1371 = vmatpush1.msra.mxu0 %v1351
    %1372 = vmatprep.subr.mxu0 0.0
    %1373 = vmatpush1.msra.mxu0 %v1352
    %1374 = vmatprep.subr.mxu0 0.0
    %1375 = vmatpush1.msra.mxu0 %v1353
    %1376 = vmatprep.subr.mxu0 0.0
    %1377 = vmatpush1.msra.mxu0 %v1354
    %1378 = vmatprep.subr.mxu0 0.0
    %1379 = vmatpush1.msra.mxu0 %v1355
    %1380 = vmatprep.subr.mxu0 0.0
    %1381 = vmatpush1.msra.mxu0 %v1356
    %1382 = vmatprep.subr.mxu0 0.0
    %1383 = vmatpush1.msra.mxu0 %v1357
    %1384 = vmatprep.subr.mxu0 0.0
    %1385 = vmatpush1.msra.mxu0 %v1358
    %1386 = vmatprep.subr.mxu0 0.0
    %1387 = vmatpush1.msra.mxu0 %v1359
    %1388 = vmatprep.subr.mxu0 0.0
    %1389 = vmatpush1.msra.mxu0 %v1360
    %1390 = vmatprep.subr.mxu0 0.0
    %1391 = vmatpush1.msra.mxu0 %v1361
    %1392 = vmatprep.subr.mxu0 0.0
    %1393 = vmatpush1.msra.mxu0 %v1362
    %1394 = vmatprep.subr.mxu0 0.0
    %1395 = vmatpush1.msra.mxu0 %v1363
    %1396 = vmatprep.subr.mxu0 0.0
    %1397 = vmatpush1.msra.mxu0 %v1364
    %1398 = vmatprep.subr.mxu0 0.0
    %1399 = vmatpush1.msra.mxu0 %v1365
    %1400 = vmatprep.subr.mxu0 0.0
    %1401 = vmatpush1.msra.mxu0 %v1366
    %1402 = vmatprep.subr.mxu0 0.0
    %1403 = vmatpush1.msra.mxu0 0.0
    %1404 = vmatprep.subr.mxu0 0.0
    %1405 = vmatpush1.msra.mxu0 0.0
    %1406 = vmatprep.subr.mxu0 0.0
    %1407 = vmatpush1.msra.mxu0 0.0
    %1408 = vmatprep.subr.mxu0 0.0
    %1409 = vmatpush1.msra.mxu0 0.0
    %1410 = vmatprep.subr.mxu0 0.0
    %1411 = vmatpush1.msra.mxu0 0.0
    %1412 = vmatprep.subr.mxu0 0.0
    %1413 = vmatpush1.msra.mxu0 0.0
    %1414 = vmatprep.subr.mxu0 0.0
    %1415 = vmatpush1.msra.mxu0 0.0
    %1416 = vmatprep.subr.mxu0 0.0
    %1417 = vmatpush1.msra.mxu0 0.0
    %1418 = vmatprep.subr.mxu0 0.0
    %1419 = vmatpush1.msra.mxu0 0.0
    %1420 = vmatprep.subr.mxu0 0.0
    %1421 = vmatpush1.msra.mxu0 0.0
    %1422 = vmatprep.subr.mxu0 0.0
    %1423 = vmatpush1.msra.mxu0 0.0
    %1424 = vmatprep.subr.mxu0 0.0
    %1425 = vmatpush1.msra.mxu0 0.0
    %1426 = vmatprep.subr.mxu0 0.0
    %1427 = vmatpush1.msra.mxu0 0.0
    %1428 = vmatprep.subr.mxu0 0.0
    %1429 = vmatpush1.msra.mxu0 0.0
    %1430 = vmatprep.subr.mxu0 0.0
    %1431 = vmatpush1.msra.mxu0 0.0
    %1432 = vmatprep.subr.mxu0 0.0
    %1433 = vmatpush1.msra.mxu0 0.0
    %1434 = vmatprep.mubr.f32.mxu0 0.0
    %1435 = vmatmul.mubr.f32.gmra.mrb[0].mxu0 %v1084
    %v1436 = vpop.f32.mrb[0].mxu0
    %v1437 = vadd.f32 0.0, %v1436
    %v1438 = vpop.f32.mrb[0].mxu0
    %1439 = vmatprep.mubr.f32.mxu0 0.0
    %1440 = vmatmul.mubr.f32.gmra.mrb[0].mxu0 %v1085
    %v1441 = vpop.f32.mrb[0].mxu0
    %v1442 = vadd.f32 0.0, %v1441
    %v1443 = vpop.f32.mrb[0].mxu0
    %1444 = vmatprep.mubr.f32.mxu0 0.0
    %1445 = vmatmul.mubr.f32.gmra.mrb[0].mxu0 %v1086
    %v1446 = vpop.f32.mrb[0].mxu0
    %v1447 = vadd.f32 0.0, %v1446
    %v1448 = vpop.f32.mrb[0].mxu0
    %1449 = vmatprep.mubr.f32.mxu0 0.0
    %1450 = vmatmul.mubr.f32.gmra.mrb[0].mxu0 %v1087
    %v1451 = vpop.f32.mrb[0].mxu0
    %v1452 = vadd.f32 0.0, %v1451
    %v1453 = vpop.f32.mrb[0].mxu0
    %1454 = vdwg.mxu0
    %v1456 = vlaneseq
    %v1457 = vshrl.u32 %v1456, 7
    %v1458 = vsub.s32 0, %v1457
    %v1459 = vrot.slane %v1368, %v1458
    %v1461 = vmul.f32 %v1437, %v1459
    %v1462 = vmul.f32 %v1442, %v1459
    %v1463 = vmul.f32 %v1447, %v1459
    %v1464 = vmul.f32 %v1452, %v1459
    %1465 = vadd.xlane.f32.xlu0 %v1461
    %v1466 = vpop.xlane.xlu0 %1465
    %1467 = vadd.xlane.f32.xlu0 %v1462
    %v1468 = vpop.xlane.xlu0 %1467
    %1469 = vadd.xlane.f32.xlu0 %v1463
    %v1470 = vpop.xlane.xlu0 %1469
    %1471 = vadd.xlane.f32.xlu0 %v1464
    %v1472 = vpop.xlane.xlu0 %1471
    %v1474 = vlaneseq
    %v1475 = vshrl.u32 %v1474, 7
    %v1476 = vsub.s32 0, %v1475
    %v1477 = vrot.slane %v1367, %v1476
    %v1479 = vmul.f32 %v1437, %v1477
    %v1480 = vmul.f32 %v1442, %v1477
    %v1481 = vmul.f32 %v1447, %v1477
    %v1482 = vmul.f32 %v1452, %v1477
    %1483 = vadd.xlane.f32.xlu0 %v1479
    %v1484 = vpop.xlane.xlu0 %1483
    %1485 = vadd.xlane.f32.xlu0 %v1480
    %v1486 = vpop.xlane.xlu0 %1485
    %1487 = vadd.xlane.f32.xlu0 %v1481
    %v1488 = vpop.xlane.xlu0 %1487
    %1489 = vadd.xlane.f32.xlu0 %v1482
    %v1490 = vpop.xlane.xlu0 %1489
    %v1492 = vsel %vm395, %v1484, 0
    %v1495 = vsel %vm395, %v1486, 0
    %v1498 = vsel %vm395, %v1488, 0
    %v1501 = vsel %vm395, %v1490, 0
    %1503 = vmatprep.subr.mxu0 0.0
    %1504 = vmatpush1.xpose.msra.mxu0 %v1492
    %1505 = vmatprep.subr.mxu0 0.0
    %1506 = vmatpush1.xpose.msra.mxu0 %v1495
    %1507 = vmatprep.subr.mxu0 0.0
    %1508 = vmatpush1.xpose.msra.mxu0 %v1498
    %1509 = vmatprep.subr.mxu0 0.0
    %1510 = vmatpush1.xpose.msra.mxu0 %v1501
    %1511 = vmatprep.subr.mxu0 0.0
    %1512 = vmatpush1.xpose.msra.mxu0 0.0
    %1513 = vmatprep.subr.mxu0 0.0
    %1514 = vmatpush1.xpose.msra.mxu0 0.0
    %1515 = vmatprep.subr.mxu0 0.0
    %1516 = vmatpush1.xpose.msra.mxu0 0.0
    %1517 = vmatprep.subr.mxu0 0.0
    %1518 = vmatpush1.xpose.msra.mxu0 0.0
    %1519 = vmatprep.subr.mxu0 0.0
    %1520 = vmatpush1.xpose.msra.mxu0 0.0
    %1521 = vmatprep.subr.mxu0 0.0
    %1522 = vmatpush1.xpose.msra.mxu0 0.0
    %1523 = vmatprep.subr.mxu0 0.0
    %1524 = vmatpush1.xpose.msra.mxu0 0.0
    %1525 = vmatprep.subr.mxu0 0.0
    %1526 = vmatpush1.xpose.msra.mxu0 0.0
    %1527 = vmatprep.subr.mxu0 0.0
    %1528 = vmatpush1.xpose.msra.mxu0 0.0
    %1529 = vmatprep.subr.mxu0 0.0
    %1530 = vmatpush1.xpose.msra.mxu0 0.0
    %1531 = vmatprep.subr.mxu0 0.0
    %1532 = vmatpush1.xpose.msra.mxu0 0.0
    %1533 = vmatprep.subr.mxu0 0.0
    %1534 = vmatpush1.xpose.msra.mxu0 0.0
    %1535 = vmatprep.subr.mxu0 0.0
    %1536 = vmatpush1.xpose.msra.mxu0 0.0
    %1537 = vmatprep.subr.mxu0 0.0
    %1538 = vmatpush1.xpose.msra.mxu0 0.0
    %1539 = vmatprep.subr.mxu0 0.0
    %1540 = vmatpush1.xpose.msra.mxu0 0.0
    %1541 = vmatprep.subr.mxu0 0.0
    %1542 = vmatpush1.xpose.msra.mxu0 0.0
    %1543 = vmatprep.subr.mxu0 0.0
    %1544 = vmatpush1.xpose.msra.mxu0 0.0
    %1545 = vmatprep.subr.mxu0 0.0
    %1546 = vmatpush1.xpose.msra.mxu0 0.0
    %1547 = vmatprep.subr.mxu0 0.0
    %1548 = vmatpush1.xpose.msra.mxu0 0.0
    %1549 = vmatprep.subr.mxu0 0.0
    %1550 = vmatpush1.xpose.msra.mxu0 0.0
    %1551 = vmatprep.subr.mxu0 0.0
    %1552 = vmatpush1.xpose.msra.mxu0 0.0
    %1553 = vmatprep.subr.mxu0 0.0
    %1554 = vmatpush1.xpose.msra.mxu0 0.0
    %1555 = vmatprep.subr.mxu0 0.0
    %1556 = vmatpush1.xpose.msra.mxu0 0.0
    %1557 = vmatprep.subr.mxu0 0.0
    %1558 = vmatpush1.xpose.msra.mxu0 0.0
    %1559 = vmatprep.subr.mxu0 0.0
    %1560 = vmatpush1.xpose.msra.mxu0 0.0
    %1561 = vmatprep.subr.mxu0 0.0
    %1562 = vmatpush1.xpose.msra.mxu0 0.0
    %1563 = vmatprep.subr.mxu0 0.0
    %1564 = vmatpush1.xpose.msra.mxu0 0.0
    %1565 = vmatprep.subr.mxu0 0.0
    %1566 = vmatpush1.xpose.msra.mxu0 0.0
    %1567 = vmatprep.mubr.f32.mxu0 0.0
    %1568 = vmatmul.mubr.f32.gmra.mrb[0].mxu0 %v397
    %v1569 = vpop.f32.mrb[0].mxu0
    %v1570 = vadd.f32 0.0, %v1569
    %v1571 = vpop.f32.mrb[0].mxu0
    %1572 = vdwg.mxu0
    %v1573 = vlaneseq
    %v1574 = vshrl.u32 %v1573, 7
    %v1575 = vsub.s32 0, %v1574
    %v1576 = vrot.slane %v1570, %v1575
    %v1577 = vadd.f32 %v1466, %v1576
    %v1578 = vadd.f32 %v1468, %v1576
    %v1579 = vadd.f32 %v1470, %v1576
    %v1580 = vadd.f32 %v1472, %v1576
    %vm1581 = vcmp.gt.f32.partialorder %v1577, 0.0
    %vm1582 = vcmp.gt.f32.partialorder %v1578, 0.0
    %vm1583 = vcmp.gt.f32.partialorder %v1579, 0.0
    %vm1584 = vcmp.gt.f32.partialorder %v1580, 0.0
    %v1585 = vmul.f32 %v1577, 0.2
    %v1586 = vmul.f32 %v1578, 0.2
    %v1587 = vmul.f32 %v1579, 0.2
    %v1588 = vmul.f32 %v1580, 0.2
    %v1589 = vsel %vm1581, %v1577, %v1585
    %v1590 = vsel %vm1582, %v1578, %v1586
    %v1591 = vsel %vm1583, %v1579, %v1587
    %v1592 = vsel %vm1584, %v1580, %v1588
    %1593 = vmatprep.subr.mxu0 0.0
    %1594 = vmatpush1.xpose.msra.mxu0 %v1089
    %1595 = vmatprep.subr.mxu0 0.0
    %1596 = vmatpush1.xpose.msra.mxu0 %v1092
    %1597 = vmatprep.subr.mxu0 0.0
    %1598 = vmatpush1.xpose.msra.mxu0 %v1095
    %1599 = vmatprep.subr.mxu0 0.0
    %1600 = vmatpush1.xpose.msra.mxu0 %v1098
    %1601 = vmatprep.subr.mxu0 0.0
    %1602 = vmatpush1.xpose.msra.mxu0 0.0
    %1603 = vmatprep.subr.mxu0 0.0
    %1604 = vmatpush1.xpose.msra.mxu0 0.0
    %1605 = vmatprep.subr.mxu0 0.0
    %1606 = vmatpush1.xpose.msra.mxu0 0.0
    %1607 = vmatprep.subr.mxu0 0.0
    %1608 = vmatpush1.xpose.msra.mxu0 0.0
    %1609 = vmatprep.subr.mxu0 0.0
    %1610 = vmatpush1.xpose.msra.mxu0 0.0
    %1611 = vmatprep.subr.mxu0 0.0
    %1612 = vmatpush1.xpose.msra.mxu0 0.0
    %1613 = vmatprep.subr.mxu0 0.0
    %1614 = vmatpush1.xpose.msra.mxu0 0.0
    %1615 = vmatprep.subr.mxu0 0.0
    %1616 = vmatpush1.xpose.msra.mxu0 0.0
    %1617 = vmatprep.subr.mxu0 0.0
    %1618 = vmatpush1.xpose.msra.mxu0 0.0
    %1619 = vmatprep.subr.mxu0 0.0
    %1620 = vmatpush1.xpose.msra.mxu0 0.0
    %1621 = vmatprep.subr.mxu0 0.0
    %1622 = vmatpush1.xpose.msra.mxu0 0.0
    %1623 = vmatprep.subr.mxu0 0.0
    %1624 = vmatpush1.xpose.msra.mxu0 0.0
    %1625 = vmatprep.subr.mxu0 0.0
    %1626 = vmatpush1.xpose.msra.mxu0 0.0
    %1627 = vmatprep.subr.mxu0 0.0
    %1628 = vmatpush1.xpose.msra.mxu0 0.0
    %1629 = vmatprep.subr.mxu0 0.0
    %1630 = vmatpush1.xpose.msra.mxu0 0.0
    %1631 = vmatprep.subr.mxu0 0.0
    %1632 = vmatpush1.xpose.msra.mxu0 0.0
    %1633 = vmatprep.subr.mxu0 0.0
    %1634 = vmatpush1.xpose.msra.mxu0 0.0
    %1635 = vmatprep.subr.mxu0 0.0
    %1636 = vmatpush1.xpose.msra.mxu0 0.0
    %1637 = vmatprep.subr.mxu0 0.0
    %1638 = vmatpush1.xpose.msra.mxu0 0.0
    %1639 = vmatprep.subr.mxu0 0.0
    %1640 = vmatpush1.xpose.msra.mxu0 0.0
    %1641 = vmatprep.subr.mxu0 0.0
    %1642 = vmatpush1.xpose.msra.mxu0 0.0
    %1643 = vmatprep.subr.mxu0 0.0
    %1644 = vmatpush1.xpose.msra.mxu0 0.0
    %1645 = vmatprep.subr.mxu0 0.0
    %1646 = vmatpush1.xpose.msra.mxu0 0.0
    %1647 = vmatprep.subr.mxu0 0.0
    %1648 = vmatpush1.xpose.msra.mxu0 0.0
    %1649 = vmatprep.subr.mxu0 0.0
    %1650 = vmatpush1.xpose.msra.mxu0 0.0
    %1651 = vmatprep.subr.mxu0 0.0
    %1652 = vmatpush1.xpose.msra.mxu0 0.0
    %1653 = vmatprep.subr.mxu0 0.0
    %1654 = vmatpush1.xpose.msra.mxu0 0.0
    %1655 = vmatprep.subr.mxu0 0.0
    %1656 = vmatpush1.xpose.msra.mxu0 0.0
    %1657 = vmatprep.mubr.f32.mxu0 0.0
    %1658 = vmatmul.mubr.f32.gmra.mrb[0].mxu0 %v1089
    %v1659 = vpop.f32.mrb[0].mxu0
    %v1660 = vadd.f32 0.0, %v1659
    %v1661 = vpop.f32.mrb[0].mxu0
    %1662 = vmatprep.mubr.f32.mxu0 0.0
    %1663 = vmatmul.mubr.f32.gmra.mrb[0].mxu0 %v1092
    %v1664 = vpop.f32.mrb[0].mxu0
    %v1665 = vadd.f32 0.0, %v1664
    %v1666 = vpop.f32.mrb[0].mxu0
    %1667 = vmatprep.mubr.f32.mxu0 0.0
    %1668 = vmatmul.mubr.f32.gmra.mrb[0].mxu0 %v1095
    %v1669 = vpop.f32.mrb[0].mxu0
    %v1670 = vadd.f32 0.0, %v1669
    %v1671 = vpop.f32.mrb[0].mxu0
    %1672 = vmatprep.mubr.f32.mxu0 0.0
    %1673 = vmatmul.mubr.f32.gmra.mrb[0].mxu0 %v1098
    %v1674 = vpop.f32.mrb[0].mxu0
    %v1675 = vadd.f32 0.0, %v1674
    %v1676 = vpop.f32.mrb[0].mxu0
    %1677 = vdwg.mxu0
    %v1678 = vmul.f32 %v228, %v1660
    %v1679 = vmul.f32 %v229, %v1665
    %v1680 = vmul.f32 %v230, %v1670
    %v1681 = vmul.f32 %v231, %v1675
    %v1682 = vmul.f32 %v1678, %v590
    %v1683 = vmul.f32 %v1679, %v591
    %v1684 = vmul.f32 %v1680, %v592
    %v1685 = vmul.f32 %v1681, %v593
    %v1686 = vmul.f32 %v252, %v1072
    %v1687 = vmul.f32 %v253, %v1073
    %v1688 = vmul.f32 %v254, %v1074
    %v1689 = vmul.f32 %v255, %v1075
    %v1690 = vadd.f32 %v1682, %v1686
    %v1691 = vadd.f32 %v1683, %v1687
    %v1692 = vadd.f32 %v1684, %v1688
    %v1693 = vadd.f32 %v1685, %v1689
    %vm1694 = vcmp.gt.f32.partialorder %v1690, 0.0
    %vm1695 = vcmp.gt.f32.partialorder %v1691, 0.0
    %vm1696 = vcmp.gt.f32.partialorder %v1692, 0.0
    %vm1697 = vcmp.gt.f32.partialorder %v1693, 0.0
    %v1698 = vsel %vm1694, %v1589, -1e+30
    %v1699 = vsel %vm1695, %v1590, -1e+30
    %v1700 = vsel %vm1696, %v1591, -1e+30
    %v1701 = vsel %vm1697, %v1592, -1e+30
    %v1702 = vsel %vm610, %v1698, -inf
    %1703 = vmax.xlane.f32.xlu0 %v1702
    %v1704 = vpop.xlane.xlu0 %1703
    %v1705 = vsel %vm610, %v1699, -inf
    %1706 = vmax.xlane.f32.xlu0 %v1705
    %v1707 = vpop.xlane.xlu0 %1706
    %v1708 = vsel %vm610, %v1700, -inf
    %1709 = vmax.xlane.f32.xlu0 %v1708
    %v1710 = vpop.xlane.xlu0 %1709
    %v1711 = vsel %vm610, %v1701, -inf
    %1712 = vmax.xlane.f32.xlu0 %v1711
    %v1713 = vpop.xlane.xlu0 %1712
    %v1714 = vsub.f32 %v1698, %v1704
    %v1715 = vsub.f32 %v1699, %v1707
    %v1716 = vsub.f32 %v1700, %v1710
    %v1717 = vsub.f32 %v1701, %v1713
    %v1718 = vmul.f32 %v1714, 1.442695
    %v1719 = vpow.pop %v1718
    %v1720 = vmul.f32 %v1715, 1.442695
    %v1721 = vpow.pop %v1720
    %v1722 = vmul.f32 %v1716, 1.442695
    %v1723 = vpow.pop %v1722
    %v1724 = vmul.f32 %v1717, 1.442695
    %v1725 = vpow.pop %v1724
    %v1726 = vmul.f32 %v1719, %v1690
    %v1727 = vmul.f32 %v1721, %v1691
    %v1728 = vmul.f32 %v1723, %v1692
    %v1729 = vmul.f32 %v1725, %v1693
    %v1730 = vsel %vm610, %v1726, 0.0
    %1731 = vadd.xlane.f32.xlu0 %v1730
    %v1732 = vpop.xlane.xlu0 %1731
    %v1733 = vsel %vm610, %v1727, 0.0
    %1734 = vadd.xlane.f32.xlu0 %v1733
    %v1735 = vpop.xlane.xlu0 %1734
    %v1736 = vsel %vm610, %v1728, 0.0
    %1737 = vadd.xlane.f32.xlu0 %v1736
    %v1738 = vpop.xlane.xlu0 %1737
    %v1739 = vsel %vm610, %v1729, 0.0
    %1740 = vadd.xlane.f32.xlu0 %v1739
    %v1741 = vpop.xlane.xlu0 %1740
    %v1742 = vmax.f32 %v1732, 1e-30
    %v1743 = vmax.f32 %v1735, 1e-30
    %v1744 = vmax.f32 %v1738, 1e-30
    %v1745 = vmax.f32 %v1741, 1e-30
    %v1746 = vrcp.pop %v1742
    %v1747 = vrcp.pop %v1743
    %v1748 = vrcp.pop %v1744
    %v1749 = vrcp.pop %v1745
    %v1750 = vmul.f32 %v1726, %v1746
    %v1751 = vmul.f32 %v1727, %v1747
    %v1752 = vmul.f32 %v1728, %v1748
    %v1753 = vmul.f32 %v1729, %v1749
    %v1755 = vlaneseq
    %v1756 = vshrl.u32 %v1755, 7
    %v1757 = vsub.s32 0, %v1756
    %v1758 = vrot.slane %v1369, %v1757
    %v1761 = vsel %vm610, %v1750, 0
    %v1764 = vsel %vm610, %v1751, 0
    %v1767 = vsel %vm610, %v1752, 0
    %v1770 = vsel %vm610, %v1753, 0
    %1772 = vmatprep.subr.mxu0 0.0
    %1773 = vmatpush1.msra.mxu0 %v1437
    %1774 = vmatprep.subr.mxu0 0.0
    %1775 = vmatpush1.msra.mxu0 %v1442
    %1776 = vmatprep.subr.mxu0 0.0
    %1777 = vmatpush1.msra.mxu0 %v1447
    %1778 = vmatprep.subr.mxu0 0.0
    %1779 = vmatpush1.msra.mxu0 %v1452
    %1780 = vmatprep.subr.mxu0 0.0
    %1781 = vmatpush1.msra.mxu0 0.0
    %1782 = vmatprep.subr.mxu0 0.0
    %1783 = vmatpush1.msra.mxu0 0.0
    %1784 = vmatprep.subr.mxu0 0.0
    %1785 = vmatpush1.msra.mxu0 0.0
    %1786 = vmatprep.subr.mxu0 0.0
    %1787 = vmatpush1.msra.mxu0 0.0
    %1788 = vmatprep.subr.mxu0 0.0
    %1789 = vmatpush1.msra.mxu0 0.0
    %1790 = vmatprep.subr.mxu0 0.0
    %1791 = vmatpush1.msra.mxu0 0.0
    %1792 = vmatprep.subr.mxu0 0.0
    %1793 = vmatpush1.msra.mxu0 0.0
    %1794 = vmatprep.subr.mxu0 0.0
    %1795 = vmatpush1.msra.mxu0 0.0
    %1796 = vmatprep.subr.mxu0 0.0
    %1797 = vmatpush1.msra.mxu0 0.0
    %1798 = vmatprep.subr.mxu0 0.0
    %1799 = vmatpush1.msra.mxu0 0.0
    %1800 = vmatprep.subr.mxu0 0.0
    %1801 = vmatpush1.msra.mxu0 0.0
    %1802 = vmatprep.subr.mxu0 0.0
    %1803 = vmatpush1.msra.mxu0 0.0
    %1804 = vmatprep.subr.mxu0 0.0
    %1805 = vmatpush1.msra.mxu0 0.0
    %1806 = vmatprep.subr.mxu0 0.0
    %1807 = vmatpush1.msra.mxu0 0.0
    %1808 = vmatprep.subr.mxu0 0.0
    %1809 = vmatpush1.msra.mxu0 0.0
    %1810 = vmatprep.subr.mxu0 0.0
    %1811 = vmatpush1.msra.mxu0 0.0
    %1812 = vmatprep.subr.mxu0 0.0
    %1813 = vmatpush1.msra.mxu0 0.0
    %1814 = vmatprep.subr.mxu0 0.0
    %1815 = vmatpush1.msra.mxu0 0.0
    %1816 = vmatprep.subr.mxu0 0.0
    %1817 = vmatpush1.msra.mxu0 0.0
    %1818 = vmatprep.subr.mxu0 0.0
    %1819 = vmatpush1.msra.mxu0 0.0
    %1820 = vmatprep.subr.mxu0 0.0
    %1821 = vmatpush1.msra.mxu0 0.0
    %1822 = vmatprep.subr.mxu0 0.0
    %1823 = vmatpush1.msra.mxu0 0.0
    %1824 = vmatprep.subr.mxu0 0.0
    %1825 = vmatpush1.msra.mxu0 0.0
    %1826 = vmatprep.subr.mxu0 0.0
    %1827 = vmatpush1.msra.mxu0 0.0
    %1828 = vmatprep.subr.mxu0 0.0
    %1829 = vmatpush1.msra.mxu0 0.0
    %1830 = vmatprep.subr.mxu0 0.0
    %1831 = vmatpush1.msra.mxu0 0.0
    %1832 = vmatprep.subr.mxu0 0.0
    %1833 = vmatpush1.msra.mxu0 0.0
    %1834 = vmatprep.subr.mxu0 0.0
    %1835 = vmatpush1.msra.mxu0 0.0
    %1836 = vmatprep.mubr.f32.mxu0 0.0
    %1837 = vmatmul.mubr.f32.gmra.mrb[0].mxu0 %v1761
    %v1838 = vpop.f32.mrb[0].mxu0
    %v1839 = vadd.f32 %v1758, %v1838
    %v1840 = vpop.f32.mrb[0].mxu0
    %1841 = vmatprep.mubr.f32.mxu0 0.0
    %1842 = vmatmul.mubr.f32.gmra.mrb[0].mxu0 %v1764
    %v1843 = vpop.f32.mrb[0].mxu0
    %v1844 = vadd.f32 %v1758, %v1843
    %v1845 = vpop.f32.mrb[0].mxu0
    %1846 = vmatprep.mubr.f32.mxu0 0.0
    %1847 = vmatmul.mubr.f32.gmra.mrb[0].mxu0 %v1767
    %v1848 = vpop.f32.mrb[0].mxu0
    %v1849 = vadd.f32 %v1758, %v1848
    %v1850 = vpop.f32.mrb[0].mxu0
    %1851 = vmatprep.mubr.f32.mxu0 0.0
    %1852 = vmatmul.mubr.f32.gmra.mrb[0].mxu0 %v1770
    %v1853 = vpop.f32.mrb[0].mxu0
    %v1854 = vadd.f32 %v1758, %v1853
    %v1855 = vpop.f32.mrb[0].mxu0
    %1856 = vdwg.mxu0
    %v1857 = vmax.f32 %v1839, 0.0
    %v1858 = vmax.f32 %v1844, 0.0
    %v1859 = vmax.f32 %v1849, 0.0
    %v1860 = vmax.f32 %v1854, 0.0
    %v1861 = vmul.f32 %v1857, %v1072
    %v1862 = vmul.f32 %v1858, %v1073
    %v1863 = vmul.f32 %v1859, %v1074
    %v1864 = vmul.f32 %v1860, %v1075
    %v1865 = vld [vmem:[%s13] sm:$0x1]
    %v1866 = vmul.f32 %v1865, %v1865
    %v1867 = vsel %vm772, %v1866, 0.0
    %1868 = vadd.xlane.f32.xlu0 %v1867
    %v1869 = vpop.xlane.xlu0 %1868
    %v1870 = vrsqrt.pop %v1869
    %v1872 = vlaneseq
    %v1873 = vshrl.u32 %v1872, 7
    %v1874 = vsub.s32 0, %v1873
    %v1875 = vrot.slane %v1865, %v1874
    %v1877 = vmul.f32 %v1861, %v1875
    %v1878 = vmul.f32 %v1862, %v1875
    %v1879 = vmul.f32 %v1863, %v1875
    %v1880 = vmul.f32 %v1864, %v1875
    %1881 = vadd.xlane.f32.xlu0 %v1877
    %v1882 = vpop.xlane.xlu0 %1881
    %1883 = vadd.xlane.f32.xlu0 %v1878
    %v1884 = vpop.xlane.xlu0 %1883
    %1885 = vadd.xlane.f32.xlu0 %v1879
    %v1886 = vpop.xlane.xlu0 %1885
    %1887 = vadd.xlane.f32.xlu0 %v1880
    %v1888 = vpop.xlane.xlu0 %1887
    %v1889 = vlaneseq
    %v1890 = vshrl.u32 %v1889, 7
    %v1891 = vsub.s32 0, %v1890
    %v1892 = vrot.slane %v1870, %v1891
    %v1893 = vmul.f32 %v1882, %v1892
    %v1894 = vmul.f32 %v1884, %v1892
    %v1895 = vmul.f32 %v1886, %v1892
    %v1896 = vmul.f32 %v1888, %v1892
    %v1898 = vsel %vm395, %v1893, 0
    %v1901 = vsel %vm395, %v1894, 0
    %v1904 = vsel %vm395, %v1895, 0
    %v1907 = vsel %vm395, %v1896, 0
    %1909 = vmatprep.subr.mxu0 0.0
    %1910 = vmatpush1.xpose.msra.mxu0 %v1898
    %1911 = vmatprep.subr.mxu0 0.0
    %1912 = vmatpush1.xpose.msra.mxu0 %v1901
    %1913 = vmatprep.subr.mxu0 0.0
    %1914 = vmatpush1.xpose.msra.mxu0 %v1904
    %1915 = vmatprep.subr.mxu0 0.0
    %1916 = vmatpush1.xpose.msra.mxu0 %v1907
    %1917 = vmatprep.subr.mxu0 0.0
    %1918 = vmatpush1.xpose.msra.mxu0 0.0
    %1919 = vmatprep.subr.mxu0 0.0
    %1920 = vmatpush1.xpose.msra.mxu0 0.0
    %1921 = vmatprep.subr.mxu0 0.0
    %1922 = vmatpush1.xpose.msra.mxu0 0.0
    %1923 = vmatprep.subr.mxu0 0.0
    %1924 = vmatpush1.xpose.msra.mxu0 0.0
    %1925 = vmatprep.subr.mxu0 0.0
    %1926 = vmatpush1.xpose.msra.mxu0 0.0
    %1927 = vmatprep.subr.mxu0 0.0
    %1928 = vmatpush1.xpose.msra.mxu0 0.0
    %1929 = vmatprep.subr.mxu0 0.0
    %1930 = vmatpush1.xpose.msra.mxu0 0.0
    %1931 = vmatprep.subr.mxu0 0.0
    %1932 = vmatpush1.xpose.msra.mxu0 0.0
    %1933 = vmatprep.subr.mxu0 0.0
    %1934 = vmatpush1.xpose.msra.mxu0 0.0
    %1935 = vmatprep.subr.mxu0 0.0
    %1936 = vmatpush1.xpose.msra.mxu0 0.0
    %1937 = vmatprep.subr.mxu0 0.0
    %1938 = vmatpush1.xpose.msra.mxu0 0.0
    %1939 = vmatprep.subr.mxu0 0.0
    %1940 = vmatpush1.xpose.msra.mxu0 0.0
    %1941 = vmatprep.subr.mxu0 0.0
    %1942 = vmatpush1.xpose.msra.mxu0 0.0
    %1943 = vmatprep.subr.mxu0 0.0
    %1944 = vmatpush1.xpose.msra.mxu0 0.0
    %1945 = vmatprep.subr.mxu0 0.0
    %1946 = vmatpush1.xpose.msra.mxu0 0.0
    %1947 = vmatprep.subr.mxu0 0.0
    %1948 = vmatpush1.xpose.msra.mxu0 0.0
    %1949 = vmatprep.subr.mxu0 0.0
    %1950 = vmatpush1.xpose.msra.mxu0 0.0
    %1951 = vmatprep.subr.mxu0 0.0
    %1952 = vmatpush1.xpose.msra.mxu0 0.0
    %1953 = vmatprep.subr.mxu0 0.0
    %1954 = vmatpush1.xpose.msra.mxu0 0.0
    %1955 = vmatprep.subr.mxu0 0.0
    %1956 = vmatpush1.xpose.msra.mxu0 0.0
    %1957 = vmatprep.subr.mxu0 0.0
    %1958 = vmatpush1.xpose.msra.mxu0 0.0
    %1959 = vmatprep.subr.mxu0 0.0
    %1960 = vmatpush1.xpose.msra.mxu0 0.0
    %1961 = vmatprep.subr.mxu0 0.0
    %1962 = vmatpush1.xpose.msra.mxu0 0.0
    %1963 = vmatprep.subr.mxu0 0.0
    %1964 = vmatpush1.xpose.msra.mxu0 0.0
    %1965 = vmatprep.subr.mxu0 0.0
    %1966 = vmatpush1.xpose.msra.mxu0 0.0
    %1967 = vmatprep.subr.mxu0 0.0
    %1968 = vmatpush1.xpose.msra.mxu0 0.0
    %1969 = vmatprep.subr.mxu0 0.0
    %1970 = vmatpush1.xpose.msra.mxu0 0.0
    %1971 = vmatprep.subr.mxu0 0.0
    %1972 = vmatpush1.xpose.msra.mxu0 0.0
    %1973 = vmatprep.mubr.f32.mxu0 0.0
    %1974 = vmatmul.mubr.f32.gmra.mrb[0].mxu0 %v397
    %v1975 = vpop.f32.mrb[0].mxu0
    %v1976 = vadd.f32 0.0, %v1975
    %v1977 = vpop.f32.mrb[0].mxu0
    %1978 = vdwg.mxu0
    %v1980 = vsel %vm885, %v1255, 0
    %v1983 = vsel %vm885, %v1256, 0
    %v1986 = vsel %vm885, %v1257, 0
    %v1989 = vsel %vm885, %v1258, 0
    %1991 = vmatprep.subr.mxu0 0.0
    %1992 = vmatpush1.xpose.msra.mxu0 %v1980
    %1993 = vmatprep.subr.mxu0 0.0
    %1994 = vmatpush1.xpose.msra.mxu0 %v1983
    %1995 = vmatprep.subr.mxu0 0.0
    %1996 = vmatpush1.xpose.msra.mxu0 %v1986
    %1997 = vmatprep.subr.mxu0 0.0
    %1998 = vmatpush1.xpose.msra.mxu0 %v1989
    %1999 = vmatprep.subr.mxu0 0.0
    %2000 = vmatpush1.xpose.msra.mxu0 0.0
    %2001 = vmatprep.subr.mxu0 0.0
    %2002 = vmatpush1.xpose.msra.mxu0 0.0
    %2003 = vmatprep.subr.mxu0 0.0
    %2004 = vmatpush1.xpose.msra.mxu0 0.0
    %2005 = vmatprep.subr.mxu0 0.0
    %2006 = vmatpush1.xpose.msra.mxu0 0.0
    %2007 = vmatprep.subr.mxu0 0.0
    %2008 = vmatpush1.xpose.msra.mxu0 0.0
    %2009 = vmatprep.subr.mxu0 0.0
    %2010 = vmatpush1.xpose.msra.mxu0 0.0
    %2011 = vmatprep.subr.mxu0 0.0
    %2012 = vmatpush1.xpose.msra.mxu0 0.0
    %2013 = vmatprep.subr.mxu0 0.0
    %2014 = vmatpush1.xpose.msra.mxu0 0.0
    %2015 = vmatprep.subr.mxu0 0.0
    %2016 = vmatpush1.xpose.msra.mxu0 0.0
    %2017 = vmatprep.subr.mxu0 0.0
    %2018 = vmatpush1.xpose.msra.mxu0 0.0
    %2019 = vmatprep.subr.mxu0 0.0
    %2020 = vmatpush1.xpose.msra.mxu0 0.0
    %2021 = vmatprep.subr.mxu0 0.0
    %2022 = vmatpush1.xpose.msra.mxu0 0.0
    %2023 = vmatprep.subr.mxu0 0.0
    %2024 = vmatpush1.xpose.msra.mxu0 0.0
    %2025 = vmatprep.subr.mxu0 0.0
    %2026 = vmatpush1.xpose.msra.mxu0 0.0
    %2027 = vmatprep.subr.mxu0 0.0
    %2028 = vmatpush1.xpose.msra.mxu0 0.0
    %2029 = vmatprep.subr.mxu0 0.0
    %2030 = vmatpush1.xpose.msra.mxu0 0.0
    %2031 = vmatprep.subr.mxu0 0.0
    %2032 = vmatpush1.xpose.msra.mxu0 0.0
    %2033 = vmatprep.subr.mxu0 0.0
    %2034 = vmatpush1.xpose.msra.mxu0 0.0
    %2035 = vmatprep.subr.mxu0 0.0
    %2036 = vmatpush1.xpose.msra.mxu0 0.0
    %2037 = vmatprep.subr.mxu0 0.0
    %2038 = vmatpush1.xpose.msra.mxu0 0.0
    %2039 = vmatprep.subr.mxu0 0.0
    %2040 = vmatpush1.xpose.msra.mxu0 0.0
    %2041 = vmatprep.subr.mxu0 0.0
    %2042 = vmatpush1.xpose.msra.mxu0 0.0
    %2043 = vmatprep.subr.mxu0 0.0
    %2044 = vmatpush1.xpose.msra.mxu0 0.0
    %2045 = vmatprep.subr.mxu0 0.0
    %2046 = vmatpush1.xpose.msra.mxu0 0.0
    %2047 = vmatprep.subr.mxu0 0.0
    %2048 = vmatpush1.xpose.msra.mxu0 0.0
    %2049 = vmatprep.subr.mxu0 0.0
    %2050 = vmatpush1.xpose.msra.mxu0 0.0
    %2051 = vmatprep.subr.mxu0 0.0
    %2052 = vmatpush1.xpose.msra.mxu0 0.0
    %2053 = vmatprep.subr.mxu0 0.0
    %2054 = vmatpush1.xpose.msra.mxu0 0.0
    %2055 = vmatprep.mubr.f32.mxu0 0.0
    %2056 = vmatmul.mubr.f32.gmra.mrb[0].mxu0 %v1980
    %v2057 = vpop.f32.mrb[0].mxu0
    %v2058 = vadd.f32 0.0, %v2057
    %v2059 = vpop.f32.mrb[0].mxu0
    %2060 = vmatprep.mubr.f32.mxu0 0.0
    %2061 = vmatmul.mubr.f32.gmra.mrb[0].mxu0 %v1983
    %v2062 = vpop.f32.mrb[0].mxu0
    %v2063 = vadd.f32 0.0, %v2062
    %v2064 = vpop.f32.mrb[0].mxu0
    %2065 = vmatprep.mubr.f32.mxu0 0.0
    %2066 = vmatmul.mubr.f32.gmra.mrb[0].mxu0 %v1986
    %v2067 = vpop.f32.mrb[0].mxu0
    %v2068 = vadd.f32 0.0, %v2067
    %v2069 = vpop.f32.mrb[0].mxu0
    %2070 = vmatprep.mubr.f32.mxu0 0.0
    %2071 = vmatmul.mubr.f32.gmra.mrb[0].mxu0 %v1989
    %v2072 = vpop.f32.mrb[0].mxu0
    %v2073 = vadd.f32 0.0, %v2072
    %v2074 = vpop.f32.mrb[0].mxu0
    %2075 = vdwg.mxu0
    %v2076 = vlaneseq
    %v2077 = vshrl.u32 %v2076, 7
    %v2078 = vsub.s32 0, %v2077
    %v2079 = vrot.slane %v1976, %v2078
    %vm2080 = vcmp.gt.f32.partialorder %v2079, %v1893
    %vm2081 = vcmp.gt.f32.partialorder %v2079, %v1894
    %vm2082 = vcmp.gt.f32.partialorder %v2079, %v1895
    %vm2083 = vcmp.gt.f32.partialorder %v2079, %v1896
    %vm2084 = vcmp.eq.f32.partialorder %v2079, %v1893
    %vm2085 = vcmp.eq.f32.partialorder %v2079, %v1894
    %vm2086 = vcmp.eq.f32.partialorder %v2079, %v1895
    %vm2087 = vcmp.eq.f32.partialorder %v2079, %v1896
    %vm2088 = vmand %vm2084, %vm995
    %vm2089 = vmand %vm2085, %vm996
    %vm2090 = vmand %vm2086, %vm997
    %vm2091 = vmand %vm2087, %vm998
    %vm2092 = vmor %vm2080, %vm2088
    %vm2093 = vmor %vm2081, %vm2089
    %vm2094 = vmor %vm2082, %vm2090
    %vm2095 = vmor %vm2083, %vm2091
    %v2096 = vsel %vm2092, 1, 0
    %v2097 = vsel %vm2093, 1, 0
    %v2098 = vsel %vm2094, 1, 0
    %v2099 = vsel %vm2095, 1, 0
    %v2100 = vcvt.s32.f32 %v2096
    %v2101 = vcvt.s32.f32 %v2097
    %v2102 = vcvt.s32.f32 %v2098
    %v2103 = vcvt.s32.f32 %v2099
    %v2104 = vmul.f32 %v2058, %v2100
    %v2105 = vmul.f32 %v2063, %v2101
    %v2106 = vmul.f32 %v2068, %v2102
    %v2107 = vmul.f32 %v2073, %v2103
    %v2108 = vsel %vm610, %v2104, 0.0
    %2109 = vadd.xlane.f32.xlu0 %v2108
    %v2110 = vpop.xlane.xlu0 %2109
    %v2111 = vsel %vm610, %v2105, 0.0
    %2112 = vadd.xlane.f32.xlu0 %v2111
    %v2113 = vpop.xlane.xlu0 %2112
    %v2114 = vsel %vm610, %v2106, 0.0
    %2115 = vadd.xlane.f32.xlu0 %v2114
    %v2116 = vpop.xlane.xlu0 %2115
    %v2117 = vsel %vm610, %v2107, 0.0
    %2118 = vadd.xlane.f32.xlu0 %v2117
    %v2119 = vpop.xlane.xlu0 %2118
    %v2120 = vsel %vm885, %v1255, 0.0
    %v2121 = vsel %vm885, %v1256, 0.0
    %v2122 = vadd.f32 %v2120, %v2121
    %v2123 = vsel %vm885, %v1257, 0.0
    %v2124 = vadd.f32 %v2122, %v2123
    %v2125 = vsel %vm885, %v1258, 0.0
    %v2126 = vadd.f32 %v2124, %v2125
    %v2127 = vrot.slane %v2126, 4
    %v2128 = vadd.f32 %v2126, %v2127
    %v2129 = vrot.slane %v2128, 2
    %v2130 = vadd.f32 %v2128, %v2129
    %v2131 = vrot.slane %v2130, 1
    %v2132 = vadd.f32 %v2130, %v2131
    %v2133 = vmul.f32 %v2132, 0.8
    %v2134 = vsub.f32 %v2133, 0.0001
    %v2135 = vceil.f32 %v2134
    %v2136 = vmul.f32 %v1255, %v2135
    %v2137 = vmul.f32 %v1256, %v2135
    %v2138 = vmul.f32 %v1257, %v2135
    %v2139 = vmul.f32 %v1258, %v2135
    %v2140 = vsel %vm885, %v2136, 0.0
    %2141 = vadd.xlane.f32.xlu0 %v2140
    %v2142 = vpop.xlane.xlu0 %2141
    %v2143 = vsel %vm885, %v2137, 0.0
    %2144 = vadd.xlane.f32.xlu0 %v2143
    %v2145 = vpop.xlane.xlu0 %2144
    %v2146 = vsel %vm885, %v2138, 0.0
    %2147 = vadd.xlane.f32.xlu0 %v2146
    %v2148 = vpop.xlane.xlu0 %2147
    %v2149 = vsel %vm885, %v2139, 0.0
    %2150 = vadd.xlane.f32.xlu0 %v2149
    %v2151 = vpop.xlane.xlu0 %2150
    %vm2152 = vcmp.lt.f32.partialorder %v2110, %v2142
    %vm2153 = vcmp.lt.f32.partialorder %v2113, %v2145
    %vm2154 = vcmp.lt.f32.partialorder %v2116, %v2148
    %vm2155 = vcmp.lt.f32.partialorder %v2119, %v2151
    %vm2156 = vcmp.gt.f32.partialorder %v1072, 0.0
    %vm2157 = vcmp.gt.f32.partialorder %v1073, 0.0
    %vm2158 = vcmp.gt.f32.partialorder %v1074, 0.0
    %vm2159 = vcmp.gt.f32.partialorder %v1075, 0.0
    %vm2160 = vmand %vm2152, %vm2156
    %vm2161 = vmand %vm2153, %vm2157
    %vm2162 = vmand %vm2154, %vm2158
    %vm2163 = vmand %vm2155, %vm2159
    %v2164 = vsel %vm2160, 1.0, 0.0
    %v2165 = vsel %vm2161, 1.0, 0.0
    %v2166 = vsel %vm2162, 1.0, 0.0
    %v2167 = vsel %vm2163, 1.0, 0.0
    %v2168 = vtanh.pop %v1893
    %v2169 = vtanh.pop %v1894
    %v2170 = vtanh.pop %v1895
    %v2171 = vtanh.pop %v1896
    %v2172 = vmul.f32 %v1861, %v2168
    %v2173 = vmul.f32 %v1862, %v2169
    %v2174 = vmul.f32 %v1863, %v2170
    %v2175 = vmul.f32 %v1864, %v2171
    %v2176 = vmul.f32 %v2172, %v2164
    %v2177 = vmul.f32 %v2173, %v2165
    %v2178 = vmul.f32 %v2174, %v2166
    %v2179 = vmul.f32 %v2175, %v2167
    %v2181 = vsel %vm395, %v2164, 0
    %v2184 = vsel %vm395, %v2165, 0
    %v2187 = vsel %vm395, %v2166, 0
    %v2190 = vsel %vm395, %v2167, 0
    %2192 = vmatprep.subr.mxu0 0.0
    %2193 = vmatpush1.xpose.msra.mxu0 %v2181
    %2194 = vmatprep.subr.mxu0 0.0
    %2195 = vmatpush1.xpose.msra.mxu0 %v2184
    %2196 = vmatprep.subr.mxu0 0.0
    %2197 = vmatpush1.xpose.msra.mxu0 %v2187
    %2198 = vmatprep.subr.mxu0 0.0
    %2199 = vmatpush1.xpose.msra.mxu0 %v2190
    %2200 = vmatprep.subr.mxu0 0.0
    %2201 = vmatpush1.xpose.msra.mxu0 0.0
    %2202 = vmatprep.subr.mxu0 0.0
    %2203 = vmatpush1.xpose.msra.mxu0 0.0
    %2204 = vmatprep.subr.mxu0 0.0
    %2205 = vmatpush1.xpose.msra.mxu0 0.0
    %2206 = vmatprep.subr.mxu0 0.0
    %2207 = vmatpush1.xpose.msra.mxu0 0.0
    %2208 = vmatprep.subr.mxu0 0.0
    %2209 = vmatpush1.xpose.msra.mxu0 0.0
    %2210 = vmatprep.subr.mxu0 0.0
    %2211 = vmatpush1.xpose.msra.mxu0 0.0
    %2212 = vmatprep.subr.mxu0 0.0
    %2213 = vmatpush1.xpose.msra.mxu0 0.0
    %2214 = vmatprep.subr.mxu0 0.0
    %2215 = vmatpush1.xpose.msra.mxu0 0.0
    %2216 = vmatprep.subr.mxu0 0.0
    %2217 = vmatpush1.xpose.msra.mxu0 0.0
    %2218 = vmatprep.subr.mxu0 0.0
    %2219 = vmatpush1.xpose.msra.mxu0 0.0
    %2220 = vmatprep.subr.mxu0 0.0
    %2221 = vmatpush1.xpose.msra.mxu0 0.0
    %2222 = vmatprep.subr.mxu0 0.0
    %2223 = vmatpush1.xpose.msra.mxu0 0.0
    %2224 = vmatprep.subr.mxu0 0.0
    %2225 = vmatpush1.xpose.msra.mxu0 0.0
    %2226 = vmatprep.subr.mxu0 0.0
    %2227 = vmatpush1.xpose.msra.mxu0 0.0
    %2228 = vmatprep.subr.mxu0 0.0
    %2229 = vmatpush1.xpose.msra.mxu0 0.0
    %2230 = vmatprep.subr.mxu0 0.0
    %2231 = vmatpush1.xpose.msra.mxu0 0.0
    %2232 = vmatprep.subr.mxu0 0.0
    %2233 = vmatpush1.xpose.msra.mxu0 0.0
    %2234 = vmatprep.subr.mxu0 0.0
    %2235 = vmatpush1.xpose.msra.mxu0 0.0
    %2236 = vmatprep.subr.mxu0 0.0
    %2237 = vmatpush1.xpose.msra.mxu0 0.0
    %2238 = vmatprep.subr.mxu0 0.0
    %2239 = vmatpush1.xpose.msra.mxu0 0.0
    %2240 = vmatprep.subr.mxu0 0.0
    %2241 = vmatpush1.xpose.msra.mxu0 0.0
    %2242 = vmatprep.subr.mxu0 0.0
    %2243 = vmatpush1.xpose.msra.mxu0 0.0
    %2244 = vmatprep.subr.mxu0 0.0
    %2245 = vmatpush1.xpose.msra.mxu0 0.0
    %2246 = vmatprep.subr.mxu0 0.0
    %2247 = vmatpush1.xpose.msra.mxu0 0.0
    %2248 = vmatprep.subr.mxu0 0.0
    %2249 = vmatpush1.xpose.msra.mxu0 0.0
    %2250 = vmatprep.subr.mxu0 0.0
    %2251 = vmatpush1.xpose.msra.mxu0 0.0
    %2252 = vmatprep.subr.mxu0 0.0
    %2253 = vmatpush1.xpose.msra.mxu0 0.0
    %2254 = vmatprep.subr.mxu0 0.0
    %2255 = vmatpush1.xpose.msra.mxu0 0.0
    %2256 = vmatprep.mubr.f32.mxu0 0.0
    %2257 = vmatmul.mubr.f32.gmra.mrb[0].mxu0 %v397
    %v2258 = vpop.f32.mrb[0].mxu0
    %v2259 = vadd.f32 0.0, %v2258
    %v2260 = vpop.f32.mrb[0].mxu0
    %2261 = vdwg.mxu0
    %v2262 = vlaneseq
    %v2263 = vshrl.u32 %v2262, 7
    %v2264 = vsub.s32 0, %v2263
    %v2265 = vrot.slane %v2259, %v2264
    %v2266 = vmul.f32 %v236, %v2265
    %v2267 = vsel %vm1175, %v2266, 0.0
    %2268 = vadd.xlane.f32.xlu0 %v2267
    %v2269 = vpop.xlane.xlu0 %2268
    %v2271 = vsel %vm610, %v2266, 0
    %2273 = vmatprep.subr.mxu0 0.0
    %2274 = vmatpush1.msra.mxu0 %v2176
    %2275 = vmatprep.subr.mxu0 0.0
    %2276 = vmatpush1.msra.mxu0 %v2177
    %2277 = vmatprep.subr.mxu0 0.0
    %2278 = vmatpush1.msra.mxu0 %v2178
    %2279 = vmatprep.subr.mxu0 0.0
    %2280 = vmatpush1.msra.mxu0 %v2179
    %2281 = vmatprep.subr.mxu0 0.0
    %2282 = vmatpush1.msra.mxu0 0.0
    %2283 = vmatprep.subr.mxu0 0.0
    %2284 = vmatpush1.msra.mxu0 0.0
    %2285 = vmatprep.subr.mxu0 0.0
    %2286 = vmatpush1.msra.mxu0 0.0
    %2287 = vmatprep.subr.mxu0 0.0
    %2288 = vmatpush1.msra.mxu0 0.0
    %2289 = vmatprep.subr.mxu0 0.0
    %2290 = vmatpush1.msra.mxu0 0.0
    %2291 = vmatprep.subr.mxu0 0.0
    %2292 = vmatpush1.msra.mxu0 0.0
    %2293 = vmatprep.subr.mxu0 0.0
    %2294 = vmatpush1.msra.mxu0 0.0
    %2295 = vmatprep.subr.mxu0 0.0
    %2296 = vmatpush1.msra.mxu0 0.0
    %2297 = vmatprep.subr.mxu0 0.0
    %2298 = vmatpush1.msra.mxu0 0.0
    %2299 = vmatprep.subr.mxu0 0.0
    %2300 = vmatpush1.msra.mxu0 0.0
    %2301 = vmatprep.subr.mxu0 0.0
    %2302 = vmatpush1.msra.mxu0 0.0
    %2303 = vmatprep.subr.mxu0 0.0
    %2304 = vmatpush1.msra.mxu0 0.0
    %2305 = vmatprep.subr.mxu0 0.0
    %2306 = vmatpush1.msra.mxu0 0.0
    %2307 = vmatprep.subr.mxu0 0.0
    %2308 = vmatpush1.msra.mxu0 0.0
    %2309 = vmatprep.subr.mxu0 0.0
    %2310 = vmatpush1.msra.mxu0 0.0
    %2311 = vmatprep.subr.mxu0 0.0
    %2312 = vmatpush1.msra.mxu0 0.0
    %2313 = vmatprep.subr.mxu0 0.0
    %2314 = vmatpush1.msra.mxu0 0.0
    %2315 = vmatprep.subr.mxu0 0.0
    %2316 = vmatpush1.msra.mxu0 0.0
    %2317 = vmatprep.subr.mxu0 0.0
    %2318 = vmatpush1.msra.mxu0 0.0
    %2319 = vmatprep.subr.mxu0 0.0
    %2320 = vmatpush1.msra.mxu0 0.0
    %2321 = vmatprep.subr.mxu0 0.0
    %2322 = vmatpush1.msra.mxu0 0.0
    %2323 = vmatprep.subr.mxu0 0.0
    %2324 = vmatpush1.msra.mxu0 0.0
    %2325 = vmatprep.subr.mxu0 0.0
    %2326 = vmatpush1.msra.mxu0 0.0
    %2327 = vmatprep.subr.mxu0 0.0
    %2328 = vmatpush1.msra.mxu0 0.0
    %2329 = vmatprep.subr.mxu0 0.0
    %2330 = vmatpush1.msra.mxu0 0.0
    %2331 = vmatprep.subr.mxu0 0.0
    %2332 = vmatpush1.msra.mxu0 0.0
    %2333 = vmatprep.subr.mxu0 0.0
    %2334 = vmatpush1.msra.mxu0 0.0
    %2335 = vmatprep.subr.mxu0 0.0
    %2336 = vmatpush1.msra.mxu0 0.0
    %2337 = vmatprep.mubr.f32.mxu0 0.0
    %2338 = vmatmul.mubr.f32.gmra.mrb[0].mxu0 %v2271
    %v2339 = vpop.f32.mrb[0].mxu0
    %v2340 = vadd.f32 0.0, %v2339
    %v2341 = vpop.f32.mrb[0].mxu0
    %2342 = vdwg.mxu0
    %v2343 = vmax.f32 %v2269, 1.0
    %v2344 = vrcp.pop %v2343
    %v2345 = vmul.f32 %v2340, %v2344
    %v2346 = vmul.f32 %v232, %v2164
    %v2347 = vmul.f32 %v233, %v2165
    %v2348 = vmul.f32 %v234, %v2166
    %v2349 = vmul.f32 %v235, %v2167
    %v2350 = vmul.f32 %v2346, %v1261
    %v2351 = vmul.f32 %v2347, %v1261
    %v2352 = vmul.f32 %v2348, %v1261
    %v2353 = vmul.f32 %v2349, %v1261
    %v2354 = vsel %vm885, %v2350, 0.0
    %2355 = vadd.xlane.f32.xlu0 %v2354
    %v2356 = vpop.xlane.xlu0 %2355
    %v2357 = vsel %vm885, %v2351, 0.0
    %2358 = vadd.xlane.f32.xlu0 %v2357
    %v2359 = vpop.xlane.xlu0 %2358
    %v2360 = vsel %vm885, %v2352, 0.0
    %2361 = vadd.xlane.f32.xlu0 %v2360
    %v2362 = vpop.xlane.xlu0 %2361
    %v2363 = vsel %vm885, %v2353, 0.0
    %2364 = vadd.xlane.f32.xlu0 %v2363
    %v2365 = vpop.xlane.xlu0 %2364
    %vm2366 = vcmp.gt.f32.partialorder %v2356, 0.0
    %vm2367 = vcmp.gt.f32.partialorder %v2359, 0.0
    %vm2368 = vcmp.gt.f32.partialorder %v2362, 0.0
    %vm2369 = vcmp.gt.f32.partialorder %v2365, 0.0
    %v2370 = vsel %vm2366, 1, 0
    %v2371 = vsel %vm2367, 1, 0
    %v2372 = vsel %vm2368, 1, 0
    %v2373 = vsel %vm2369, 1, 0
    %vm2374 = vcmp.eq.s32.totalorder %v2370, 1
    %vm2375 = vcmp.eq.s32.totalorder %v2371, 1
    %vm2376 = vcmp.eq.s32.totalorder %v2372, 1
    %vm2377 = vcmp.eq.s32.totalorder %v2373, 1
    %v2378 = vsel %vm2374, %v2176, -1e+30
    %v2379 = vsel %vm2375, %v2177, -1e+30
    %v2380 = vsel %vm2376, %v2178, -1e+30
    %v2381 = vsel %vm2377, %v2179, -1e+30
    %v2382 = vmax.f32 %v2378, %v2379
    %v2383 = vmax.f32 %v2380, %v2381
    %v2384 = vmax.f32 %v2382, %v2383
    %v2385 = vrot.slane %v2384, 4
    %v2386 = vmax.f32 %v2384, %v2385
    %v2387 = vrot.slane %v2386, 2
    %v2388 = vmax.f32 %v2386, %v2387
    %v2389 = vrot.slane %v2388, 1
    %v2390 = vmax.f32 %v2388, %v2389
    %v2391 = vsel %vm1303, %v2390, -1e+30
    %v2392 = vmul.f32 %v2346, %v1307
    %v2393 = vmul.f32 %v2347, %v1307
    %v2394 = vmul.f32 %v2348, %v1307
    %v2395 = vmul.f32 %v2349, %v1307
    %v2396 = vsel %vm885, %v2392, 0.0
    %2397 = vadd.xlane.f32.xlu0 %v2396
    %v2398 = vpop.xlane.xlu0 %2397
    %v2399 = vsel %vm885, %v2393, 0.0
    %2400 = vadd.xlane.f32.xlu0 %v2399
    %v2401 = vpop.xlane.xlu0 %2400
    %v2402 = vsel %vm885, %v2394, 0.0
    %2403 = vadd.xlane.f32.xlu0 %v2402
    %v2404 = vpop.xlane.xlu0 %2403
    %v2405 = vsel %vm885, %v2395, 0.0
    %2406 = vadd.xlane.f32.xlu0 %v2405
    %v2407 = vpop.xlane.xlu0 %2406
    %vm2408 = vcmp.gt.f32.partialorder %v2398, 0.0
    %vm2409 = vcmp.gt.f32.partialorder %v2401, 0.0
    %vm2410 = vcmp.gt.f32.partialorder %v2404, 0.0
    %vm2411 = vcmp.gt.f32.partialorder %v2407, 0.0
    %v2412 = vsel %vm2408, 1, 0
    %v2413 = vsel %vm2409, 1, 0
    %v2414 = vsel %vm2410, 1, 0
    %v2415 = vsel %vm2411, 1, 0
    %vm2416 = vcmp.eq.s32.totalorder %v2412, 1
    %vm2417 = vcmp.eq.s32.totalorder %v2413, 1
    %vm2418 = vcmp.eq.s32.totalorder %v2414, 1
    %vm2419 = vcmp.eq.s32.totalorder %v2415, 1
    %v2420 = vsel %vm2416, %v2176, -1e+30
    %v2421 = vsel %vm2417, %v2177, -1e+30
    %v2422 = vsel %vm2418, %v2178, -1e+30
    %v2423 = vsel %vm2419, %v2179, -1e+30
    %v2424 = vmax.f32 %v2420, %v2421
    %v2425 = vmax.f32 %v2422, %v2423
    %v2426 = vmax.f32 %v2424, %v2425
    %v2427 = vrot.slane %v2426, 4
    %v2428 = vmax.f32 %v2426, %v2427
    %v2429 = vrot.slane %v2428, 2
    %v2430 = vmax.f32 %v2428, %v2429
    %v2431 = vrot.slane %v2430, 1
    %v2432 = vmax.f32 %v2430, %v2431
    %v2433 = vsel %vm1349, %v2432, %v2391
    %v2434 = vld [vmem:[#allocation14] sm:$0xff]
    %v2435 = vld [vmem:[#allocation14 + $0x8] sm:$0xff]
    %v2436 = vld [vmem:[#allocation14 + $0x10] sm:$0xff]
    %v2437 = vld [vmem:[#allocation14 + $0x18] sm:$0xff]
    %v2438 = vld [vmem:[#allocation14 + $0x20] sm:$0xff]
    %v2439 = vld [vmem:[#allocation14 + $0x28] sm:$0xff]
    %v2440 = vld [vmem:[#allocation14 + $0x30] sm:$0xff]
    %v2441 = vld [vmem:[#allocation14 + $0x38] sm:$0xff]
    %v2442 = vld [vmem:[#allocation14 + $0x40] sm:$0xff]
    %v2443 = vld [vmem:[#allocation14 + $0x48] sm:$0xff]
    %v2444 = vld [vmem:[#allocation14 + $0x50] sm:$0xff]
    %v2445 = vld [vmem:[#allocation14 + $0x58] sm:$0xff]
    %v2446 = vld [vmem:[#allocation14 + $0x60] sm:$0xff]
    %v2447 = vld [vmem:[#allocation14 + $0x68] sm:$0xff]
    %v2448 = vld [vmem:[#allocation14 + $0x70] sm:$0xff]
    %v2449 = vld [vmem:[#allocation14 + $0x78] sm:$0xff]
    %v2450 = vld [vmem:[#allocation16] sm:$0x1]
    %v2451 = vld [vmem:[#allocation17] sm:$0x1]
    %v2452 = vld [vmem:[#allocation19] sm:$0x1]
    %2453 = vmatprep.subr.mxu0 0.0
    %2454 = vmatpush1.msra.mxu0 %v2434
    %2455 = vmatprep.subr.mxu0 0.0
    %2456 = vmatpush1.msra.mxu0 %v2435
    %2457 = vmatprep.subr.mxu0 0.0
    %2458 = vmatpush1.msra.mxu0 %v2436
    %2459 = vmatprep.subr.mxu0 0.0
    %2460 = vmatpush1.msra.mxu0 %v2437
    %2461 = vmatprep.subr.mxu0 0.0
    %2462 = vmatpush1.msra.mxu0 %v2438
    %2463 = vmatprep.subr.mxu0 0.0
    %2464 = vmatpush1.msra.mxu0 %v2439
    %2465 = vmatprep.subr.mxu0 0.0
    %2466 = vmatpush1.msra.mxu0 %v2440
    %2467 = vmatprep.subr.mxu0 0.0
    %2468 = vmatpush1.msra.mxu0 %v2441
    %2469 = vmatprep.subr.mxu0 0.0
    %2470 = vmatpush1.msra.mxu0 %v2442
    %2471 = vmatprep.subr.mxu0 0.0
    %2472 = vmatpush1.msra.mxu0 %v2443
    %2473 = vmatprep.subr.mxu0 0.0
    %2474 = vmatpush1.msra.mxu0 %v2444
    %2475 = vmatprep.subr.mxu0 0.0
    %2476 = vmatpush1.msra.mxu0 %v2445
    %2477 = vmatprep.subr.mxu0 0.0
    %2478 = vmatpush1.msra.mxu0 %v2446
    %2479 = vmatprep.subr.mxu0 0.0
    %2480 = vmatpush1.msra.mxu0 %v2447
    %2481 = vmatprep.subr.mxu0 0.0
    %2482 = vmatpush1.msra.mxu0 %v2448
    %2483 = vmatprep.subr.mxu0 0.0
    %2484 = vmatpush1.msra.mxu0 %v2449
    %2485 = vmatprep.subr.mxu0 0.0
    %2486 = vmatpush1.msra.mxu0 0.0
    %2487 = vmatprep.subr.mxu0 0.0
    %2488 = vmatpush1.msra.mxu0 0.0
    %2489 = vmatprep.subr.mxu0 0.0
    %2490 = vmatpush1.msra.mxu0 0.0
    %2491 = vmatprep.subr.mxu0 0.0
    %2492 = vmatpush1.msra.mxu0 0.0
    %2493 = vmatprep.subr.mxu0 0.0
    %2494 = vmatpush1.msra.mxu0 0.0
    %2495 = vmatprep.subr.mxu0 0.0
    %2496 = vmatpush1.msra.mxu0 0.0
    %2497 = vmatprep.subr.mxu0 0.0
    %2498 = vmatpush1.msra.mxu0 0.0
    %2499 = vmatprep.subr.mxu0 0.0
    %2500 = vmatpush1.msra.mxu0 0.0
    %2501 = vmatprep.subr.mxu0 0.0
    %2502 = vmatpush1.msra.mxu0 0.0
    %2503 = vmatprep.subr.mxu0 0.0
    %2504 = vmatpush1.msra.mxu0 0.0
    %2505 = vmatprep.subr.mxu0 0.0
    %2506 = vmatpush1.msra.mxu0 0.0
    %2507 = vmatprep.subr.mxu0 0.0
    %2508 = vmatpush1.msra.mxu0 0.0
    %2509 = vmatprep.subr.mxu0 0.0
    %2510 = vmatpush1.msra.mxu0 0.0
    %2511 = vmatprep.subr.mxu0 0.0
    %2512 = vmatpush1.msra.mxu0 0.0
    %2513 = vmatprep.subr.mxu0 0.0
    %2514 = vmatpush1.msra.mxu0 0.0
    %2515 = vmatprep.subr.mxu0 0.0
    %2516 = vmatpush1.msra.mxu0 0.0
    %2517 = vmatprep.mubr.f32.mxu0 0.0
    %2518 = vmatmul.mubr.f32.gmra.mrb[0].mxu0 %v2176
    %v2519 = vpop.f32.mrb[0].mxu0
    %v2520 = vadd.f32 0.0, %v2519
    %v2521 = vpop.f32.mrb[0].mxu0
    %2522 = vmatprep.mubr.f32.mxu0 0.0
    %2523 = vmatmul.mubr.f32.gmra.mrb[0].mxu0 %v2177
    %v2524 = vpop.f32.mrb[0].mxu0
    %v2525 = vadd.f32 0.0, %v2524
    %v2526 = vpop.f32.mrb[0].mxu0
    %2527 = vmatprep.mubr.f32.mxu0 0.0
    %2528 = vmatmul.mubr.f32.gmra.mrb[0].mxu0 %v2178
    %v2529 = vpop.f32.mrb[0].mxu0
    %v2530 = vadd.f32 0.0, %v2529
    %v2531 = vpop.f32.mrb[0].mxu0
    %2532 = vmatprep.mubr.f32.mxu0 0.0
    %2533 = vmatmul.mubr.f32.gmra.mrb[0].mxu0 %v2179
    %v2534 = vpop.f32.mrb[0].mxu0
    %v2535 = vadd.f32 0.0, %v2534
    %v2536 = vpop.f32.mrb[0].mxu0
    %2537 = vdwg.mxu0
    %v2539 = vlaneseq
    %v2540 = vshrl.u32 %v2539, 7
    %v2541 = vsub.s32 0, %v2540
    %v2542 = vrot.slane %v2451, %v2541
    %v2544 = vmul.f32 %v2520, %v2542
    %v2545 = vmul.f32 %v2525, %v2542
    %v2546 = vmul.f32 %v2530, %v2542
    %v2547 = vmul.f32 %v2535, %v2542
    %2548 = vadd.xlane.f32.xlu0 %v2544
    %v2549 = vpop.xlane.xlu0 %2548
    %2550 = vadd.xlane.f32.xlu0 %v2545
    %v2551 = vpop.xlane.xlu0 %2550
    %2552 = vadd.xlane.f32.xlu0 %v2546
    %v2553 = vpop.xlane.xlu0 %2552
    %2554 = vadd.xlane.f32.xlu0 %v2547
    %v2555 = vpop.xlane.xlu0 %2554
    %v2557 = vlaneseq
    %v2558 = vshrl.u32 %v2557, 7
    %v2559 = vsub.s32 0, %v2558
    %v2560 = vrot.slane %v2450, %v2559
    %v2562 = vmul.f32 %v2520, %v2560
    %v2563 = vmul.f32 %v2525, %v2560
    %v2564 = vmul.f32 %v2530, %v2560
    %v2565 = vmul.f32 %v2535, %v2560
    %2566 = vadd.xlane.f32.xlu0 %v2562
    %v2567 = vpop.xlane.xlu0 %2566
    %2568 = vadd.xlane.f32.xlu0 %v2563
    %v2569 = vpop.xlane.xlu0 %2568
    %2570 = vadd.xlane.f32.xlu0 %v2564
    %v2571 = vpop.xlane.xlu0 %2570
    %2572 = vadd.xlane.f32.xlu0 %v2565
    %v2573 = vpop.xlane.xlu0 %2572
    %v2575 = vsel %vm395, %v2567, 0
    %v2578 = vsel %vm395, %v2569, 0
    %v2581 = vsel %vm395, %v2571, 0
    %v2584 = vsel %vm395, %v2573, 0
    %2586 = vmatprep.subr.mxu0 0.0
    %2587 = vmatpush1.xpose.msra.mxu0 %v2575
    %2588 = vmatprep.subr.mxu0 0.0
    %2589 = vmatpush1.xpose.msra.mxu0 %v2578
    %2590 = vmatprep.subr.mxu0 0.0
    %2591 = vmatpush1.xpose.msra.mxu0 %v2581
    %2592 = vmatprep.subr.mxu0 0.0
    %2593 = vmatpush1.xpose.msra.mxu0 %v2584
    %2594 = vmatprep.subr.mxu0 0.0
    %2595 = vmatpush1.xpose.msra.mxu0 0.0
    %2596 = vmatprep.subr.mxu0 0.0
    %2597 = vmatpush1.xpose.msra.mxu0 0.0
    %2598 = vmatprep.subr.mxu0 0.0
    %2599 = vmatpush1.xpose.msra.mxu0 0.0
    %2600 = vmatprep.subr.mxu0 0.0
    %2601 = vmatpush1.xpose.msra.mxu0 0.0
    %2602 = vmatprep.subr.mxu0 0.0
    %2603 = vmatpush1.xpose.msra.mxu0 0.0
    %2604 = vmatprep.subr.mxu0 0.0
    %2605 = vmatpush1.xpose.msra.mxu0 0.0
    %2606 = vmatprep.subr.mxu0 0.0
    %2607 = vmatpush1.xpose.msra.mxu0 0.0
    %2608 = vmatprep.subr.mxu0 0.0
    %2609 = vmatpush1.xpose.msra.mxu0 0.0
    %2610 = vmatprep.subr.mxu0 0.0
    %2611 = vmatpush1.xpose.msra.mxu0 0.0
    %2612 = vmatprep.subr.mxu0 0.0
    %2613 = vmatpush1.xpose.msra.mxu0 0.0
    %2614 = vmatprep.subr.mxu0 0.0
    %2615 = vmatpush1.xpose.msra.mxu0 0.0
    %2616 = vmatprep.subr.mxu0 0.0
    %2617 = vmatpush1.xpose.msra.mxu0 0.0
    %2618 = vmatprep.subr.mxu0 0.0
    %2619 = vmatpush1.xpose.msra.mxu0 0.0
    %2620 = vmatprep.subr.mxu0 0.0
    %2621 = vmatpush1.xpose.msra.mxu0 0.0
    %2622 = vmatprep.subr.mxu0 0.0
    %2623 = vmatpush1.xpose.msra.mxu0 0.0
    %2624 = vmatprep.subr.mxu0 0.0
    %2625 = vmatpush1.xpose.msra.mxu0 0.0
    %2626 = vmatprep.subr.mxu0 0.0
    %2627 = vmatpush1.xpose.msra.mxu0 0.0
    %2628 = vmatprep.subr.mxu0 0.0
    %2629 = vmatpush1.xpose.msra.mxu0 0.0
    %2630 = vmatprep.subr.mxu0 0.0
    %2631 = vmatpush1.xpose.msra.mxu0 0.0
    %2632 = vmatprep.subr.mxu0 0.0
    %2633 = vmatpush1.xpose.msra.mxu0 0.0
    %2634 = vmatprep.subr.mxu0 0.0
    %2635 = vmatpush1.xpose.msra.mxu0 0.0
    %2636 = vmatprep.subr.mxu0 0.0
    %2637 = vmatpush1.xpose.msra.mxu0 0.0
    %2638 = vmatprep.subr.mxu0 0.0
    %2639 = vmatpush1.xpose.msra.mxu0 0.0
    %2640 = vmatprep.subr.mxu0 0.0
    %2641 = vmatpush1.xpose.msra.mxu0 0.0
    %2642 = vmatprep.subr.mxu0 0.0
    %2643 = vmatpush1.xpose.msra.mxu0 0.0
    %2644 = vmatprep.subr.mxu0 0.0
    %2645 = vmatpush1.xpose.msra.mxu0 0.0
    %2646 = vmatprep.subr.mxu0 0.0
    %2647 = vmatpush1.xpose.msra.mxu0 0.0
    %2648 = vmatprep.subr.mxu0 0.0
    %2649 = vmatpush1.xpose.msra.mxu0 0.0
    %2650 = vmatprep.mubr.f32.mxu0 0.0
    %2651 = vmatmul.mubr.f32.gmra.mrb[0].mxu0 %v397
    %v2652 = vpop.f32.mrb[0].mxu0
    %v2653 = vadd.f32 0.0, %v2652
    %v2654 = vpop.f32.mrb[0].mxu0
    %2655 = vdwg.mxu0
    %v2656 = vlaneseq
    %v2657 = vshrl.u32 %v2656, 7
    %v2658 = vsub.s32 0, %v2657
    %v2659 = vrot.slane %v2653, %v2658
    %v2660 = vadd.f32 %v2549, %v2659
    %v2661 = vadd.f32 %v2551, %v2659
    %v2662 = vadd.f32 %v2553, %v2659
    %v2663 = vadd.f32 %v2555, %v2659
    %vm2664 = vcmp.gt.f32.partialorder %v2660, 0.0
    %vm2665 = vcmp.gt.f32.partialorder %v2661, 0.0
    %vm2666 = vcmp.gt.f32.partialorder %v2662, 0.0
    %vm2667 = vcmp.gt.f32.partialorder %v2663, 0.0
    %v2668 = vmul.f32 %v2660, 0.2
    %v2669 = vmul.f32 %v2661, 0.2
    %v2670 = vmul.f32 %v2662, 0.2
    %v2671 = vmul.f32 %v2663, 0.2
    %v2672 = vsel %vm2664, %v2660, %v2668
    %v2673 = vsel %vm2665, %v2661, %v2669
    %v2674 = vsel %vm2666, %v2662, %v2670
    %v2675 = vsel %vm2667, %v2663, %v2671
    %2676 = vmatprep.subr.mxu0 0.0
    %2677 = vmatpush1.xpose.msra.mxu0 %v2181
    %2678 = vmatprep.subr.mxu0 0.0
    %2679 = vmatpush1.xpose.msra.mxu0 %v2184
    %2680 = vmatprep.subr.mxu0 0.0
    %2681 = vmatpush1.xpose.msra.mxu0 %v2187
    %2682 = vmatprep.subr.mxu0 0.0
    %2683 = vmatpush1.xpose.msra.mxu0 %v2190
    %2684 = vmatprep.subr.mxu0 0.0
    %2685 = vmatpush1.xpose.msra.mxu0 0.0
    %2686 = vmatprep.subr.mxu0 0.0
    %2687 = vmatpush1.xpose.msra.mxu0 0.0
    %2688 = vmatprep.subr.mxu0 0.0
    %2689 = vmatpush1.xpose.msra.mxu0 0.0
    %2690 = vmatprep.subr.mxu0 0.0
    %2691 = vmatpush1.xpose.msra.mxu0 0.0
    %2692 = vmatprep.subr.mxu0 0.0
    %2693 = vmatpush1.xpose.msra.mxu0 0.0
    %2694 = vmatprep.subr.mxu0 0.0
    %2695 = vmatpush1.xpose.msra.mxu0 0.0
    %2696 = vmatprep.subr.mxu0 0.0
    %2697 = vmatpush1.xpose.msra.mxu0 0.0
    %2698 = vmatprep.subr.mxu0 0.0
    %2699 = vmatpush1.xpose.msra.mxu0 0.0
    %2700 = vmatprep.subr.mxu0 0.0
    %2701 = vmatpush1.xpose.msra.mxu0 0.0
    %2702 = vmatprep.subr.mxu0 0.0
    %2703 = vmatpush1.xpose.msra.mxu0 0.0
    %2704 = vmatprep.subr.mxu0 0.0
    %2705 = vmatpush1.xpose.msra.mxu0 0.0
    %2706 = vmatprep.subr.mxu0 0.0
    %2707 = vmatpush1.xpose.msra.mxu0 0.0
    %2708 = vmatprep.subr.mxu0 0.0
    %2709 = vmatpush1.xpose.msra.mxu0 0.0
    %2710 = vmatprep.subr.mxu0 0.0
    %2711 = vmatpush1.xpose.msra.mxu0 0.0
    %2712 = vmatprep.subr.mxu0 0.0
    %2713 = vmatpush1.xpose.msra.mxu0 0.0
    %2714 = vmatprep.subr.mxu0 0.0
    %2715 = vmatpush1.xpose.msra.mxu0 0.0
    %2716 = vmatprep.subr.mxu0 0.0
    %2717 = vmatpush1.xpose.msra.mxu0 0.0
    %2718 = vmatprep.subr.mxu0 0.0
    %2719 = vmatpush1.xpose.msra.mxu0 0.0
    %2720 = vmatprep.subr.mxu0 0.0
    %2721 = vmatpush1.xpose.msra.mxu0 0.0
    %2722 = vmatprep.subr.mxu0 0.0
    %2723 = vmatpush1.xpose.msra.mxu0 0.0
    %2724 = vmatprep.subr.mxu0 0.0
    %2725 = vmatpush1.xpose.msra.mxu0 0.0
    %2726 = vmatprep.subr.mxu0 0.0
    %2727 = vmatpush1.xpose.msra.mxu0 0.0
    %2728 = vmatprep.subr.mxu0 0.0
    %2729 = vmatpush1.xpose.msra.mxu0 0.0
    %2730 = vmatprep.subr.mxu0 0.0
    %2731 = vmatpush1.xpose.msra.mxu0 0.0
    %2732 = vmatprep.subr.mxu0 0.0
    %2733 = vmatpush1.xpose.msra.mxu0 0.0
    %2734 = vmatprep.subr.mxu0 0.0
    %2735 = vmatpush1.xpose.msra.mxu0 0.0
    %2736 = vmatprep.subr.mxu0 0.0
    %2737 = vmatpush1.xpose.msra.mxu0 0.0
    %2738 = vmatprep.subr.mxu0 0.0
    %2739 = vmatpush1.xpose.msra.mxu0 0.0
    %2740 = vmatprep.mubr.f32.mxu0 0.0
    %2741 = vmatmul.mubr.f32.gmra.mrb[0].mxu0 %v2181
    %v2742 = vpop.f32.mrb[0].mxu0
    %v2743 = vadd.f32 0.0, %v2742
    %v2744 = vpop.f32.mrb[0].mxu0
    %2745 = vmatprep.mubr.f32.mxu0 0.0
    %2746 = vmatmul.mubr.f32.gmra.mrb[0].mxu0 %v2184
    %v2747 = vpop.f32.mrb[0].mxu0
    %v2748 = vadd.f32 0.0, %v2747
    %v2749 = vpop.f32.mrb[0].mxu0
    %2750 = vmatprep.mubr.f32.mxu0 0.0
    %2751 = vmatmul.mubr.f32.gmra.mrb[0].mxu0 %v2187
    %v2752 = vpop.f32.mrb[0].mxu0
    %v2753 = vadd.f32 0.0, %v2752
    %v2754 = vpop.f32.mrb[0].mxu0
    %2755 = vmatprep.mubr.f32.mxu0 0.0
    %2756 = vmatmul.mubr.f32.gmra.mrb[0].mxu0 %v2190
    %v2757 = vpop.f32.mrb[0].mxu0
    %v2758 = vadd.f32 0.0, %v2757
    %v2759 = vpop.f32.mrb[0].mxu0
    %2760 = vdwg.mxu0
    %v2761 = vmul.f32 %v228, %v2743
    %v2762 = vmul.f32 %v229, %v2748
    %v2763 = vmul.f32 %v230, %v2753
    %v2764 = vmul.f32 %v231, %v2758
    %v2765 = vmul.f32 %v2761, %v590
    %v2766 = vmul.f32 %v2762, %v591
    %v2767 = vmul.f32 %v2763, %v592
    %v2768 = vmul.f32 %v2764, %v593
    %v2769 = vmul.f32 %v252, %v2164
    %v2770 = vmul.f32 %v253, %v2165
    %v2771 = vmul.f32 %v254, %v2166
    %v2772 = vmul.f32 %v255, %v2167
    %v2773 = vadd.f32 %v2765, %v2769
    %v2774 = vadd.f32 %v2766, %v2770
    %v2775 = vadd.f32 %v2767, %v2771
    %v2776 = vadd.f32 %v2768, %v2772
    %vm2777 = vcmp.gt.f32.partialorder %v2773, 0.0
    %vm2778 = vcmp.gt.f32.partialorder %v2774, 0.0
    %vm2779 = vcmp.gt.f32.partialorder %v2775, 0.0
    %vm2780 = vcmp.gt.f32.partialorder %v2776, 0.0
    %v2781 = vsel %vm2777, %v2672, -1e+30
    %v2782 = vsel %vm2778, %v2673, -1e+30
    %v2783 = vsel %vm2779, %v2674, -1e+30
    %v2784 = vsel %vm2780, %v2675, -1e+30
    %v2785 = vsel %vm610, %v2781, -inf
    %2786 = vmax.xlane.f32.xlu0 %v2785
    %v2787 = vpop.xlane.xlu0 %2786
    %v2788 = vsel %vm610, %v2782, -inf
    %2789 = vmax.xlane.f32.xlu0 %v2788
    %v2790 = vpop.xlane.xlu0 %2789
    %v2791 = vsel %vm610, %v2783, -inf
    %2792 = vmax.xlane.f32.xlu0 %v2791
    %v2793 = vpop.xlane.xlu0 %2792
    %v2794 = vsel %vm610, %v2784, -inf
    %2795 = vmax.xlane.f32.xlu0 %v2794
    %v2796 = vpop.xlane.xlu0 %2795
    %v2797 = vsub.f32 %v2781, %v2787
    %v2798 = vsub.f32 %v2782, %v2790
    %v2799 = vsub.f32 %v2783, %v2793
    %v2800 = vsub.f32 %v2784, %v2796
    %v2801 = vmul.f32 %v2797, 1.442695
    %v2802 = vpow.pop %v2801
    %v2803 = vmul.f32 %v2798, 1.442695
    %v2804 = vpow.pop %v2803
    %v2805 = vmul.f32 %v2799, 1.442695
    %v2806 = vpow.pop %v2805
    %v2807 = vmul.f32 %v2800, 1.442695
    %v2808 = vpow.pop %v2807
    %v2809 = vmul.f32 %v2802, %v2773
    %v2810 = vmul.f32 %v2804, %v2774
    %v2811 = vmul.f32 %v2806, %v2775
    %v2812 = vmul.f32 %v2808, %v2776
    %v2813 = vsel %vm610, %v2809, 0.0
    %2814 = vadd.xlane.f32.xlu0 %v2813
    %v2815 = vpop.xlane.xlu0 %2814
    %v2816 = vsel %vm610, %v2810, 0.0
    %2817 = vadd.xlane.f32.xlu0 %v2816
    %v2818 = vpop.xlane.xlu0 %2817
    %v2819 = vsel %vm610, %v2811, 0.0
    %2820 = vadd.xlane.f32.xlu0 %v2819
    %v2821 = vpop.xlane.xlu0 %2820
    %v2822 = vsel %vm610, %v2812, 0.0
    %2823 = vadd.xlane.f32.xlu0 %v2822
    %v2824 = vpop.xlane.xlu0 %2823
    %v2825 = vmax.f32 %v2815, 1e-30
    %v2826 = vmax.f32 %v2818, 1e-30
    %v2827 = vmax.f32 %v2821, 1e-30
    %v2828 = vmax.f32 %v2824, 1e-30
    %v2829 = vrcp.pop %v2825
    %v2830 = vrcp.pop %v2826
    %v2831 = vrcp.pop %v2827
    %v2832 = vrcp.pop %v2828
    %v2833 = vmul.f32 %v2809, %v2829
    %v2834 = vmul.f32 %v2810, %v2830
    %v2835 = vmul.f32 %v2811, %v2831
    %v2836 = vmul.f32 %v2812, %v2832
    %v2838 = vlaneseq
    %v2839 = vshrl.u32 %v2838, 7
    %v2840 = vsub.s32 0, %v2839
    %v2841 = vrot.slane %v2452, %v2840
    %v2844 = vsel %vm610, %v2833, 0
    %v2847 = vsel %vm610, %v2834, 0
    %v2850 = vsel %vm610, %v2835, 0
    %v2853 = vsel %vm610, %v2836, 0
    %2855 = vmatprep.subr.mxu0 0.0
    %2856 = vmatpush1.msra.mxu0 %v2520
    %2857 = vmatprep.subr.mxu0 0.0
    %2858 = vmatpush1.msra.mxu0 %v2525
    %2859 = vmatprep.subr.mxu0 0.0
    %2860 = vmatpush1.msra.mxu0 %v2530
    %2861 = vmatprep.subr.mxu0 0.0
    %2862 = vmatpush1.msra.mxu0 %v2535
    %2863 = vmatprep.subr.mxu0 0.0
    %2864 = vmatpush1.msra.mxu0 0.0
    %2865 = vmatprep.subr.mxu0 0.0
    %2866 = vmatpush1.msra.mxu0 0.0
    %2867 = vmatprep.subr.mxu0 0.0
    %2868 = vmatpush1.msra.mxu0 0.0
    %2869 = vmatprep.subr.mxu0 0.0
    %2870 = vmatpush1.msra.mxu0 0.0
    %2871 = vmatprep.subr.mxu0 0.0
    %2872 = vmatpush1.msra.mxu0 0.0
    %2873 = vmatprep.subr.mxu0 0.0
    %2874 = vmatpush1.msra.mxu0 0.0
    %2875 = vmatprep.subr.mxu0 0.0
    %2876 = vmatpush1.msra.mxu0 0.0
    %2877 = vmatprep.subr.mxu0 0.0
    %2878 = vmatpush1.msra.mxu0 0.0
    %2879 = vmatprep.subr.mxu0 0.0
    %2880 = vmatpush1.msra.mxu0 0.0
    %2881 = vmatprep.subr.mxu0 0.0
    %2882 = vmatpush1.msra.mxu0 0.0
    %2883 = vmatprep.subr.mxu0 0.0
    %2884 = vmatpush1.msra.mxu0 0.0
    %2885 = vmatprep.subr.mxu0 0.0
    %2886 = vmatpush1.msra.mxu0 0.0
    %2887 = vmatprep.subr.mxu0 0.0
    %2888 = vmatpush1.msra.mxu0 0.0
    %2889 = vmatprep.subr.mxu0 0.0
    %2890 = vmatpush1.msra.mxu0 0.0
    %2891 = vmatprep.subr.mxu0 0.0
    %2892 = vmatpush1.msra.mxu0 0.0
    %2893 = vmatprep.subr.mxu0 0.0
    %2894 = vmatpush1.msra.mxu0 0.0
    %2895 = vmatprep.subr.mxu0 0.0
    %2896 = vmatpush1.msra.mxu0 0.0
    %2897 = vmatprep.subr.mxu0 0.0
    %2898 = vmatpush1.msra.mxu0 0.0
    %2899 = vmatprep.subr.mxu0 0.0
    %2900 = vmatpush1.msra.mxu0 0.0
    %2901 = vmatprep.subr.mxu0 0.0
    %2902 = vmatpush1.msra.mxu0 0.0
    %2903 = vmatprep.subr.mxu0 0.0
    %2904 = vmatpush1.msra.mxu0 0.0
    %2905 = vmatprep.subr.mxu0 0.0
    %2906 = vmatpush1.msra.mxu0 0.0
    %2907 = vmatprep.subr.mxu0 0.0
    %2908 = vmatpush1.msra.mxu0 0.0
    %2909 = vmatprep.subr.mxu0 0.0
    %2910 = vmatpush1.msra.mxu0 0.0
    %2911 = vmatprep.subr.mxu0 0.0
    %2912 = vmatpush1.msra.mxu0 0.0
    %2913 = vmatprep.subr.mxu0 0.0
    %2914 = vmatpush1.msra.mxu0 0.0
    %2915 = vmatprep.subr.mxu0 0.0
    %2916 = vmatpush1.msra.mxu0 0.0
    %2917 = vmatprep.subr.mxu0 0.0
    %2918 = vmatpush1.msra.mxu0 0.0
    %2919 = vmatprep.mubr.f32.mxu0 0.0
    %2920 = vmatmul.mubr.f32.gmra.mrb[0].mxu0 %v2844
    %v2921 = vpop.f32.mrb[0].mxu0
    %v2922 = vadd.f32 %v2841, %v2921
    %v2923 = vpop.f32.mrb[0].mxu0
    %2924 = vmatprep.mubr.f32.mxu0 0.0
    %2925 = vmatmul.mubr.f32.gmra.mrb[0].mxu0 %v2847
    %v2926 = vpop.f32.mrb[0].mxu0
    %v2927 = vadd.f32 %v2841, %v2926
    %v2928 = vpop.f32.mrb[0].mxu0
    %2929 = vmatprep.mubr.f32.mxu0 0.0
    %2930 = vmatmul.mubr.f32.gmra.mrb[0].mxu0 %v2850
    %v2931 = vpop.f32.mrb[0].mxu0
    %v2932 = vadd.f32 %v2841, %v2931
    %v2933 = vpop.f32.mrb[0].mxu0
    %2934 = vmatprep.mubr.f32.mxu0 0.0
    %2935 = vmatmul.mubr.f32.gmra.mrb[0].mxu0 %v2853
    %v2936 = vpop.f32.mrb[0].mxu0
    %v2937 = vadd.f32 %v2841, %v2936
    %v2938 = vpop.f32.mrb[0].mxu0
    %2939 = vdwg.mxu0
    %v2940 = vmax.f32 %v2922, 0.0
    %v2941 = vmax.f32 %v2927, 0.0
    %v2942 = vmax.f32 %v2932, 0.0
    %v2943 = vmax.f32 %v2937, 0.0
    %v2944 = vmul.f32 %v2940, %v2164
    %v2945 = vmul.f32 %v2941, %v2165
    %v2946 = vmul.f32 %v2942, %v2166
    %v2947 = vmul.f32 %v2943, %v2167
    %v2948 = vld [vmem:[%s18] sm:$0x1]
    %v2949 = vmul.f32 %v2948, %v2948
    %v2950 = vsel %vm772, %v2949, 0.0
    %2951 = vadd.xlane.f32.xlu0 %v2950
    %v2952 = vpop.xlane.xlu0 %2951
    %v2953 = vrsqrt.pop %v2952
    %v2955 = vlaneseq
    %v2956 = vshrl.u32 %v2955, 7
    %v2957 = vsub.s32 0, %v2956
    %v2958 = vrot.slane %v2948, %v2957
    %v2960 = vmul.f32 %v2944, %v2958
    %v2961 = vmul.f32 %v2945, %v2958
    %v2962 = vmul.f32 %v2946, %v2958
    %v2963 = vmul.f32 %v2947, %v2958
    %2964 = vadd.xlane.f32.xlu0 %v2960
    %v2965 = vpop.xlane.xlu0 %2964
    %2966 = vadd.xlane.f32.xlu0 %v2961
    %v2967 = vpop.xlane.xlu0 %2966
    %2968 = vadd.xlane.f32.xlu0 %v2962
    %v2969 = vpop.xlane.xlu0 %2968
    %2970 = vadd.xlane.f32.xlu0 %v2963
    %v2971 = vpop.xlane.xlu0 %2970
    %v2972 = vlaneseq
    %v2973 = vshrl.u32 %v2972, 7
    %v2974 = vsub.s32 0, %v2973
    %v2975 = vrot.slane %v2953, %v2974
    %v2976 = vmul.f32 %v2965, %v2975
    %v2977 = vmul.f32 %v2967, %v2975
    %v2978 = vmul.f32 %v2969, %v2975
    %v2979 = vmul.f32 %v2971, %v2975
    %v2981 = vsel %vm395, %v2976, 0
    %v2984 = vsel %vm395, %v2977, 0
    %v2987 = vsel %vm395, %v2978, 0
    %v2990 = vsel %vm395, %v2979, 0
    %2992 = vmatprep.subr.mxu0 0.0
    %2993 = vmatpush1.xpose.msra.mxu0 %v2981
    %2994 = vmatprep.subr.mxu0 0.0
    %2995 = vmatpush1.xpose.msra.mxu0 %v2984
    %2996 = vmatprep.subr.mxu0 0.0
    %2997 = vmatpush1.xpose.msra.mxu0 %v2987
    %2998 = vmatprep.subr.mxu0 0.0
    %2999 = vmatpush1.xpose.msra.mxu0 %v2990
    %3000 = vmatprep.subr.mxu0 0.0
    %3001 = vmatpush1.xpose.msra.mxu0 0.0
    %3002 = vmatprep.subr.mxu0 0.0
    %3003 = vmatpush1.xpose.msra.mxu0 0.0
    %3004 = vmatprep.subr.mxu0 0.0
    %3005 = vmatpush1.xpose.msra.mxu0 0.0
    %3006 = vmatprep.subr.mxu0 0.0
    %3007 = vmatpush1.xpose.msra.mxu0 0.0
    %3008 = vmatprep.subr.mxu0 0.0
    %3009 = vmatpush1.xpose.msra.mxu0 0.0
    %3010 = vmatprep.subr.mxu0 0.0
    %3011 = vmatpush1.xpose.msra.mxu0 0.0
    %3012 = vmatprep.subr.mxu0 0.0
    %3013 = vmatpush1.xpose.msra.mxu0 0.0
    %3014 = vmatprep.subr.mxu0 0.0
    %3015 = vmatpush1.xpose.msra.mxu0 0.0
    %3016 = vmatprep.subr.mxu0 0.0
    %3017 = vmatpush1.xpose.msra.mxu0 0.0
    %3018 = vmatprep.subr.mxu0 0.0
    %3019 = vmatpush1.xpose.msra.mxu0 0.0
    %3020 = vmatprep.subr.mxu0 0.0
    %3021 = vmatpush1.xpose.msra.mxu0 0.0
    %3022 = vmatprep.subr.mxu0 0.0
    %3023 = vmatpush1.xpose.msra.mxu0 0.0
    %3024 = vmatprep.subr.mxu0 0.0
    %3025 = vmatpush1.xpose.msra.mxu0 0.0
    %3026 = vmatprep.subr.mxu0 0.0
    %3027 = vmatpush1.xpose.msra.mxu0 0.0
    %3028 = vmatprep.subr.mxu0 0.0
    %3029 = vmatpush1.xpose.msra.mxu0 0.0
    %3030 = vmatprep.subr.mxu0 0.0
    %3031 = vmatpush1.xpose.msra.mxu0 0.0
    %3032 = vmatprep.subr.mxu0 0.0
    %3033 = vmatpush1.xpose.msra.mxu0 0.0
    %3034 = vmatprep.subr.mxu0 0.0
    %3035 = vmatpush1.xpose.msra.mxu0 0.0
    %3036 = vmatprep.subr.mxu0 0.0
    %3037 = vmatpush1.xpose.msra.mxu0 0.0
    %3038 = vmatprep.subr.mxu0 0.0
    %3039 = vmatpush1.xpose.msra.mxu0 0.0
    %3040 = vmatprep.subr.mxu0 0.0
    %3041 = vmatpush1.xpose.msra.mxu0 0.0
    %3042 = vmatprep.subr.mxu0 0.0
    %3043 = vmatpush1.xpose.msra.mxu0 0.0
    %3044 = vmatprep.subr.mxu0 0.0
    %3045 = vmatpush1.xpose.msra.mxu0 0.0
    %3046 = vmatprep.subr.mxu0 0.0
    %3047 = vmatpush1.xpose.msra.mxu0 0.0
    %3048 = vmatprep.subr.mxu0 0.0
    %3049 = vmatpush1.xpose.msra.mxu0 0.0
    %3050 = vmatprep.subr.mxu0 0.0
    %3051 = vmatpush1.xpose.msra.mxu0 0.0
    %3052 = vmatprep.subr.mxu0 0.0
    %3053 = vmatpush1.xpose.msra.mxu0 0.0
    %3054 = vmatprep.subr.mxu0 0.0
    %3055 = vmatpush1.xpose.msra.mxu0 0.0
    %3056 = vmatprep.mubr.f32.mxu0 0.0
    %3057 = vmatmul.mubr.f32.gmra.mrb[0].mxu0 %v397
    %v3058 = vpop.f32.mrb[0].mxu0
    %v3059 = vadd.f32 0.0, %v3058
    %v3060 = vpop.f32.mrb[0].mxu0
    %3061 = vdwg.mxu0
    %v3063 = vsel %vm885, %v2346, 0
    %v3066 = vsel %vm885, %v2347, 0
    %v3069 = vsel %vm885, %v2348, 0
    %v3072 = vsel %vm885, %v2349, 0
    %3074 = vmatprep.subr.mxu0 0.0
    %3075 = vmatpush1.xpose.msra.mxu0 %v3063
    %3076 = vmatprep.subr.mxu0 0.0
    %3077 = vmatpush1.xpose.msra.mxu0 %v3066
    %3078 = vmatprep.subr.mxu0 0.0
    %3079 = vmatpush1.xpose.msra.mxu0 %v3069
    %3080 = vmatprep.subr.mxu0 0.0
    %3081 = vmatpush1.xpose.msra.mxu0 %v3072
    %3082 = vmatprep.subr.mxu0 0.0
    %3083 = vmatpush1.xpose.msra.mxu0 0.0
    %3084 = vmatprep.subr.mxu0 0.0
    %3085 = vmatpush1.xpose.msra.mxu0 0.0
    %3086 = vmatprep.subr.mxu0 0.0
    %3087 = vmatpush1.xpose.msra.mxu0 0.0
    %3088 = vmatprep.subr.mxu0 0.0
    %3089 = vmatpush1.xpose.msra.mxu0 0.0
    %3090 = vmatprep.subr.mxu0 0.0
    %3091 = vmatpush1.xpose.msra.mxu0 0.0
    %3092 = vmatprep.subr.mxu0 0.0
    %3093 = vmatpush1.xpose.msra.mxu0 0.0
    %3094 = vmatprep.subr.mxu0 0.0
    %3095 = vmatpush1.xpose.msra.mxu0 0.0
    %3096 = vmatprep.subr.mxu0 0.0
    %3097 = vmatpush1.xpose.msra.mxu0 0.0
    %3098 = vmatprep.subr.mxu0 0.0
    %3099 = vmatpush1.xpose.msra.mxu0 0.0
    %3100 = vmatprep.subr.mxu0 0.0
    %3101 = vmatpush1.xpose.msra.mxu0 0.0
    %3102 = vmatprep.subr.mxu0 0.0
    %3103 = vmatpush1.xpose.msra.mxu0 0.0
    %3104 = vmatprep.subr.mxu0 0.0
    %3105 = vmatpush1.xpose.msra.mxu0 0.0
    %3106 = vmatprep.subr.mxu0 0.0
    %3107 = vmatpush1.xpose.msra.mxu0 0.0
    %3108 = vmatprep.subr.mxu0 0.0
    %3109 = vmatpush1.xpose.msra.mxu0 0.0
    %3110 = vmatprep.subr.mxu0 0.0
    %3111 = vmatpush1.xpose.msra.mxu0 0.0
    %3112 = vmatprep.subr.mxu0 0.0
    %3113 = vmatpush1.xpose.msra.mxu0 0.0
    %3114 = vmatprep.subr.mxu0 0.0
    %3115 = vmatpush1.xpose.msra.mxu0 0.0
    %3116 = vmatprep.subr.mxu0 0.0
    %3117 = vmatpush1.xpose.msra.mxu0 0.0
    %3118 = vmatprep.subr.mxu0 0.0
    %3119 = vmatpush1.xpose.msra.mxu0 0.0
    %3120 = vmatprep.subr.mxu0 0.0
    %3121 = vmatpush1.xpose.msra.mxu0 0.0
    %3122 = vmatprep.subr.mxu0 0.0
    %3123 = vmatpush1.xpose.msra.mxu0 0.0
    %3124 = vmatprep.subr.mxu0 0.0
    %3125 = vmatpush1.xpose.msra.mxu0 0.0
    %3126 = vmatprep.subr.mxu0 0.0
    %3127 = vmatpush1.xpose.msra.mxu0 0.0
    %3128 = vmatprep.subr.mxu0 0.0
    %3129 = vmatpush1.xpose.msra.mxu0 0.0
    %3130 = vmatprep.subr.mxu0 0.0
    %3131 = vmatpush1.xpose.msra.mxu0 0.0
    %3132 = vmatprep.subr.mxu0 0.0
    %3133 = vmatpush1.xpose.msra.mxu0 0.0
    %3134 = vmatprep.subr.mxu0 0.0
    %3135 = vmatpush1.xpose.msra.mxu0 0.0
    %3136 = vmatprep.subr.mxu0 0.0
    %3137 = vmatpush1.xpose.msra.mxu0 0.0
    %3138 = vmatprep.mubr.f32.mxu0 0.0
    %3139 = vmatmul.mubr.f32.gmra.mrb[0].mxu0 %v3063
    %v3140 = vpop.f32.mrb[0].mxu0
    %v3141 = vadd.f32 0.0, %v3140
    %v3142 = vpop.f32.mrb[0].mxu0
    %3143 = vmatprep.mubr.f32.mxu0 0.0
    %3144 = vmatmul.mubr.f32.gmra.mrb[0].mxu0 %v3066
    %v3145 = vpop.f32.mrb[0].mxu0
    %v3146 = vadd.f32 0.0, %v3145
    %v3147 = vpop.f32.mrb[0].mxu0
    %3148 = vmatprep.mubr.f32.mxu0 0.0
    %3149 = vmatmul.mubr.f32.gmra.mrb[0].mxu0 %v3069
    %v3150 = vpop.f32.mrb[0].mxu0
    %v3151 = vadd.f32 0.0, %v3150
    %v3152 = vpop.f32.mrb[0].mxu0
    %3153 = vmatprep.mubr.f32.mxu0 0.0
    %3154 = vmatmul.mubr.f32.gmra.mrb[0].mxu0 %v3072
    %v3155 = vpop.f32.mrb[0].mxu0
    %v3156 = vadd.f32 0.0, %v3155
    %v3157 = vpop.f32.mrb[0].mxu0
    %3158 = vdwg.mxu0
    %v3159 = vlaneseq
    %v3160 = vshrl.u32 %v3159, 7
    %v3161 = vsub.s32 0, %v3160
    %v3162 = vrot.slane %v3059, %v3161
    %vm3163 = vcmp.gt.f32.partialorder %v3162, %v2976
    %vm3164 = vcmp.gt.f32.partialorder %v3162, %v2977
    %vm3165 = vcmp.gt.f32.partialorder %v3162, %v2978
    %vm3166 = vcmp.gt.f32.partialorder %v3162, %v2979
    %vm3167 = vcmp.eq.f32.partialorder %v3162, %v2976
    %vm3168 = vcmp.eq.f32.partialorder %v3162, %v2977
    %vm3169 = vcmp.eq.f32.partialorder %v3162, %v2978
    %vm3170 = vcmp.eq.f32.partialorder %v3162, %v2979
    %vm3171 = vmand %vm3167, %vm995
    %vm3172 = vmand %vm3168, %vm996
    %vm3173 = vmand %vm3169, %vm997
    %vm3174 = vmand %vm3170, %vm998
    %vm3175 = vmor %vm3163, %vm3171
    %vm3176 = vmor %vm3164, %vm3172
    %vm3177 = vmor %vm3165, %vm3173
    %vm3178 = vmor %vm3166, %vm3174
    %v3179 = vsel %vm3175, 1, 0
    %v3180 = vsel %vm3176, 1, 0
    %v3181 = vsel %vm3177, 1, 0
    %v3182 = vsel %vm3178, 1, 0
    %v3183 = vcvt.s32.f32 %v3179
    %v3184 = vcvt.s32.f32 %v3180
    %v3185 = vcvt.s32.f32 %v3181
    %v3186 = vcvt.s32.f32 %v3182
    %v3187 = vmul.f32 %v3141, %v3183
    %v3188 = vmul.f32 %v3146, %v3184
    %v3189 = vmul.f32 %v3151, %v3185
    %v3190 = vmul.f32 %v3156, %v3186
    %v3191 = vsel %vm610, %v3187, 0.0
    %3192 = vadd.xlane.f32.xlu0 %v3191
    %v3193 = vpop.xlane.xlu0 %3192
    %v3194 = vsel %vm610, %v3188, 0.0
    %3195 = vadd.xlane.f32.xlu0 %v3194
    %v3196 = vpop.xlane.xlu0 %3195
    %v3197 = vsel %vm610, %v3189, 0.0
    %3198 = vadd.xlane.f32.xlu0 %v3197
    %v3199 = vpop.xlane.xlu0 %3198
    %v3200 = vsel %vm610, %v3190, 0.0
    %3201 = vadd.xlane.f32.xlu0 %v3200
    %v3202 = vpop.xlane.xlu0 %3201
    %v3203 = vsel %vm885, %v2346, 0.0
    %v3204 = vsel %vm885, %v2347, 0.0
    %v3205 = vadd.f32 %v3203, %v3204
    %v3206 = vsel %vm885, %v2348, 0.0
    %v3207 = vadd.f32 %v3205, %v3206
    %v3208 = vsel %vm885, %v2349, 0.0
    %v3209 = vadd.f32 %v3207, %v3208
    %v3210 = vrot.slane %v3209, 4
    %v3211 = vadd.f32 %v3209, %v3210
    %v3212 = vrot.slane %v3211, 2
    %v3213 = vadd.f32 %v3211, %v3212
    %v3214 = vrot.slane %v3213, 1
    %v3215 = vadd.f32 %v3213, %v3214
    %v3216 = vmul.f32 %v3215, 0.8
    %v3217 = vsub.f32 %v3216, 0.0001
    %v3218 = vceil.f32 %v3217
    %v3219 = vmul.f32 %v2346, %v3218
    %v3220 = vmul.f32 %v2347, %v3218
    %v3221 = vmul.f32 %v2348, %v3218
    %v3222 = vmul.f32 %v2349, %v3218
    %v3223 = vsel %vm885, %v3219, 0.0
    %3224 = vadd.xlane.f32.xlu0 %v3223
    %v3225 = vpop.xlane.xlu0 %3224
    %v3226 = vsel %vm885, %v3220, 0.0
    %3227 = vadd.xlane.f32.xlu0 %v3226
    %v3228 = vpop.xlane.xlu0 %3227
    %v3229 = vsel %vm885, %v3221, 0.0
    %3230 = vadd.xlane.f32.xlu0 %v3229
    %v3231 = vpop.xlane.xlu0 %3230
    %v3232 = vsel %vm885, %v3222, 0.0
    %3233 = vadd.xlane.f32.xlu0 %v3232
    %v3234 = vpop.xlane.xlu0 %3233
    %vm3235 = vcmp.lt.f32.partialorder %v3193, %v3225
    %vm3236 = vcmp.lt.f32.partialorder %v3196, %v3228
    %vm3237 = vcmp.lt.f32.partialorder %v3199, %v3231
    %vm3238 = vcmp.lt.f32.partialorder %v3202, %v3234
    %vm3239 = vcmp.gt.f32.partialorder %v2164, 0.0
    %vm3240 = vcmp.gt.f32.partialorder %v2165, 0.0
    %vm3241 = vcmp.gt.f32.partialorder %v2166, 0.0
    %vm3242 = vcmp.gt.f32.partialorder %v2167, 0.0
    %vm3243 = vmand %vm3235, %vm3239
    %vm3244 = vmand %vm3236, %vm3240
    %vm3245 = vmand %vm3237, %vm3241
    %vm3246 = vmand %vm3238, %vm3242
    %v3247 = vsel %vm3243, 1.0, 0.0
    %v3248 = vsel %vm3244, 1.0, 0.0
    %v3249 = vsel %vm3245, 1.0, 0.0
    %v3250 = vsel %vm3246, 1.0, 0.0
    %v3251 = vtanh.pop %v2976
    %v3252 = vtanh.pop %v2977
    %v3253 = vtanh.pop %v2978
    %v3254 = vtanh.pop %v2979
    %v3255 = vmul.f32 %v2944, %v3251
    %v3256 = vmul.f32 %v2945, %v3252
    %v3257 = vmul.f32 %v2946, %v3253
    %v3258 = vmul.f32 %v2947, %v3254
    %v3259 = vmul.f32 %v3255, %v3247
    %v3260 = vmul.f32 %v3256, %v3248
    %v3261 = vmul.f32 %v3257, %v3249
    %v3262 = vmul.f32 %v3258, %v3250
    %v3264 = vsel %vm395, %v3247, 0
    %v3267 = vsel %vm395, %v3248, 0
    %v3270 = vsel %vm395, %v3249, 0
    %v3273 = vsel %vm395, %v3250, 0
    %3275 = vmatprep.subr.mxu0 0.0
    %3276 = vmatpush1.xpose.msra.mxu0 %v3264
    %3277 = vmatprep.subr.mxu0 0.0
    %3278 = vmatpush1.xpose.msra.mxu0 %v3267
    %3279 = vmatprep.subr.mxu0 0.0
    %3280 = vmatpush1.xpose.msra.mxu0 %v3270
    %3281 = vmatprep.subr.mxu0 0.0
    %3282 = vmatpush1.xpose.msra.mxu0 %v3273
    %3283 = vmatprep.subr.mxu0 0.0
    %3284 = vmatpush1.xpose.msra.mxu0 0.0
    %3285 = vmatprep.subr.mxu0 0.0
    %3286 = vmatpush1.xpose.msra.mxu0 0.0
    %3287 = vmatprep.subr.mxu0 0.0
    %3288 = vmatpush1.xpose.msra.mxu0 0.0
    %3289 = vmatprep.subr.mxu0 0.0
    %3290 = vmatpush1.xpose.msra.mxu0 0.0
    %3291 = vmatprep.subr.mxu0 0.0
    %3292 = vmatpush1.xpose.msra.mxu0 0.0
    %3293 = vmatprep.subr.mxu0 0.0
    %3294 = vmatpush1.xpose.msra.mxu0 0.0
    %3295 = vmatprep.subr.mxu0 0.0
    %3296 = vmatpush1.xpose.msra.mxu0 0.0
    %3297 = vmatprep.subr.mxu0 0.0
    %3298 = vmatpush1.xpose.msra.mxu0 0.0
    %3299 = vmatprep.subr.mxu0 0.0
    %3300 = vmatpush1.xpose.msra.mxu0 0.0
    %3301 = vmatprep.subr.mxu0 0.0
    %3302 = vmatpush1.xpose.msra.mxu0 0.0
    %3303 = vmatprep.subr.mxu0 0.0
    %3304 = vmatpush1.xpose.msra.mxu0 0.0
    %3305 = vmatprep.subr.mxu0 0.0
    %3306 = vmatpush1.xpose.msra.mxu0 0.0
    %3307 = vmatprep.subr.mxu0 0.0
    %3308 = vmatpush1.xpose.msra.mxu0 0.0
    %3309 = vmatprep.subr.mxu0 0.0
    %3310 = vmatpush1.xpose.msra.mxu0 0.0
    %3311 = vmatprep.subr.mxu0 0.0
    %3312 = vmatpush1.xpose.msra.mxu0 0.0
    %3313 = vmatprep.subr.mxu0 0.0
    %3314 = vmatpush1.xpose.msra.mxu0 0.0
    %3315 = vmatprep.subr.mxu0 0.0
    %3316 = vmatpush1.xpose.msra.mxu0 0.0
    %3317 = vmatprep.subr.mxu0 0.0
    %3318 = vmatpush1.xpose.msra.mxu0 0.0
    %3319 = vmatprep.subr.mxu0 0.0
    %3320 = vmatpush1.xpose.msra.mxu0 0.0
    %3321 = vmatprep.subr.mxu0 0.0
    %3322 = vmatpush1.xpose.msra.mxu0 0.0
    %3323 = vmatprep.subr.mxu0 0.0
    %3324 = vmatpush1.xpose.msra.mxu0 0.0
    %3325 = vmatprep.subr.mxu0 0.0
    %3326 = vmatpush1.xpose.msra.mxu0 0.0
    %3327 = vmatprep.subr.mxu0 0.0
    %3328 = vmatpush1.xpose.msra.mxu0 0.0
    %3329 = vmatprep.subr.mxu0 0.0
    %3330 = vmatpush1.xpose.msra.mxu0 0.0
    %3331 = vmatprep.subr.mxu0 0.0
    %3332 = vmatpush1.xpose.msra.mxu0 0.0
    %3333 = vmatprep.subr.mxu0 0.0
    %3334 = vmatpush1.xpose.msra.mxu0 0.0
    %3335 = vmatprep.subr.mxu0 0.0
    %3336 = vmatpush1.xpose.msra.mxu0 0.0
    %3337 = vmatprep.subr.mxu0 0.0
    %3338 = vmatpush1.xpose.msra.mxu0 0.0
    %3339 = vmatprep.mubr.f32.mxu0 0.0
    %3340 = vmatmul.mubr.f32.gmra.mrb[0].mxu0 %v397
    %v3341 = vpop.f32.mrb[0].mxu0
    %v3342 = vadd.f32 0.0, %v3341
    %v3343 = vpop.f32.mrb[0].mxu0
    %3344 = vdwg.mxu0
    %v3345 = vlaneseq
    %v3346 = vshrl.u32 %v3345, 7
    %v3347 = vsub.s32 0, %v3346
    %v3348 = vrot.slane %v3342, %v3347
    %v3349 = vmul.f32 %v236, %v3348
    %v3350 = vsel %vm1175, %v3349, 0.0
    %3351 = vadd.xlane.f32.xlu0 %v3350
    %v3352 = vpop.xlane.xlu0 %3351
    %v3354 = vsel %vm610, %v3349, 0
    %3356 = vmatprep.subr.mxu0 0.0
    %3357 = vmatpush1.msra.mxu0 %v3259
    %3358 = vmatprep.subr.mxu0 0.0
    %3359 = vmatpush1.msra.mxu0 %v3260
    %3360 = vmatprep.subr.mxu0 0.0
    %3361 = vmatpush1.msra.mxu0 %v3261
    %3362 = vmatprep.subr.mxu0 0.0
    %3363 = vmatpush1.msra.mxu0 %v3262
    %3364 = vmatprep.subr.mxu0 0.0
    %3365 = vmatpush1.msra.mxu0 0.0
    %3366 = vmatprep.subr.mxu0 0.0
    %3367 = vmatpush1.msra.mxu0 0.0
    %3368 = vmatprep.subr.mxu0 0.0
    %3369 = vmatpush1.msra.mxu0 0.0
    %3370 = vmatprep.subr.mxu0 0.0
    %3371 = vmatpush1.msra.mxu0 0.0
    %3372 = vmatprep.subr.mxu0 0.0
    %3373 = vmatpush1.msra.mxu0 0.0
    %3374 = vmatprep.subr.mxu0 0.0
    %3375 = vmatpush1.msra.mxu0 0.0
    %3376 = vmatprep.subr.mxu0 0.0
    %3377 = vmatpush1.msra.mxu0 0.0
    %3378 = vmatprep.subr.mxu0 0.0
    %3379 = vmatpush1.msra.mxu0 0.0
    %3380 = vmatprep.subr.mxu0 0.0
    %3381 = vmatpush1.msra.mxu0 0.0
    %3382 = vmatprep.subr.mxu0 0.0
    %3383 = vmatpush1.msra.mxu0 0.0
    %3384 = vmatprep.subr.mxu0 0.0
    %3385 = vmatpush1.msra.mxu0 0.0
    %3386 = vmatprep.subr.mxu0 0.0
    %3387 = vmatpush1.msra.mxu0 0.0
    %3388 = vmatprep.subr.mxu0 0.0
    %3389 = vmatpush1.msra.mxu0 0.0
    %3390 = vmatprep.subr.mxu0 0.0
    %3391 = vmatpush1.msra.mxu0 0.0
    %3392 = vmatprep.subr.mxu0 0.0
    %3393 = vmatpush1.msra.mxu0 0.0
    %3394 = vmatprep.subr.mxu0 0.0
    %3395 = vmatpush1.msra.mxu0 0.0
    %3396 = vmatprep.subr.mxu0 0.0
    %3397 = vmatpush1.msra.mxu0 0.0
    %3398 = vmatprep.subr.mxu0 0.0
    %3399 = vmatpush1.msra.mxu0 0.0
    %3400 = vmatprep.subr.mxu0 0.0
    %3401 = vmatpush1.msra.mxu0 0.0
    %3402 = vmatprep.subr.mxu0 0.0
    %3403 = vmatpush1.msra.mxu0 0.0
    %3404 = vmatprep.subr.mxu0 0.0
    %3405 = vmatpush1.msra.mxu0 0.0
    %3406 = vmatprep.subr.mxu0 0.0
    %3407 = vmatpush1.msra.mxu0 0.0
    %3408 = vmatprep.subr.mxu0 0.0
    %3409 = vmatpush1.msra.mxu0 0.0
    %3410 = vmatprep.subr.mxu0 0.0
    %3411 = vmatpush1.msra.mxu0 0.0
    %3412 = vmatprep.subr.mxu0 0.0
    %3413 = vmatpush1.msra.mxu0 0.0
    %3414 = vmatprep.subr.mxu0 0.0
    %3415 = vmatpush1.msra.mxu0 0.0
    %3416 = vmatprep.subr.mxu0 0.0
    %3417 = vmatpush1.msra.mxu0 0.0
    %3418 = vmatprep.subr.mxu0 0.0
    %3419 = vmatpush1.msra.mxu0 0.0
    %3420 = vmatprep.mubr.f32.mxu0 0.0
    %3421 = vmatmul.mubr.f32.gmra.mrb[0].mxu0 %v3354
    %v3422 = vpop.f32.mrb[0].mxu0
    %v3423 = vadd.f32 0.0, %v3422
    %v3424 = vpop.f32.mrb[0].mxu0
    %3425 = vdwg.mxu0
    %v3426 = vmax.f32 %v3352, 1.0
    %v3427 = vrcp.pop %v3426
    %v3428 = vmul.f32 %v3423, %v3427
    %v3429 = vmul.f32 %v232, %v3247
    %v3430 = vmul.f32 %v233, %v3248
    %v3431 = vmul.f32 %v234, %v3249
    %v3432 = vmul.f32 %v235, %v3250
    %v3433 = vmul.f32 %v3429, %v1261
    %v3434 = vmul.f32 %v3430, %v1261
    %v3435 = vmul.f32 %v3431, %v1261
    %v3436 = vmul.f32 %v3432, %v1261
    %v3437 = vsel %vm885, %v3433, 0.0
    %3438 = vadd.xlane.f32.xlu0 %v3437
    %v3439 = vpop.xlane.xlu0 %3438
    %v3440 = vsel %vm885, %v3434, 0.0
    %3441 = vadd.xlane.f32.xlu0 %v3440
    %v3442 = vpop.xlane.xlu0 %3441
    %v3443 = vsel %vm885, %v3435, 0.0
    %3444 = vadd.xlane.f32.xlu0 %v3443
    %v3445 = vpop.xlane.xlu0 %3444
    %v3446 = vsel %vm885, %v3436, 0.0
    %3447 = vadd.xlane.f32.xlu0 %v3446
    %v3448 = vpop.xlane.xlu0 %3447
    %vm3449 = vcmp.gt.f32.partialorder %v3439, 0.0
    %vm3450 = vcmp.gt.f32.partialorder %v3442, 0.0
    %vm3451 = vcmp.gt.f32.partialorder %v3445, 0.0
    %vm3452 = vcmp.gt.f32.partialorder %v3448, 0.0
    %v3453 = vsel %vm3449, 1, 0
    %v3454 = vsel %vm3450, 1, 0
    %v3455 = vsel %vm3451, 1, 0
    %v3456 = vsel %vm3452, 1, 0
    %vm3457 = vcmp.eq.s32.totalorder %v3453, 1
    %vm3458 = vcmp.eq.s32.totalorder %v3454, 1
    %vm3459 = vcmp.eq.s32.totalorder %v3455, 1
    %vm3460 = vcmp.eq.s32.totalorder %v3456, 1
    %v3461 = vsel %vm3457, %v3259, -1e+30
    %v3462 = vsel %vm3458, %v3260, -1e+30
    %v3463 = vsel %vm3459, %v3261, -1e+30
    %v3464 = vsel %vm3460, %v3262, -1e+30
    %v3465 = vmax.f32 %v3461, %v3462
    %v3466 = vmax.f32 %v3463, %v3464
    %v3467 = vmax.f32 %v3465, %v3466
    %v3468 = vrot.slane %v3467, 4
    %v3469 = vmax.f32 %v3467, %v3468
    %v3470 = vrot.slane %v3469, 2
    %v3471 = vmax.f32 %v3469, %v3470
    %v3472 = vrot.slane %v3471, 1
    %v3473 = vmax.f32 %v3471, %v3472
    %v3474 = vsel %vm1303, %v3473, -1e+30
    %v3475 = vmul.f32 %v3429, %v1307
    %v3476 = vmul.f32 %v3430, %v1307
    %v3477 = vmul.f32 %v3431, %v1307
    %v3478 = vmul.f32 %v3432, %v1307
    %v3479 = vsel %vm885, %v3475, 0.0
    %3480 = vadd.xlane.f32.xlu0 %v3479
    %v3481 = vpop.xlane.xlu0 %3480
    %v3482 = vsel %vm885, %v3476, 0.0
    %3483 = vadd.xlane.f32.xlu0 %v3482
    %v3484 = vpop.xlane.xlu0 %3483
    %v3485 = vsel %vm885, %v3477, 0.0
    %3486 = vadd.xlane.f32.xlu0 %v3485
    %v3487 = vpop.xlane.xlu0 %3486
    %v3488 = vsel %vm885, %v3478, 0.0
    %3489 = vadd.xlane.f32.xlu0 %v3488
    %v3490 = vpop.xlane.xlu0 %3489
    %vm3491 = vcmp.gt.f32.partialorder %v3481, 0.0
    %vm3492 = vcmp.gt.f32.partialorder %v3484, 0.0
    %vm3493 = vcmp.gt.f32.partialorder %v3487, 0.0
    %vm3494 = vcmp.gt.f32.partialorder %v3490, 0.0
    %v3495 = vsel %vm3491, 1, 0
    %v3496 = vsel %vm3492, 1, 0
    %v3497 = vsel %vm3493, 1, 0
    %v3498 = vsel %vm3494, 1, 0
    %vm3499 = vcmp.eq.s32.totalorder %v3495, 1
    %vm3500 = vcmp.eq.s32.totalorder %v3496, 1
    %vm3501 = vcmp.eq.s32.totalorder %v3497, 1
    %vm3502 = vcmp.eq.s32.totalorder %v3498, 1
    %v3503 = vsel %vm3499, %v3259, -1e+30
    %v3504 = vsel %vm3500, %v3260, -1e+30
    %v3505 = vsel %vm3501, %v3261, -1e+30
    %v3506 = vsel %vm3502, %v3262, -1e+30
    %v3507 = vmax.f32 %v3503, %v3504
    %v3508 = vmax.f32 %v3505, %v3506
    %v3509 = vmax.f32 %v3507, %v3508
    %v3510 = vrot.slane %v3509, 4
    %v3511 = vmax.f32 %v3509, %v3510
    %v3512 = vrot.slane %v3511, 2
    %v3513 = vmax.f32 %v3511, %v3512
    %v3514 = vrot.slane %v3513, 1
    %v3515 = vmax.f32 %v3513, %v3514
    %v3516 = vsel %vm1349, %v3515, %v3474
    %v3517 = vadd.f32 %v1350, %v2433
    %v3518 = vadd.f32 %v1254, %v2345
    %v3519 = vadd.f32 %v3517, %v3516
    %v3520 = vadd.f32 %v3518, %v3428
    %v3521 = vld [vmem:[%s19] sm:$0xff]
    %v3522 = vld [vmem:[%s19 + $0x8] sm:$0xff]
    %v3523 = vld [vmem:[%s19 + $0x10] sm:$0xff]
    %v3524 = vld [vmem:[%s19 + $0x18] sm:$0xff]
    %v3525 = vld [vmem:[%s19 + $0x20] sm:$0xff]
    %v3526 = vld [vmem:[%s19 + $0x28] sm:$0xff]
    %v3527 = vld [vmem:[%s19 + $0x30] sm:$0xff]
    %v3528 = vld [vmem:[%s19 + $0x38] sm:$0xff]
    %v3529 = vld [vmem:[%s19 + $0x40] sm:$0xff]
    %v3530 = vld [vmem:[%s19 + $0x48] sm:$0xff]
    %v3531 = vld [vmem:[%s19 + $0x50] sm:$0xff]
    %v3532 = vld [vmem:[%s19 + $0x58] sm:$0xff]
    %v3533 = vld [vmem:[%s19 + $0x60] sm:$0xff]
    %v3534 = vld [vmem:[%s19 + $0x68] sm:$0xff]
    %v3535 = vld [vmem:[%s19 + $0x70] sm:$0xff]
    %v3536 = vld [vmem:[%s19 + $0x78] sm:$0xff]
    %v3537 = vld [vmem:[%s19 + $0x80] sm:$0xff]
    %v3538 = vld [vmem:[%s19 + $0x88] sm:$0xff]
    %v3539 = vld [vmem:[%s19 + $0x90] sm:$0xff]
    %v3540 = vld [vmem:[%s19 + $0x98] sm:$0xff]
    %v3541 = vld [vmem:[%s19 + $0xa0] sm:$0xff]
    %v3542 = vld [vmem:[%s19 + $0xa8] sm:$0xff]
    %v3543 = vld [vmem:[%s19 + $0xb0] sm:$0xff]
    %v3544 = vld [vmem:[%s19 + $0xb8] sm:$0xff]
    %v3545 = vld [vmem:[%s19 + $0xc0] sm:$0xff]
    %v3546 = vld [vmem:[%s19 + $0xc8] sm:$0xff]
    %v3547 = vld [vmem:[%s19 + $0xd0] sm:$0xff]
    %v3548 = vld [vmem:[%s19 + $0xd8] sm:$0xff]
    %v3549 = vld [vmem:[%s19 + $0xe0] sm:$0xff]
    %v3550 = vld [vmem:[%s19 + $0xe8] sm:$0xff]
    %v3551 = vld [vmem:[%s19 + $0xf0] sm:$0xff]
    %v3552 = vld [vmem:[%s19 + $0xf8] sm:$0xff]
    %v3553 = vld [vmem:[#allocation20] sm:$0x1]
    %v3555 = vlaneseq
    %v3556 = vshrl.u32 %v3555, 7
    %v3557 = vsub.s32 0, %v3556
    %v3558 = vrot.slane %v3553, %v3557
    %3560 = vmatprep.subr.mxu0 0.0
    %3561 = vmatpush1.msra.mxu0 %v3521
    %3562 = vmatprep.subr.mxu0 0.0
    %3563 = vmatpush1.msra.mxu0 %v3522
    %3564 = vmatprep.subr.mxu0 0.0
    %3565 = vmatpush1.msra.mxu0 %v3523
    %3566 = vmatprep.subr.mxu0 0.0
    %3567 = vmatpush1.msra.mxu0 %v3524
    %3568 = vmatprep.subr.mxu0 0.0
    %3569 = vmatpush1.msra.mxu0 %v3525
    %3570 = vmatprep.subr.mxu0 0.0
    %3571 = vmatpush1.msra.mxu0 %v3526
    %3572 = vmatprep.subr.mxu0 0.0
    %3573 = vmatpush1.msra.mxu0 %v3527
    %3574 = vmatprep.subr.mxu0 0.0
    %3575 = vmatpush1.msra.mxu0 %v3528
    %3576 = vmatprep.subr.mxu0 0.0
    %3577 = vmatpush1.msra.mxu0 %v3529
    %3578 = vmatprep.subr.mxu0 0.0
    %3579 = vmatpush1.msra.mxu0 %v3530
    %3580 = vmatprep.subr.mxu0 0.0
    %3581 = vmatpush1.msra.mxu0 %v3531
    %3582 = vmatprep.subr.mxu0 0.0
    %3583 = vmatpush1.msra.mxu0 %v3532
    %3584 = vmatprep.subr.mxu0 0.0
    %3585 = vmatpush1.msra.mxu0 %v3533
    %3586 = vmatprep.subr.mxu0 0.0
    %3587 = vmatpush1.msra.mxu0 %v3534
    %3588 = vmatprep.subr.mxu0 0.0
    %3589 = vmatpush1.msra.mxu0 %v3535
    %3590 = vmatprep.subr.mxu0 0.0
    %3591 = vmatpush1.msra.mxu0 %v3536
    %3592 = vmatprep.subr.mxu0 0.0
    %3593 = vmatpush1.msra.mxu0 %v3537
    %3594 = vmatprep.subr.mxu0 0.0
    %3595 = vmatpush1.msra.mxu0 %v3538
    %3596 = vmatprep.subr.mxu0 0.0
    %3597 = vmatpush1.msra.mxu0 %v3539
    %3598 = vmatprep.subr.mxu0 0.0
    %3599 = vmatpush1.msra.mxu0 %v3540
    %3600 = vmatprep.subr.mxu0 0.0
    %3601 = vmatpush1.msra.mxu0 %v3541
    %3602 = vmatprep.subr.mxu0 0.0
    %3603 = vmatpush1.msra.mxu0 %v3542
    %3604 = vmatprep.subr.mxu0 0.0
    %3605 = vmatpush1.msra.mxu0 %v3543
    %3606 = vmatprep.subr.mxu0 0.0
    %3607 = vmatpush1.msra.mxu0 %v3544
    %3608 = vmatprep.subr.mxu0 0.0
    %3609 = vmatpush1.msra.mxu0 %v3545
    %3610 = vmatprep.subr.mxu0 0.0
    %3611 = vmatpush1.msra.mxu0 %v3546
    %3612 = vmatprep.subr.mxu0 0.0
    %3613 = vmatpush1.msra.mxu0 %v3547
    %3614 = vmatprep.subr.mxu0 0.0
    %3615 = vmatpush1.msra.mxu0 %v3548
    %3616 = vmatprep.subr.mxu0 0.0
    %3617 = vmatpush1.msra.mxu0 %v3549
    %3618 = vmatprep.subr.mxu0 0.0
    %3619 = vmatpush1.msra.mxu0 %v3550
    %3620 = vmatprep.subr.mxu0 0.0
    %3621 = vmatpush1.msra.mxu0 %v3551
    %3622 = vmatprep.subr.mxu0 0.0
    %3623 = vmatpush1.msra.mxu0 %v3552
    %3624 = vmatprep.mubr.f32.mxu0 %v3520
    %3625 = vmatmul.mubr.f32.gmra.mrb[0].mxu0 %v3519
    %v3626 = vpop.f32.mrb[0].mxu0
    %v3627 = vadd.f32 %v3558, %v3626
    %v3628 = vpop.f32.mrb[0].mxu0
    %3629 = vdwg.mxu0
    %v3630 = vmax.f32 %v3627, 0.0
    %v3631 = vld [vmem:[%s21] sm:$0xff]
    %v3632 = vld [vmem:[%s21 + $0x8] sm:$0xff]
    %v3633 = vld [vmem:[%s21 + $0x10] sm:$0xff]
    %v3634 = vld [vmem:[%s21 + $0x18] sm:$0xff]
    %v3635 = vld [vmem:[%s21 + $0x20] sm:$0xff]
    %v3636 = vld [vmem:[%s21 + $0x28] sm:$0xff]
    %v3637 = vld [vmem:[%s21 + $0x30] sm:$0xff]
    %v3638 = vld [vmem:[%s21 + $0x38] sm:$0xff]
    %v3639 = vld [vmem:[%s21 + $0x40] sm:$0xff]
    %v3640 = vld [vmem:[%s21 + $0x48] sm:$0xff]
    %v3641 = vld [vmem:[%s21 + $0x50] sm:$0xff]
    %v3642 = vld [vmem:[%s21 + $0x58] sm:$0xff]
    %v3643 = vld [vmem:[%s21 + $0x60] sm:$0xff]
    %v3644 = vld [vmem:[%s21 + $0x68] sm:$0xff]
    %v3645 = vld [vmem:[%s21 + $0x70] sm:$0xff]
    %v3646 = vld [vmem:[%s21 + $0x78] sm:$0xff]
    %v3647 = vld [vmem:[%s22] sm:$0x1]
    %v3649 = vlaneseq
    %v3650 = vshrl.u32 %v3649, 7
    %v3651 = vsub.s32 0, %v3650
    %v3652 = vrot.slane %v3647, %v3651
    %3654 = vmatprep.subr.mxu0 0.0
    %3655 = vmatpush1.msra.mxu0 %v3631
    %3656 = vmatprep.subr.mxu0 0.0
    %3657 = vmatpush1.msra.mxu0 %v3632
    %3658 = vmatprep.subr.mxu0 0.0
    %3659 = vmatpush1.msra.mxu0 %v3633
    %3660 = vmatprep.subr.mxu0 0.0
    %3661 = vmatpush1.msra.mxu0 %v3634
    %3662 = vmatprep.subr.mxu0 0.0
    %3663 = vmatpush1.msra.mxu0 %v3635
    %3664 = vmatprep.subr.mxu0 0.0
    %3665 = vmatpush1.msra.mxu0 %v3636
    %3666 = vmatprep.subr.mxu0 0.0
    %3667 = vmatpush1.msra.mxu0 %v3637
    %3668 = vmatprep.subr.mxu0 0.0
    %3669 = vmatpush1.msra.mxu0 %v3638
    %3670 = vmatprep.subr.mxu0 0.0
    %3671 = vmatpush1.msra.mxu0 %v3639
    %3672 = vmatprep.subr.mxu0 0.0
    %3673 = vmatpush1.msra.mxu0 %v3640
    %3674 = vmatprep.subr.mxu0 0.0
    %3675 = vmatpush1.msra.mxu0 %v3641
    %3676 = vmatprep.subr.mxu0 0.0
    %3677 = vmatpush1.msra.mxu0 %v3642
    %3678 = vmatprep.subr.mxu0 0.0
    %3679 = vmatpush1.msra.mxu0 %v3643
    %3680 = vmatprep.subr.mxu0 0.0
    %3681 = vmatpush1.msra.mxu0 %v3644
    %3682 = vmatprep.subr.mxu0 0.0
    %3683 = vmatpush1.msra.mxu0 %v3645
    %3684 = vmatprep.subr.mxu0 0.0
    %3685 = vmatpush1.msra.mxu0 %v3646
    %3686 = vmatprep.subr.mxu0 0.0
    %3687 = vmatpush1.msra.mxu0 0.0
    %3688 = vmatprep.subr.mxu0 0.0
    %3689 = vmatpush1.msra.mxu0 0.0
    %3690 = vmatprep.subr.mxu0 0.0
    %3691 = vmatpush1.msra.mxu0 0.0
    %3692 = vmatprep.subr.mxu0 0.0
    %3693 = vmatpush1.msra.mxu0 0.0
    %3694 = vmatprep.subr.mxu0 0.0
    %3695 = vmatpush1.msra.mxu0 0.0
    %3696 = vmatprep.subr.mxu0 0.0
    %3697 = vmatpush1.msra.mxu0 0.0
    %3698 = vmatprep.subr.mxu0 0.0
    %3699 = vmatpush1.msra.mxu0 0.0
    %3700 = vmatprep.subr.mxu0 0.0
    %3701 = vmatpush1.msra.mxu0 0.0
    %3702 = vmatprep.subr.mxu0 0.0
    %3703 = vmatpush1.msra.mxu0 0.0
    %3704 = vmatprep.subr.mxu0 0.0
    %3705 = vmatpush1.msra.mxu0 0.0
    %3706 = vmatprep.subr.mxu0 0.0
    %3707 = vmatpush1.msra.mxu0 0.0
    %3708 = vmatprep.subr.mxu0 0.0
    %3709 = vmatpush1.msra.mxu0 0.0
    %3710 = vmatprep.subr.mxu0 0.0
    %3711 = vmatpush1.msra.mxu0 0.0
    %3712 = vmatprep.subr.mxu0 0.0
    %3713 = vmatpush1.msra.mxu0 0.0
    %3714 = vmatprep.subr.mxu0 0.0
    %3715 = vmatpush1.msra.mxu0 0.0
    %3716 = vmatprep.subr.mxu0 0.0
    %3717 = vmatpush1.msra.mxu0 0.0
    %3718 = vmatprep.mubr.f32.mxu0 0.0
    %3719 = vmatmul.mubr.f32.gmra.mrb[0].mxu0 %v3630
    %v3720 = vpop.f32.mrb[0].mxu0
    %v3721 = vadd.f32 %v3652, %v3720
    %v3722 = vpop.f32.mrb[0].mxu0
    %3723 = vdwg.mxu0
    %v3724 = vmax.f32 %v3721, 0.0
    %v3725 = vld [vmem:[%s23] sm:$0xff]
    %v3726 = vld [vmem:[%s23 + $0x8] sm:$0xff]
    %v3727 = vld [vmem:[%s23 + $0x10] sm:$0xff]
    %v3728 = vld [vmem:[%s23 + $0x18] sm:$0xff]
    %v3729 = vld [vmem:[%s23 + $0x20] sm:$0xff]
    %v3730 = vld [vmem:[%s23 + $0x28] sm:$0xff]
    %v3731 = vld [vmem:[%s23 + $0x30] sm:$0xff]
    %v3732 = vld [vmem:[%s23 + $0x38] sm:$0xff]
    %v3733 = vld [vmem:[%s24] sm:$0x1]
    %v3735 = vlaneseq
    %v3736 = vshrl.u32 %v3735, 7
    %v3737 = vsub.s32 0, %v3736
    %v3738 = vrot.slane %v3733, %v3737
    %vm3740 = vcmask 523264
    %v3742 = vsel %vm3740, %v3724, 0
    %3744 = vmatprep.subr.mxu0 0.0
    %3745 = vmatpush1.msra.mxu0 %v3725
    %3746 = vmatprep.subr.mxu0 0.0
    %3747 = vmatpush1.msra.mxu0 %v3726
    %3748 = vmatprep.subr.mxu0 0.0
    %3749 = vmatpush1.msra.mxu0 %v3727
    %3750 = vmatprep.subr.mxu0 0.0
    %3751 = vmatpush1.msra.mxu0 %v3728
    %3752 = vmatprep.subr.mxu0 0.0
    %3753 = vmatpush1.msra.mxu0 %v3729
    %3754 = vmatprep.subr.mxu0 0.0
    %3755 = vmatpush1.msra.mxu0 %v3730
    %3756 = vmatprep.subr.mxu0 0.0
    %3757 = vmatpush1.msra.mxu0 %v3731
    %3758 = vmatprep.subr.mxu0 0.0
    %3759 = vmatpush1.msra.mxu0 %v3732
    %3760 = vmatprep.subr.mxu0 0.0
    %3761 = vmatpush1.msra.mxu0 0.0
    %3762 = vmatprep.subr.mxu0 0.0
    %3763 = vmatpush1.msra.mxu0 0.0
    %3764 = vmatprep.subr.mxu0 0.0
    %3765 = vmatpush1.msra.mxu0 0.0
    %3766 = vmatprep.subr.mxu0 0.0
    %3767 = vmatpush1.msra.mxu0 0.0
    %3768 = vmatprep.subr.mxu0 0.0
    %3769 = vmatpush1.msra.mxu0 0.0
    %3770 = vmatprep.subr.mxu0 0.0
    %3771 = vmatpush1.msra.mxu0 0.0
    %3772 = vmatprep.subr.mxu0 0.0
    %3773 = vmatpush1.msra.mxu0 0.0
    %3774 = vmatprep.subr.mxu0 0.0
    %3775 = vmatpush1.msra.mxu0 0.0
    %3776 = vmatprep.subr.mxu0 0.0
    %3777 = vmatpush1.msra.mxu0 0.0
    %3778 = vmatprep.subr.mxu0 0.0
    %3779 = vmatpush1.msra.mxu0 0.0
    %3780 = vmatprep.subr.mxu0 0.0
    %3781 = vmatpush1.msra.mxu0 0.0
    %3782 = vmatprep.subr.mxu0 0.0
    %3783 = vmatpush1.msra.mxu0 0.0
    %3784 = vmatprep.subr.mxu0 0.0
    %3785 = vmatpush1.msra.mxu0 0.0
    %3786 = vmatprep.subr.mxu0 0.0
    %3787 = vmatpush1.msra.mxu0 0.0
    %3788 = vmatprep.subr.mxu0 0.0
    %3789 = vmatpush1.msra.mxu0 0.0
    %3790 = vmatprep.subr.mxu0 0.0
    %3791 = vmatpush1.msra.mxu0 0.0
    %3792 = vmatprep.subr.mxu0 0.0
    %3793 = vmatpush1.msra.mxu0 0.0
    %3794 = vmatprep.subr.mxu0 0.0
    %3795 = vmatpush1.msra.mxu0 0.0
    %3796 = vmatprep.subr.mxu0 0.0
    %3797 = vmatpush1.msra.mxu0 0.0
    %3798 = vmatprep.subr.mxu0 0.0
    %3799 = vmatpush1.msra.mxu0 0.0
    %3800 = vmatprep.subr.mxu0 0.0
    %3801 = vmatpush1.msra.mxu0 0.0
    %3802 = vmatprep.subr.mxu0 0.0
    %3803 = vmatpush1.msra.mxu0 0.0
    %3804 = vmatprep.subr.mxu0 0.0
    %3805 = vmatpush1.msra.mxu0 0.0
    %3806 = vmatprep.subr.mxu0 0.0
    %3807 = vmatpush1.msra.mxu0 0.0
    %3808 = vmatprep.mubr.f32.mxu0 0.0
    %3809 = vmatmul.mubr.f32.gmra.mrb[0].mxu0 %v3742
    %v3810 = vpop.f32.mrb[0].mxu0
    %v3811 = vadd.f32 %v3738, %v3810
    %v3812 = vpop.f32.mrb[0].mxu0
    %3813 = vdwg.mxu0
    %vm3814 = vcmask 41984
    %v3815 = vsel %vm3814, %v3811, -inf
    %3816 = vmax.xlane.f32.xlu0 %v3815
    %v3817 = vpop.xlane.xlu0 %3816
    %v3818 = vsub.f32 %v3811, %v3817
    %v3819 = vmul.f32 %v3818, 1.442695
    %v3820 = vpow.pop %v3819
    %v3821 = vsel %vm3814, %v3820, 0.0
    %3822 = vadd.xlane.f32.xlu0 %v3821
    %v3823 = vpop.xlane.xlu0 %3822
    %v3824 = vlog2.pop %v3823
    %v3825 = vmul.f32 %v3824, 0.6931472
    %v3826 = vsub.f32 %v3818, %v3825
    %3827 = vst.msk [vmem:[#allocation22] sm:$0x3] %vm3814, %v3826
    // Predicated region
    $region150: #{net_forward.1} parent=1 // pred_check
      _
    $region151: #{net_forward.1} parent=1 // pred_check_branch
      %3829 = sbr.rel (0) target = $region153
    $region152: #{net_forward.1} parent=1 // pred_region
      %s3831 = ssub.s32 32, 32
      %3832 = vsyncadd [#allocation4], %s3831
      %s3834 = sshll.u32 [#allocation22], 4
      %s3835 = int_to_ptr.vmem [resolvable:$true] %s3834
      %3837 = dma.vmem_to_hbm [thread:$0]  %s3835, 32, %s25, [#allocation4]
    $region153: #{net_forward.1} parent=1 // pred_fallthru
      _
    // Predicated region
    $region154: #{net_forward.1} parent=1 // pred_check
      _
    $region155: #{net_forward.1} parent=1 // pred_check_branch
      %3839 = sbr.rel (0) target = $region157
    $region156: #{net_forward.1} parent=1 // pred_region
      %3840 = dma.done [#allocation4], 32
    $region157: #{net_forward.1} parent=1 // pred_fallthru
      _
    %3841 = vsyncpa [#allocation3], 1
    %3842 = vsyncpa [#allocation6], 1
    %3843 = vsyncpa [#allocation9], 1
    %3844 = vsyncpa [#allocation12], 1
    %3845 = vsyncpa [#allocation15], 1
    %3846 = vsyncpa [#allocation18], 1
    %3847 = vsyncpa [#allocation21], 1
    %3848 = vsyncpa [#allocation4], 1

</llo_original>
